<compile_context>
chip_gen: v7x
topology: tpu7x:2x2x1
jax: 0.10.0
libtpu: 0.0.40
codegen_flags: <defaults>
</compile_context>

<pallas_src>
import jax
import jax.numpy as jnp
from jax.experimental import pallas as pl
from jax.experimental.pallas import tpu as pltpu


def _round_up(x, m):
    return ((x + m - 1) // m) * m


# ----------------------------------------------------------------------------
# Weight packing helpers (wrapper-side, XLA)
# ----------------------------------------------------------------------------
def _block_diag(w):
    """(F, D, D) per-field weights -> (F*D, F*D) block-diagonal matrix with
    bd[f*D + e, f*D + d] = w[f, d, e], so that
        (h_flat @ bd)[b, f*D + d] = sum_e w[f, d, e] * h[b, f, e] = (W[f] @ h[b, f])[d]."""
    f, d, _ = w.shape
    eye = jnp.eye(f, dtype=w.dtype)
    return jnp.einsum("fg,fde->fegd", eye, w).reshape(f * d, f * d)


def _gru_block(w, num_fields):
    """PyTorch GRUCell weight (3*D, D) -> (F*D, 3*F*D) replicated block-diagonal
    so that (x_flat @ big)[b, q*F*D + f*D + d] = (x[b,f,:] @ w.T)[q*D + d].
    Gate q's output occupies a 256-lane-aligned column group -> clean slicing."""
    three_d, d = w.shape
    w3 = w.reshape(3, d, d)                                 # (gate, d_out, e_in)
    eye = jnp.eye(num_fields, dtype=w.dtype)
    big = jnp.einsum("fg,qde->feqgd", eye, w3)              # (F, D, 3, F, D)
    return big.reshape(num_fields * d, 3 * num_fields * d)


def _gru_bias(b, num_fields):
    """(3*D,) GRU bias -> (1, 3*F*D) with big[0, q*F*D + f*D + d] = b[q*D + d]."""
    d = b.shape[0] // 3
    return jnp.tile(b.reshape(3, 1, d), (1, num_fields, 1)).reshape(
        1, 3 * num_fields * d).astype(jnp.float32)


# ----------------------------------------------------------------------------
# Fused Pallas kernel: GNN layers + GRU + residual, one batch tile per step
# ----------------------------------------------------------------------------
def _make_fignn_kernel(n_layers, f, d, use_gru, use_residual, cdt):
    fd = f * d

    def kernel(*refs):
        if use_gru:
            (g_ref, fe_ref, w_out_ref, w_in_ref, bias_ref,
             w_ih_ref, w_hh_ref, b_ih_ref, b_hh_ref, out_ref) = refs
        else:
            g_ref, fe_ref, w_out_ref, w_in_ref, bias_ref, out_ref = refs

        tb = fe_ref.shape[0]
        g = g_ref[...]                                   # (TB, F, F)  f32
        fe = fe_ref[...].astype(jnp.float32)             # (TB, F*D)   lane-dense
        if use_gru:
            w_ih = w_ih_ref[...]
            w_hh = w_hh_ref[...]
            b_ih = b_ih_ref[...]
            b_hh = b_hh_ref[...]

        h = fe
        for l in range(n_layers):                        # static unroll (small L)
            # (1) per-field matvec W_out -> one (TB,256)@(256,256) MXU matmul
            h_out = jnp.dot(h.astype(cdt), w_out_ref[l],
                            preferred_element_type=jnp.float32)       # (TB, F*D)
            # (2) graph aggregation: F is tiny -> unrolled broadcast-FMAs (VPU)
            h_out3 = h_out.reshape(tb, f, d)
            aggr = g[:, :, 0:1] * h_out3[:, 0:1, :]
            for j in range(1, f):
                aggr = aggr + g[:, :, j:j + 1] * h_out3[:, j:j + 1, :]
            aggr_flat = aggr.reshape(tb, fd)
            # (3) per-field matvec W_in + bias -> second MXU matmul
            a = jnp.dot(aggr_flat.astype(cdt), w_in_ref[l],
                        preferred_element_type=jnp.float32) + bias_ref[l]
            if use_gru:
                # GRU gates: two (TB,256)@(256,768) MXU matmuls, gate nonlinearities
                # on the EUP; all slices are 256-lane-aligned.
                gi = jnp.dot(a.astype(cdt), w_ih,
                             preferred_element_type=jnp.float32) + b_ih
                gh = jnp.dot(h.astype(cdt), w_hh,
                             preferred_element_type=jnp.float32) + b_hh
                r = jax.nn.sigmoid(gi[:, 0:fd] + gh[:, 0:fd])
                z = jax.nn.sigmoid(gi[:, fd:2 * fd] + gh[:, fd:2 * fd])
                n = jnp.tanh(gi[:, 2 * fd:3 * fd] + r * gh[:, 2 * fd:3 * fd])
                h = (1.0 - z) * n + z * h
            else:
                h = a + h
            if use_residual:
                h = h + fe
        out_ref[...] = h.astype(out_ref.dtype)

    return kernel


# ----------------------------------------------------------------------------
# Attention graph (light; left to XLA)
# ----------------------------------------------------------------------------
# TODO(synk): the attention-graph build (two tiny GEMVs + masked softmax on an
# (B, F, F) tensor with F=8) is left to XLA; the heavy fused GNN stack is the
# Pallas kernel.
def build_graph_with_attention(feature_emb, w_attn):
    B, F, D = feature_emb.shape
    s = feature_emb @ w_attn[:D]          # (B, F)  src contribution
    t = feature_emb @ w_attn[D:]          # (B, F)  dst contribution
    alpha = jax.nn.leaky_relu(s[:, :, None] + t[:, None, :], negative_slope=0.01)
    alpha = jnp.where(jnp.eye(F, dtype=bool)[None, :, :], -jnp.inf, alpha)
    return jax.nn.softmax(alpha, axis=-1)


# ----------------------------------------------------------------------------
# FiGNN_Layer forward via the fused Pallas kernel
# ----------------------------------------------------------------------------
def fignn_layer_forward_pallas(feature_emb, params, *, gnn_layers=3,
                               reuse_graph_layer=False, use_gru=True,
                               use_residual=True, block_b=256,
                               compute_dtype=jnp.float32):
    B, F, D = feature_emb.shape
    FD = F * D
    L = gnn_layers
    cdt = jnp.dtype(compute_dtype)

    # Attention graph (XLA); padded batch rows get zero graphs below.
    g = build_graph_with_attention(feature_emb, params["w_attn"]).astype(jnp.float32)

    # Stacked, MXU-friendly weights (resident in VMEM across the whole grid).
    layer_params = [params["gnn"][0] if reuse_graph_layer else params["gnn"][i]
                    for i in range(L)]
    w_out_bd = jnp.stack([_block_diag(p["w_out"]) for p in layer_params]).astype(cdt)
    w_in_bd = jnp.stack([_block_diag(p["w_in"]) for p in layer_params]).astype(cdt)
    bias_bd = jnp.stack([jnp.tile(p["bias"].reshape(1, D), (1, F))
                         for p in layer_params]).astype(jnp.float32)     # (L, 1, FD)

    args = [g, None, w_out_bd, w_in_bd, bias_bd]   # feature_emb filled after padding
    if use_gru:
        gp = params["gru"]
        w_ih_big = _gru_block(gp["w_ih"], F).astype(cdt)   # (FD, 3*FD)
        w_hh_big = _gru_block(gp["w_hh"], F).astype(cdt)
        b_ih_big = _gru_bias(gp["b_ih"], F)                # (1, 3*FD)
        b_hh_big = _gru_bias(gp["b_hh"], F)

    # Lane-dense activations + batch tiling (TB multiple of 8 sublanes).
    fe_flat = feature_emb.reshape(B, FD).astype(cdt)
    tb = _round_up(min(block_b, _round_up(B, 8)), 8)
    bp = _round_up(B, tb)
    if bp != B:
        fe_flat = jnp.pad(fe_flat, ((0, bp - B), (0, 0)))
        g = jnp.pad(g, ((0, bp - B), (0, 0), (0, 0)))
    n_blocks = bp // tb
    args[0] = g
    args[1] = fe_flat

    in_specs = [
        pl.BlockSpec((tb, F, F), lambda b: (b, 0, 0)),      # g     (batch tile)
        pl.BlockSpec((tb, FD), lambda b: (b, 0)),           # feature_emb (lane-dense tile)
        pl.BlockSpec((L, FD, FD), lambda b: (0, 0, 0)),     # W_out block-diags (resident)
        pl.BlockSpec((L, FD, FD), lambda b: (0, 0, 0)),     # W_in  block-diags (resident)
        pl.BlockSpec((L, 1, FD), lambda b: (0, 0, 0)),      # biases (resident)
    ]
    if use_gru:
        in_specs += [
            pl.BlockSpec((FD, 3 * FD), lambda b: (0, 0)),   # GRU W_ih (resident)
            pl.BlockSpec((FD, 3 * FD), lambda b: (0, 0)),   # GRU W_hh (resident)
            pl.BlockSpec((1, 3 * FD), lambda b: (0, 0)),    # GRU b_ih (resident)
            pl.BlockSpec((1, 3 * FD), lambda b: (0, 0)),    # GRU b_hh (resident)
        ]
        args += [w_ih_big, w_hh_big, b_ih_big, b_hh_big]

    matmul_flops = 2 * (2 * FD * FD) + (2 * (2 * FD * 3 * FD) if use_gru else 0)
    flops = bp * L * (matmul_flops + 2 * F * F * D)
    trans = bp * L * (3 * FD if use_gru else 0)
    weight_bytes = 2 * L * FD * FD * cdt.itemsize + L * FD * 4
    if use_gru:
        weight_bytes += 2 * FD * 3 * FD * cdt.itemsize + 2 * 3 * FD * 4
    cost = pl.CostEstimate(
        flops=int(flops), transcendentals=int(trans),
        bytes_accessed=int(fe_flat.size * fe_flat.dtype.itemsize
                           + g.size * 4 + bp * FD * 4 + weight_bytes))

    kernel = _make_fignn_kernel(L, F, D, use_gru, use_residual, cdt)

    out_flat = pl.pallas_call(
        kernel,
        out_shape=jax.ShapeDtypeStruct((bp, FD), feature_emb.dtype),
        grid_spec=pltpu.PrefetchScalarGridSpec(
            num_scalar_prefetch=0,
            grid=(n_blocks,),
            in_specs=in_specs,
            out_specs=pl.BlockSpec((tb, FD), lambda b: (b, 0)),
        ),
        compiler_params=pltpu.CompilerParams(
            dimension_semantics=("parallel",),    # batch tiles shard across v7x's 2 TCs
            vmem_limit_bytes=32 * 1024 * 1024,
        ),
        cost_estimate=cost,
    )(*args)

    return out_flat[:B].reshape(B, F, D)


# ----------------------------------------------------------------------------
# Pure-JAX reference (mirrors the PyTorch module)
# ----------------------------------------------------------------------------
def graph_layer_ref(g, h, w_out, w_in, bias):
    h_out = jnp.einsum("fde,bfe->bfd", w_out, h)
    aggr = jnp.einsum("bij,bjd->bid", g, h_out)
    return jnp.einsum("fde,bfe->bfd", w_in, aggr) + bias


def gru_cell_ref(x, h, w_ih, w_hh, b_ih, b_hh):
    gi = x @ w_ih.T + b_ih
    gh = h @ w_hh.T + b_hh
    i_r, i_z, i_n = jnp.split(gi, 3, axis=-1)
    h_r, h_z, h_n = jnp.split(gh, 3, axis=-1)
    r = jax.nn.sigmoid(i_r + h_r)
    z = jax.nn.sigmoid(i_z + h_z)
    n = jnp.tanh(i_n + r * h_n)
    return (1.0 - z) * n + z * h


def fignn_layer_forward_ref(feature_emb, params, *, gnn_layers=3,
                            reuse_graph_layer=False, use_gru=True, use_residual=True):
    B, F, D = feature_emb.shape
    g = build_graph_with_attention(feature_emb, params["w_attn"])
    h = feature_emb
    for i in range(gnn_layers):
        p = params["gnn"][0] if reuse_graph_layer else params["gnn"][i]
        a = graph_layer_ref(g, h, p["w_out"], p["w_in"], p["bias"])
        if use_gru:
            gp = params["gru"]
            h = gru_cell_ref(a.reshape(B * F, D), h.reshape(B * F, D),
                             gp["w_ih"], gp["w_hh"], gp["b_ih"],
                             gp["b_hh"]).reshape(B, F, D)
        else:
            h = a + h
        if use_residual:
            h = h + feature_emb
    return h


# ----------------------------------------------------------------------------
# Demo / correctness checks
# ----------------------------------------------------------------------------
if __name__ == "__main__":
    B, F, D = 2, 8, 32          # batch, num_fields, embedding_dim
    key = jax.random.PRNGKey(0)
    ks = jax.random.split(key, 13)

    def _q(x):
        # Quantize to bf16-representable f32 values so MXU operand rounding of
        # the leaf inputs is lossless and the checks stay precision-robust.
        return x.astype(jnp.bfloat16).astype(jnp.float32)

    xavier = (2.0 / (D + D)) ** 0.5
    gnn_params = []
    for i in range(3):
        gnn_params.append(dict(
            w_out=_q(xavier * jax.random.normal(ks[i], (F, D, D), jnp.float32)),
            w_in=_q(xavier * jax.random.normal(ks[3 + i], (F, D, D), jnp.float32)),
            bias=jnp.zeros((D,), jnp.float32),
        ))
    gs = 1.0 / (D ** 0.5)
    params = dict(
        gnn=gnn_params,
        gru=dict(
            w_ih=_q(gs * jax.random.normal(ks[6], (3 * D, D), jnp.float32)),
            w_hh=_q(gs * jax.random.normal(ks[7], (3 * D, D), jnp.float32)),
            b_ih=gs * jax.random.normal(ks[8], (3 * D,), jnp.float32),
            b_hh=gs * jax.random.normal(ks[9], (3 * D,), jnp.float32),
        ),
        w_attn=(1.0 / (2 * D) ** 0.5) * jax.random.normal(ks[10], (2 * D,), jnp.float32),
    )
    feature_emb = _q(jax.random.normal(ks[11], (B, F, D), jnp.float32))

    # --- 1) fused FiGNN forward (f32 MXU path) vs pure-JAX reference ---------
    out = jax.block_until_ready(fignn_layer_forward_pallas(feature_emb, params))
    out_ref = fignn_layer_forward_ref(feature_emb, params)
    assert out.shape == (B, F, D)
    assert jnp.allclose(out, out_ref, atol=5e-3, rtol=5e-3), "FiGNN fused kernel mismatch"

    # --- 1b) multi-batch-tile grid (exercises batch index maps / padding) ----
    fe24 = _q(jax.random.normal(ks[12], (24, F, D), jnp.float32))
    out24 = jax.block_until_ready(fignn_layer_forward_pallas(fe24, params, block_b=8))
    out24_ref = fignn_layer_forward_ref(fe24, params)
    assert jnp.allclose(out24, out24_ref, atol=5e-3, rtol=5e-3), "multi-tile mismatch"

    # --- 2) no-GRU / no-residual specialization -------------------------------
    out_ng = jax.block_until_ready(
        fignn_layer_forward_pallas(feature_emb, params, use_gru=False, use_residual=False))
    out_ng_ref = fignn_layer_forward_ref(feature_emb, params,
                                         use_gru=False, use_residual=False)
    assert jnp.allclose(out_ng, out_ng_ref, atol=5e-3, rtol=5e-3), "no-GRU mismatch"

    # --- 3) bf16 MXU-operand path (v6e/v7x recommendation), f32 accumulation --
    out_bf16 = jax.block_until_ready(
        fignn_layer_forward_pallas(feature_emb, params, compute_dtype=jnp.bfloat16))
    assert jnp.allclose(out_bf16, out_ref, atol=2e-1, rtol=2e-1), "bf16 path mismatch"

    print("KERNEL_OK")
</pallas_src>

<mosaic_0001>
module attributes {stable_mosaic.version = 11 : i64} {
  func.func @kernel(%arg0: i32, %arg1: memref<8x8x8xf32, #tpu.memory_space<vmem>>, %arg2: memref<8x256xf32, #tpu.memory_space<vmem>>, %arg3: memref<3x256x256xf32, #tpu.memory_space<vmem>>, %arg4: memref<3x256x256xf32, #tpu.memory_space<vmem>>, %arg5: memref<3x1x256xf32, #tpu.memory_space<vmem>>, %arg6: memref<256x768xf32, #tpu.memory_space<vmem>>, %arg7: memref<256x768xf32, #tpu.memory_space<vmem>>, %arg8: memref<1x768xf32, #tpu.memory_space<vmem>>, %arg9: memref<1x768xf32, #tpu.memory_space<vmem>>, %arg10: memref<8x256xf32, #tpu.memory_space<vmem>>) attributes {dimension_semantics = [#tpu.dimension_semantics<parallel>], iteration_bounds = array<i64: 1>, scalar_prefetch = 0 : i64, scratch_operands = 0 : i64, tpu.core_type = #tpu.core_type<tc>, window_params = [{transform_indices = @transform_0, window_bounds = array<i64: 8, 8, 8>}, {transform_indices = @transform_1, window_bounds = array<i64: 8, 256>}, {pipeline_mode = #tpu.pipeline_mode<synchronous>, transform_indices = @transform_2, window_bounds = array<i64: 3, 256, 256>}, {pipeline_mode = #tpu.pipeline_mode<synchronous>, transform_indices = @transform_3, window_bounds = array<i64: 3, 256, 256>}, {pipeline_mode = #tpu.pipeline_mode<synchronous>, transform_indices = @transform_4, window_bounds = array<i64: 3, 1, 256>}, {pipeline_mode = #tpu.pipeline_mode<synchronous>, transform_indices = @transform_5, window_bounds = array<i64: 256, 768>}, {pipeline_mode = #tpu.pipeline_mode<synchronous>, transform_indices = @transform_6, window_bounds = array<i64: 256, 768>}, {pipeline_mode = #tpu.pipeline_mode<synchronous>, transform_indices = @transform_7, window_bounds = array<i64: 1, 768>}, {pipeline_mode = #tpu.pipeline_mode<synchronous>, transform_indices = @transform_8, window_bounds = array<i64: 1, 768>}, {transform_indices = @transform_9, window_bounds = array<i64: 8, 256>}]} {
    %c0 = arith.constant 0 : index
    %c0_0 = arith.constant 0 : index
    %c0_1 = arith.constant 0 : index
    %0 = vector.load %arg1[%c0, %c0_0, %c0_1] : memref<8x8x8xf32, #tpu.memory_space<vmem>>, vector<8x8x8xf32>
    %c0_2 = arith.constant 0 : index
    %c0_3 = arith.constant 0 : index
    %1 = vector.load %arg2[%c0_2, %c0_3] : memref<8x256xf32, #tpu.memory_space<vmem>>, vector<8x256xf32>
    %c0_4 = arith.constant 0 : index
    %c0_5 = arith.constant 0 : index
    %2 = vector.load %arg6[%c0_4, %c0_5] : memref<256x768xf32, #tpu.memory_space<vmem>>, vector<256x768xf32>
    %c0_6 = arith.constant 0 : index
    %c0_7 = arith.constant 0 : index
    %3 = vector.load %arg7[%c0_6, %c0_7] : memref<256x768xf32, #tpu.memory_space<vmem>>, vector<256x768xf32>
    %c0_8 = arith.constant 0 : index
    %c0_9 = arith.constant 0 : index
    %4 = vector.load %arg8[%c0_8, %c0_9] : memref<1x768xf32, #tpu.memory_space<vmem>>, vector<1x768xf32>
    %c0_10 = arith.constant 0 : index
    %c0_11 = arith.constant 0 : index
    %5 = vector.load %arg9[%c0_10, %c0_11] : memref<1x768xf32, #tpu.memory_space<vmem>>, vector<1x768xf32>
    %c0_12 = arith.constant 0 : index
    %c0_13 = arith.constant 0 : index
    %c0_14 = arith.constant 0 : index
    %6 = vector.load %arg3[%c0_12, %c0_13, %c0_14] : memref<3x256x256xf32, #tpu.memory_space<vmem>>, vector<1x256x256xf32>
    %7 = vector.shape_cast %6 : vector<1x256x256xf32> to vector<256x256xf32>
    %cst = arith.constant dense<0.000000e+00> : vector<8x256xf32>
    %8 = tpu.matmul %1, %7, %cst {dimension_numbers = #tpu.dot_dimension_numbers<[1], [0], [0], [1], [0, 0, 1, 1], [], []>} : vector<8x256xf32>, vector<256x256xf32>, vector<8x256xf32> -> vector<8x256xf32>
    %9 = vector.shape_cast %8 : vector<8x256xf32> to vector<8x8x32xf32>
    %10 = vector.extract_strided_slice %0 {offsets = [0, 0, 0], sizes = [8, 8, 1], strides = [1, 1, 1]} : vector<8x8x8xf32> to vector<8x8x1xf32>
    %11 = vector.extract_strided_slice %9 {offsets = [0, 0, 0], sizes = [8, 1, 32], strides = [1, 1, 1]} : vector<8x8x32xf32> to vector<8x1x32xf32>
    %12 = vector.broadcast %10 : vector<8x8x1xf32> to vector<8x8x32xf32>
    %13 = vector.broadcast %11 : vector<8x1x32xf32> to vector<8x8x32xf32>
    %14 = arith.mulf %12, %13 : vector<8x8x32xf32>
    %15 = vector.extract_strided_slice %0 {offsets = [0, 0, 1], sizes = [8, 8, 1], strides = [1, 1, 1]} : vector<8x8x8xf32> to vector<8x8x1xf32>
    %16 = vector.extract_strided_slice %9 {offsets = [0, 1, 0], sizes = [8, 1, 32], strides = [1, 1, 1]} : vector<8x8x32xf32> to vector<8x1x32xf32>
    %17 = vector.broadcast %15 : vector<8x8x1xf32> to vector<8x8x32xf32>
    %18 = vector.broadcast %16 : vector<8x1x32xf32> to vector<8x8x32xf32>
    %19 = arith.mulf %17, %18 : vector<8x8x32xf32>
    %20 = arith.addf %14, %19 : vector<8x8x32xf32>
    %21 = vector.extract_strided_slice %0 {offsets = [0, 0, 2], sizes = [8, 8, 1], strides = [1, 1, 1]} : vector<8x8x8xf32> to vector<8x8x1xf32>
    %22 = vector.extract_strided_slice %9 {offsets = [0, 2, 0], sizes = [8, 1, 32], strides = [1, 1, 1]} : vector<8x8x32xf32> to vector<8x1x32xf32>
    %23 = vector.broadcast %21 : vector<8x8x1xf32> to vector<8x8x32xf32>
    %24 = vector.broadcast %22 : vector<8x1x32xf32> to vector<8x8x32xf32>
    %25 = arith.mulf %23, %24 : vector<8x8x32xf32>
    %26 = arith.addf %20, %25 : vector<8x8x32xf32>
    %27 = vector.extract_strided_slice %0 {offsets = [0, 0, 3], sizes = [8, 8, 1], strides = [1, 1, 1]} : vector<8x8x8xf32> to vector<8x8x1xf32>
    %28 = vector.extract_strided_slice %9 {offsets = [0, 3, 0], sizes = [8, 1, 32], strides = [1, 1, 1]} : vector<8x8x32xf32> to vector<8x1x32xf32>
    %29 = vector.broadcast %27 : vector<8x8x1xf32> to vector<8x8x32xf32>
    %30 = vector.broadcast %28 : vector<8x1x32xf32> to vector<8x8x32xf32>
    %31 = arith.mulf %29, %30 : vector<8x8x32xf32>
    %32 = arith.addf %26, %31 : vector<8x8x32xf32>
    %33 = vector.extract_strided_slice %0 {offsets = [0, 0, 4], sizes = [8, 8, 1], strides = [1, 1, 1]} : vector<8x8x8xf32> to vector<8x8x1xf32>
    %34 = vector.extract_strided_slice %9 {offsets = [0, 4, 0], sizes = [8, 1, 32], strides = [1, 1, 1]} : vector<8x8x32xf32> to vector<8x1x32xf32>
    %35 = vector.broadcast %33 : vector<8x8x1xf32> to vector<8x8x32xf32>
    %36 = vector.broadcast %34 : vector<8x1x32xf32> to vector<8x8x32xf32>
    %37 = arith.mulf %35, %36 : vector<8x8x32xf32>
    %38 = arith.addf %32, %37 : vector<8x8x32xf32>
    %39 = vector.extract_strided_slice %0 {offsets = [0, 0, 5], sizes = [8, 8, 1], strides = [1, 1, 1]} : vector<8x8x8xf32> to vector<8x8x1xf32>
    %40 = vector.extract_strided_slice %9 {offsets = [0, 5, 0], sizes = [8, 1, 32], strides = [1, 1, 1]} : vector<8x8x32xf32> to vector<8x1x32xf32>
    %41 = vector.broadcast %39 : vector<8x8x1xf32> to vector<8x8x32xf32>
    %42 = vector.broadcast %40 : vector<8x1x32xf32> to vector<8x8x32xf32>
    %43 = arith.mulf %41, %42 : vector<8x8x32xf32>
    %44 = arith.addf %38, %43 : vector<8x8x32xf32>
    %45 = vector.extract_strided_slice %0 {offsets = [0, 0, 6], sizes = [8, 8, 1], strides = [1, 1, 1]} : vector<8x8x8xf32> to vector<8x8x1xf32>
    %46 = vector.extract_strided_slice %9 {offsets = [0, 6, 0], sizes = [8, 1, 32], strides = [1, 1, 1]} : vector<8x8x32xf32> to vector<8x1x32xf32>
    %47 = vector.broadcast %45 : vector<8x8x1xf32> to vector<8x8x32xf32>
    %48 = vector.broadcast %46 : vector<8x1x32xf32> to vector<8x8x32xf32>
    %49 = arith.mulf %47, %48 : vector<8x8x32xf32>
    %50 = arith.addf %44, %49 : vector<8x8x32xf32>
    %51 = vector.extract_strided_slice %0 {offsets = [0, 0, 7], sizes = [8, 8, 1], strides = [1, 1, 1]} : vector<8x8x8xf32> to vector<8x8x1xf32>
    %52 = vector.extract_strided_slice %9 {offsets = [0, 7, 0], sizes = [8, 1, 32], strides = [1, 1, 1]} : vector<8x8x32xf32> to vector<8x1x32xf32>
    %53 = vector.broadcast %51 : vector<8x8x1xf32> to vector<8x8x32xf32>
    %54 = vector.broadcast %52 : vector<8x1x32xf32> to vector<8x8x32xf32>
    %55 = arith.mulf %53, %54 : vector<8x8x32xf32>
    %56 = arith.addf %50, %55 : vector<8x8x32xf32>
    %57 = vector.shape_cast %56 : vector<8x8x32xf32> to vector<8x256xf32>
    %c0_15 = arith.constant 0 : index
    %c0_16 = arith.constant 0 : index
    %c0_17 = arith.constant 0 : index
    %58 = vector.load %arg4[%c0_15, %c0_16, %c0_17] : memref<3x256x256xf32, #tpu.memory_space<vmem>>, vector<1x256x256xf32>
    %59 = vector.shape_cast %58 : vector<1x256x256xf32> to vector<256x256xf32>
    %cst_18 = arith.constant dense<0.000000e+00> : vector<8x256xf32>
    %60 = tpu.matmul %57, %59, %cst_18 {dimension_numbers = #tpu.dot_dimension_numbers<[1], [0], [0], [1], [0, 0, 1, 1], [], []>} : vector<8x256xf32>, vector<256x256xf32>, vector<8x256xf32> -> vector<8x256xf32>
    %c0_19 = arith.constant 0 : index
    %c0_20 = arith.constant 0 : index
    %c0_21 = arith.constant 0 : index
    %61 = vector.load %arg5[%c0_19, %c0_20, %c0_21] : memref<3x1x256xf32, #tpu.memory_space<vmem>>, vector<1x1x256xf32>
    %62 = vector.shape_cast %61 : vector<1x1x256xf32> to vector<1x256xf32>
    %63 = vector.broadcast %62 : vector<1x256xf32> to vector<8x256xf32>
    %64 = arith.addf %60, %63 : vector<8x256xf32>
    %cst_22 = arith.constant dense<0.000000e+00> : vector<8x768xf32>
    %65 = tpu.matmul %64, %2, %cst_22 {dimension_numbers = #tpu.dot_dimension_numbers<[1], [0], [0], [1], [0, 0, 1, 1], [], []>} : vector<8x256xf32>, vector<256x768xf32>, vector<8x768xf32> -> vector<8x768xf32>
    %66 = vector.broadcast %4 : vector<1x768xf32> to vector<8x768xf32>
    %67 = arith.addf %65, %66 : vector<8x768xf32>
    %cst_23 = arith.constant dense<0.000000e+00> : vector<8x768xf32>
    %68 = tpu.matmul %1, %3, %cst_23 {dimension_numbers = #tpu.dot_dimension_numbers<[1], [0], [0], [1], [0, 0, 1, 1], [], []>} : vector<8x256xf32>, vector<256x768xf32>, vector<8x768xf32> -> vector<8x768xf32>
    %69 = vector.broadcast %5 : vector<1x768xf32> to vector<8x768xf32>
    %70 = arith.addf %68, %69 : vector<8x768xf32>
    %71 = vector.extract_strided_slice %67 {offsets = [0, 0], sizes = [8, 256], strides = [1, 1]} : vector<8x768xf32> to vector<8x256xf32>
    %72 = vector.extract_strided_slice %70 {offsets = [0, 0], sizes = [8, 256], strides = [1, 1]} : vector<8x768xf32> to vector<8x256xf32>
    %73 = arith.addf %71, %72 : vector<8x256xf32>
    %74 = arith.negf %73 : vector<8x256xf32>
    %75 = math.exp %74 : vector<8x256xf32>
    %cst_24 = arith.constant 1.000000e+00 : f32
    %76 = vector.broadcast %cst_24 : f32 to vector<8x256xf32>
    %77 = arith.addf %76, %75 : vector<8x256xf32>
    %78 = arith.divf %76, %77 : vector<8x256xf32>
    %79 = vector.extract_strided_slice %67 {offsets = [0, 256], sizes = [8, 256], strides = [1, 1]} : vector<8x768xf32> to vector<8x256xf32>
    %80 = vector.extract_strided_slice %70 {offsets = [0, 256], sizes = [8, 256], strides = [1, 1]} : vector<8x768xf32> to vector<8x256xf32>
    %81 = arith.addf %79, %80 : vector<8x256xf32>
    %82 = arith.negf %81 : vector<8x256xf32>
    %83 = math.exp %82 : vector<8x256xf32>
    %cst_25 = arith.constant 1.000000e+00 : f32
    %84 = vector.broadcast %cst_25 : f32 to vector<8x256xf32>
    %85 = arith.addf %84, %83 : vector<8x256xf32>
    %86 = arith.divf %84, %85 : vector<8x256xf32>
    %87 = vector.extract_strided_slice %67 {offsets = [0, 512], sizes = [8, 256], strides = [1, 1]} : vector<8x768xf32> to vector<8x256xf32>
    %88 = vector.extract_strided_slice %70 {offsets = [0, 512], sizes = [8, 256], strides = [1, 1]} : vector<8x768xf32> to vector<8x256xf32>
    %89 = arith.mulf %78, %88 : vector<8x256xf32>
    %90 = arith.addf %87, %89 : vector<8x256xf32>
    %91 = math.tanh %90 : vector<8x256xf32>
    %cst_26 = arith.constant 1.000000e+00 : f32
    %92 = vector.broadcast %cst_26 : f32 to vector<8x256xf32>
    %93 = arith.subf %92, %86 : vector<8x256xf32>
    %94 = arith.mulf %93, %91 : vector<8x256xf32>
    %95 = arith.mulf %86, %1 : vector<8x256xf32>
    %96 = arith.addf %94, %95 : vector<8x256xf32>
    %97 = arith.addf %96, %1 : vector<8x256xf32>
    %c1 = arith.constant 1 : index
    %c0_27 = arith.constant 0 : index
    %c0_28 = arith.constant 0 : index
    %98 = vector.load %arg3[%c1, %c0_27, %c0_28] : memref<3x256x256xf32, #tpu.memory_space<vmem>>, vector<1x256x256xf32>
    %99 = vector.shape_cast %98 : vector<1x256x256xf32> to vector<256x256xf32>
    %cst_29 = arith.constant dense<0.000000e+00> : vector<8x256xf32>
    %100 = tpu.matmul %97, %99, %cst_29 {dimension_numbers = #tpu.dot_dimension_numbers<[1], [0], [0], [1], [0, 0, 1, 1], [], []>} : vector<8x256xf32>, vector<256x256xf32>, vector<8x256xf32> -> vector<8x256xf32>
    %101 = vector.shape_cast %100 : vector<8x256xf32> to vector<8x8x32xf32>
    %102 = vector.extract_strided_slice %0 {offsets = [0, 0, 0], sizes = [8, 8, 1], strides = [1, 1, 1]} : vector<8x8x8xf32> to vector<8x8x1xf32>
    %103 = vector.extract_strided_slice %101 {offsets = [0, 0, 0], sizes = [8, 1, 32], strides = [1, 1, 1]} : vector<8x8x32xf32> to vector<8x1x32xf32>
    %104 = vector.broadcast %102 : vector<8x8x1xf32> to vector<8x8x32xf32>
    %105 = vector.broadcast %103 : vector<8x1x32xf32> to vector<8x8x32xf32>
    %106 = arith.mulf %104, %105 : vector<8x8x32xf32>
    %107 = vector.extract_strided_slice %0 {offsets = [0, 0, 1], sizes = [8, 8, 1], strides = [1, 1, 1]} : vector<8x8x8xf32> to vector<8x8x1xf32>
    %108 = vector.extract_strided_slice %101 {offsets = [0, 1, 0], sizes = [8, 1, 32], strides = [1, 1, 1]} : vector<8x8x32xf32> to vector<8x1x32xf32>
    %109 = vector.broadcast %107 : vector<8x8x1xf32> to vector<8x8x32xf32>
    %110 = vector.broadcast %108 : vector<8x1x32xf32> to vector<8x8x32xf32>
    %111 = arith.mulf %109, %110 : vector<8x8x32xf32>
    %112 = arith.addf %106, %111 : vector<8x8x32xf32>
    %113 = vector.extract_strided_slice %0 {offsets = [0, 0, 2], sizes = [8, 8, 1], strides = [1, 1, 1]} : vector<8x8x8xf32> to vector<8x8x1xf32>
    %114 = vector.extract_strided_slice %101 {offsets = [0, 2, 0], sizes = [8, 1, 32], strides = [1, 1, 1]} : vector<8x8x32xf32> to vector<8x1x32xf32>
    %115 = vector.broadcast %113 : vector<8x8x1xf32> to vector<8x8x32xf32>
    %116 = vector.broadcast %114 : vector<8x1x32xf32> to vector<8x8x32xf32>
    %117 = arith.mulf %115, %116 : vector<8x8x32xf32>
    %118 = arith.addf %112, %117 : vector<8x8x32xf32>
    %119 = vector.extract_strided_slice %0 {offsets = [0, 0, 3], sizes = [8, 8, 1], strides = [1, 1, 1]} : vector<8x8x8xf32> to vector<8x8x1xf32>
    %120 = vector.extract_strided_slice %101 {offsets = [0, 3, 0], sizes = [8, 1, 32], strides = [1, 1, 1]} : vector<8x8x32xf32> to vector<8x1x32xf32>
    %121 = vector.broadcast %119 : vector<8x8x1xf32> to vector<8x8x32xf32>
    %122 = vector.broadcast %120 : vector<8x1x32xf32> to vector<8x8x32xf32>
    %123 = arith.mulf %121, %122 : vector<8x8x32xf32>
    %124 = arith.addf %118, %123 : vector<8x8x32xf32>
    %125 = vector.extract_strided_slice %0 {offsets = [0, 0, 4], sizes = [8, 8, 1], strides = [1, 1, 1]} : vector<8x8x8xf32> to vector<8x8x1xf32>
    %126 = vector.extract_strided_slice %101 {offsets = [0, 4, 0], sizes = [8, 1, 32], strides = [1, 1, 1]} : vector<8x8x32xf32> to vector<8x1x32xf32>
    %127 = vector.broadcast %125 : vector<8x8x1xf32> to vector<8x8x32xf32>
    %128 = vector.broadcast %126 : vector<8x1x32xf32> to vector<8x8x32xf32>
    %129 = arith.mulf %127, %128 : vector<8x8x32xf32>
    %130 = arith.addf %124, %129 : vector<8x8x32xf32>
    %131 = vector.extract_strided_slice %0 {offsets = [0, 0, 5], sizes = [8, 8, 1], strides = [1, 1, 1]} : vector<8x8x8xf32> to vector<8x8x1xf32>
    %132 = vector.extract_strided_slice %101 {offsets = [0, 5, 0], sizes = [8, 1, 32], strides = [1, 1, 1]} : vector<8x8x32xf32> to vector<8x1x32xf32>
    %133 = vector.broadcast %131 : vector<8x8x1xf32> to vector<8x8x32xf32>
    %134 = vector.broadcast %132 : vector<8x1x32xf32> to vector<8x8x32xf32>
    %135 = arith.mulf %133, %134 : vector<8x8x32xf32>
    %136 = arith.addf %130, %135 : vector<8x8x32xf32>
    %137 = vector.extract_strided_slice %0 {offsets = [0, 0, 6], sizes = [8, 8, 1], strides = [1, 1, 1]} : vector<8x8x8xf32> to vector<8x8x1xf32>
    %138 = vector.extract_strided_slice %101 {offsets = [0, 6, 0], sizes = [8, 1, 32], strides = [1, 1, 1]} : vector<8x8x32xf32> to vector<8x1x32xf32>
    %139 = vector.broadcast %137 : vector<8x8x1xf32> to vector<8x8x32xf32>
    %140 = vector.broadcast %138 : vector<8x1x32xf32> to vector<8x8x32xf32>
    %141 = arith.mulf %139, %140 : vector<8x8x32xf32>
    %142 = arith.addf %136, %141 : vector<8x8x32xf32>
    %143 = vector.extract_strided_slice %0 {offsets = [0, 0, 7], sizes = [8, 8, 1], strides = [1, 1, 1]} : vector<8x8x8xf32> to vector<8x8x1xf32>
    %144 = vector.extract_strided_slice %101 {offsets = [0, 7, 0], sizes = [8, 1, 32], strides = [1, 1, 1]} : vector<8x8x32xf32> to vector<8x1x32xf32>
    %145 = vector.broadcast %143 : vector<8x8x1xf32> to vector<8x8x32xf32>
    %146 = vector.broadcast %144 : vector<8x1x32xf32> to vector<8x8x32xf32>
    %147 = arith.mulf %145, %146 : vector<8x8x32xf32>
    %148 = arith.addf %142, %147 : vector<8x8x32xf32>
    %149 = vector.shape_cast %148 : vector<8x8x32xf32> to vector<8x256xf32>
    %c1_30 = arith.constant 1 : index
    %c0_31 = arith.constant 0 : index
    %c0_32 = arith.constant 0 : index
    %150 = vector.load %arg4[%c1_30, %c0_31, %c0_32] : memref<3x256x256xf32, #tpu.memory_space<vmem>>, vector<1x256x256xf32>
    %151 = vector.shape_cast %150 : vector<1x256x256xf32> to vector<256x256xf32>
    %cst_33 = arith.constant dense<0.000000e+00> : vector<8x256xf32>
    %152 = tpu.matmul %149, %151, %cst_33 {dimension_numbers = #tpu.dot_dimension_numbers<[1], [0], [0], [1], [0, 0, 1, 1], [], []>} : vector<8x256xf32>, vector<256x256xf32>, vector<8x256xf32> -> vector<8x256xf32>
    %c1_34 = arith.constant 1 : index
    %c0_35 = arith.constant 0 : index
    %c0_36 = arith.constant 0 : index
    %153 = vector.load %arg5[%c1_34, %c0_35, %c0_36] : memref<3x1x256xf32, #tpu.memory_space<vmem>>, vector<1x1x256xf32>
    %154 = vector.shape_cast %153 : vector<1x1x256xf32> to vector<1x256xf32>
    %155 = vector.broadcast %154 : vector<1x256xf32> to vector<8x256xf32>
    %156 = arith.addf %152, %155 : vector<8x256xf32>
    %cst_37 = arith.constant dense<0.000000e+00> : vector<8x768xf32>
    %157 = tpu.matmul %156, %2, %cst_37 {dimension_numbers = #tpu.dot_dimension_numbers<[1], [0], [0], [1], [0, 0, 1, 1], [], []>} : vector<8x256xf32>, vector<256x768xf32>, vector<8x768xf32> -> vector<8x768xf32>
    %158 = vector.broadcast %4 : vector<1x768xf32> to vector<8x768xf32>
    %159 = arith.addf %157, %158 : vector<8x768xf32>
    %cst_38 = arith.constant dense<0.000000e+00> : vector<8x768xf32>
    %160 = tpu.matmul %97, %3, %cst_38 {dimension_numbers = #tpu.dot_dimension_numbers<[1], [0], [0], [1], [0, 0, 1, 1], [], []>} : vector<8x256xf32>, vector<256x768xf32>, vector<8x768xf32> -> vector<8x768xf32>
    %161 = vector.broadcast %5 : vector<1x768xf32> to vector<8x768xf32>
    %162 = arith.addf %160, %161 : vector<8x768xf32>
    %163 = vector.extract_strided_slice %159 {offsets = [0, 0], sizes = [8, 256], strides = [1, 1]} : vector<8x768xf32> to vector<8x256xf32>
    %164 = vector.extract_strided_slice %162 {offsets = [0, 0], sizes = [8, 256], strides = [1, 1]} : vector<8x768xf32> to vector<8x256xf32>
    %165 = arith.addf %163, %164 : vector<8x256xf32>
    %166 = arith.negf %165 : vector<8x256xf32>
    %167 = math.exp %166 : vector<8x256xf32>
    %cst_39 = arith.constant 1.000000e+00 : f32
    %168 = vector.broadcast %cst_39 : f32 to vector<8x256xf32>
    %169 = arith.addf %168, %167 : vector<8x256xf32>
    %170 = arith.divf %168, %169 : vector<8x256xf32>
    %171 = vector.extract_strided_slice %159 {offsets = [0, 256], sizes = [8, 256], strides = [1, 1]} : vector<8x768xf32> to vector<8x256xf32>
    %172 = vector.extract_strided_slice %162 {offsets = [0, 256], sizes = [8, 256], strides = [1, 1]} : vector<8x768xf32> to vector<8x256xf32>
    %173 = arith.addf %171, %172 : vector<8x256xf32>
    %174 = arith.negf %173 : vector<8x256xf32>
    %175 = math.exp %174 : vector<8x256xf32>
    %cst_40 = arith.constant 1.000000e+00 : f32
    %176 = vector.broadcast %cst_40 : f32 to vector<8x256xf32>
    %177 = arith.addf %176, %175 : vector<8x256xf32>
    %178 = arith.divf %176, %177 : vector<8x256xf32>
    %179 = vector.extract_strided_slice %159 {offsets = [0, 512], sizes = [8, 256], strides = [1, 1]} : vector<8x768xf32> to vector<8x256xf32>
    %180 = vector.extract_strided_slice %162 {offsets = [0, 512], sizes = [8, 256], strides = [1, 1]} : vector<8x768xf32> to vector<8x256xf32>
    %181 = arith.mulf %170, %180 : vector<8x256xf32>
    %182 = arith.addf %179, %181 : vector<8x256xf32>
    %183 = math.tanh %182 : vector<8x256xf32>
    %cst_41 = arith.constant 1.000000e+00 : f32
    %184 = vector.broadcast %cst_41 : f32 to vector<8x256xf32>
    %185 = arith.subf %184, %178 : vector<8x256xf32>
    %186 = arith.mulf %185, %183 : vector<8x256xf32>
    %187 = arith.mulf %178, %97 : vector<8x256xf32>
    %188 = arith.addf %186, %187 : vector<8x256xf32>
    %189 = arith.addf %188, %1 : vector<8x256xf32>
    %c2 = arith.constant 2 : index
    %c0_42 = arith.constant 0 : index
    %c0_43 = arith.constant 0 : index
    %190 = vector.load %arg3[%c2, %c0_42, %c0_43] : memref<3x256x256xf32, #tpu.memory_space<vmem>>, vector<1x256x256xf32>
    %191 = vector.shape_cast %190 : vector<1x256x256xf32> to vector<256x256xf32>
    %cst_44 = arith.constant dense<0.000000e+00> : vector<8x256xf32>
    %192 = tpu.matmul %189, %191, %cst_44 {dimension_numbers = #tpu.dot_dimension_numbers<[1], [0], [0], [1], [0, 0, 1, 1], [], []>} : vector<8x256xf32>, vector<256x256xf32>, vector<8x256xf32> -> vector<8x256xf32>
    %193 = vector.shape_cast %192 : vector<8x256xf32> to vector<8x8x32xf32>
    %194 = vector.extract_strided_slice %0 {offsets = [0, 0, 0], sizes = [8, 8, 1], strides = [1, 1, 1]} : vector<8x8x8xf32> to vector<8x8x1xf32>
    %195 = vector.extract_strided_slice %193 {offsets = [0, 0, 0], sizes = [8, 1, 32], strides = [1, 1, 1]} : vector<8x8x32xf32> to vector<8x1x32xf32>
    %196 = vector.broadcast %194 : vector<8x8x1xf32> to vector<8x8x32xf32>
    %197 = vector.broadcast %195 : vector<8x1x32xf32> to vector<8x8x32xf32>
    %198 = arith.mulf %196, %197 : vector<8x8x32xf32>
    %199 = vector.extract_strided_slice %0 {offsets = [0, 0, 1], sizes = [8, 8, 1], strides = [1, 1, 1]} : vector<8x8x8xf32> to vector<8x8x1xf32>
    %200 = vector.extract_strided_slice %193 {offsets = [0, 1, 0], sizes = [8, 1, 32], strides = [1, 1, 1]} : vector<8x8x32xf32> to vector<8x1x32xf32>
    %201 = vector.broadcast %199 : vector<8x8x1xf32> to vector<8x8x32xf32>
    %202 = vector.broadcast %200 : vector<8x1x32xf32> to vector<8x8x32xf32>
    %203 = arith.mulf %201, %202 : vector<8x8x32xf32>
    %204 = arith.addf %198, %203 : vector<8x8x32xf32>
    %205 = vector.extract_strided_slice %0 {offsets = [0, 0, 2], sizes = [8, 8, 1], strides = [1, 1, 1]} : vector<8x8x8xf32> to vector<8x8x1xf32>
    %206 = vector.extract_strided_slice %193 {offsets = [0, 2, 0], sizes = [8, 1, 32], strides = [1, 1, 1]} : vector<8x8x32xf32> to vector<8x1x32xf32>
    %207 = vector.broadcast %205 : vector<8x8x1xf32> to vector<8x8x32xf32>
    %208 = vector.broadcast %206 : vector<8x1x32xf32> to vector<8x8x32xf32>
    %209 = arith.mulf %207, %208 : vector<8x8x32xf32>
    %210 = arith.addf %204, %209 : vector<8x8x32xf32>
    %211 = vector.extract_strided_slice %0 {offsets = [0, 0, 3], sizes = [8, 8, 1], strides = [1, 1, 1]} : vector<8x8x8xf32> to vector<8x8x1xf32>
    %212 = vector.extract_strided_slice %193 {offsets = [0, 3, 0], sizes = [8, 1, 32], strides = [1, 1, 1]} : vector<8x8x32xf32> to vector<8x1x32xf32>
    %213 = vector.broadcast %211 : vector<8x8x1xf32> to vector<8x8x32xf32>
    %214 = vector.broadcast %212 : vector<8x1x32xf32> to vector<8x8x32xf32>
    %215 = arith.mulf %213, %214 : vector<8x8x32xf32>
    %216 = arith.addf %210, %215 : vector<8x8x32xf32>
    %217 = vector.extract_strided_slice %0 {offsets = [0, 0, 4], sizes = [8, 8, 1], strides = [1, 1, 1]} : vector<8x8x8xf32> to vector<8x8x1xf32>
    %218 = vector.extract_strided_slice %193 {offsets = [0, 4, 0], sizes = [8, 1, 32], strides = [1, 1, 1]} : vector<8x8x32xf32> to vector<8x1x32xf32>
    %219 = vector.broadcast %217 : vector<8x8x1xf32> to vector<8x8x32xf32>
    %220 = vector.broadcast %218 : vector<8x1x32xf32> to vector<8x8x32xf32>
    %221 = arith.mulf %219, %220 : vector<8x8x32xf32>
    %222 = arith.addf %216, %221 : vector<8x8x32xf32>
    %223 = vector.extract_strided_slice %0 {offsets = [0, 0, 5], sizes = [8, 8, 1], strides = [1, 1, 1]} : vector<8x8x8xf32> to vector<8x8x1xf32>
    %224 = vector.extract_strided_slice %193 {offsets = [0, 5, 0], sizes = [8, 1, 32], strides = [1, 1, 1]} : vector<8x8x32xf32> to vector<8x1x32xf32>
    %225 = vector.broadcast %223 : vector<8x8x1xf32> to vector<8x8x32xf32>
    %226 = vector.broadcast %224 : vector<8x1x32xf32> to vector<8x8x32xf32>
    %227 = arith.mulf %225, %226 : vector<8x8x32xf32>
    %228 = arith.addf %222, %227 : vector<8x8x32xf32>
    %229 = vector.extract_strided_slice %0 {offsets = [0, 0, 6], sizes = [8, 8, 1], strides = [1, 1, 1]} : vector<8x8x8xf32> to vector<8x8x1xf32>
    %230 = vector.extract_strided_slice %193 {offsets = [0, 6, 0], sizes = [8, 1, 32], strides = [1, 1, 1]} : vector<8x8x32xf32> to vector<8x1x32xf32>
    %231 = vector.broadcast %229 : vector<8x8x1xf32> to vector<8x8x32xf32>
    %232 = vector.broadcast %230 : vector<8x1x32xf32> to vector<8x8x32xf32>
    %233 = arith.mulf %231, %232 : vector<8x8x32xf32>
    %234 = arith.addf %228, %233 : vector<8x8x32xf32>
    %235 = vector.extract_strided_slice %0 {offsets = [0, 0, 7], sizes = [8, 8, 1], strides = [1, 1, 1]} : vector<8x8x8xf32> to vector<8x8x1xf32>
    %236 = vector.extract_strided_slice %193 {offsets = [0, 7, 0], sizes = [8, 1, 32], strides = [1, 1, 1]} : vector<8x8x32xf32> to vector<8x1x32xf32>
    %237 = vector.broadcast %235 : vector<8x8x1xf32> to vector<8x8x32xf32>
    %238 = vector.broadcast %236 : vector<8x1x32xf32> to vector<8x8x32xf32>
    %239 = arith.mulf %237, %238 : vector<8x8x32xf32>
    %240 = arith.addf %234, %239 : vector<8x8x32xf32>
    %241 = vector.shape_cast %240 : vector<8x8x32xf32> to vector<8x256xf32>
    %c2_45 = arith.constant 2 : index
    %c0_46 = arith.constant 0 : index
    %c0_47 = arith.constant 0 : index
    %242 = vector.load %arg4[%c2_45, %c0_46, %c0_47] : memref<3x256x256xf32, #tpu.memory_space<vmem>>, vector<1x256x256xf32>
    %243 = vector.shape_cast %242 : vector<1x256x256xf32> to vector<256x256xf32>
    %cst_48 = arith.constant dense<0.000000e+00> : vector<8x256xf32>
    %244 = tpu.matmul %241, %243, %cst_48 {dimension_numbers = #tpu.dot_dimension_numbers<[1], [0], [0], [1], [0, 0, 1, 1], [], []>} : vector<8x256xf32>, vector<256x256xf32>, vector<8x256xf32> -> vector<8x256xf32>
    %c2_49 = arith.constant 2 : index
    %c0_50 = arith.constant 0 : index
    %c0_51 = arith.constant 0 : index
    %245 = vector.load %arg5[%c2_49, %c0_50, %c0_51] : memref<3x1x256xf32, #tpu.memory_space<vmem>>, vector<1x1x256xf32>
    %246 = vector.shape_cast %245 : vector<1x1x256xf32> to vector<1x256xf32>
    %247 = vector.broadcast %246 : vector<1x256xf32> to vector<8x256xf32>
    %248 = arith.addf %244, %247 : vector<8x256xf32>
    %cst_52 = arith.constant dense<0.000000e+00> : vector<8x768xf32>
    %249 = tpu.matmul %248, %2, %cst_52 {dimension_numbers = #tpu.dot_dimension_numbers<[1], [0], [0], [1], [0, 0, 1, 1], [], []>} : vector<8x256xf32>, vector<256x768xf32>, vector<8x768xf32> -> vector<8x768xf32>
    %250 = vector.broadcast %4 : vector<1x768xf32> to vector<8x768xf32>
    %251 = arith.addf %249, %250 : vector<8x768xf32>
    %cst_53 = arith.constant dense<0.000000e+00> : vector<8x768xf32>
    %252 = tpu.matmul %189, %3, %cst_53 {dimension_numbers = #tpu.dot_dimension_numbers<[1], [0], [0], [1], [0, 0, 1, 1], [], []>} : vector<8x256xf32>, vector<256x768xf32>, vector<8x768xf32> -> vector<8x768xf32>
    %253 = vector.broadcast %5 : vector<1x768xf32> to vector<8x768xf32>
    %254 = arith.addf %252, %253 : vector<8x768xf32>
    %255 = vector.extract_strided_slice %251 {offsets = [0, 0], sizes = [8, 256], strides = [1, 1]} : vector<8x768xf32> to vector<8x256xf32>
    %256 = vector.extract_strided_slice %254 {offsets = [0, 0], sizes = [8, 256], strides = [1, 1]} : vector<8x768xf32> to vector<8x256xf32>
    %257 = arith.addf %255, %256 : vector<8x256xf32>
    %258 = arith.negf %257 : vector<8x256xf32>
    %259 = math.exp %258 : vector<8x256xf32>
    %cst_54 = arith.constant 1.000000e+00 : f32
    %260 = vector.broadcast %cst_54 : f32 to vector<8x256xf32>
    %261 = arith.addf %260, %259 : vector<8x256xf32>
    %262 = arith.divf %260, %261 : vector<8x256xf32>
    %263 = vector.extract_strided_slice %251 {offsets = [0, 256], sizes = [8, 256], strides = [1, 1]} : vector<8x768xf32> to vector<8x256xf32>
    %264 = vector.extract_strided_slice %254 {offsets = [0, 256], sizes = [8, 256], strides = [1, 1]} : vector<8x768xf32> to vector<8x256xf32>
    %265 = arith.addf %263, %264 : vector<8x256xf32>
    %266 = arith.negf %265 : vector<8x256xf32>
    %267 = math.exp %266 : vector<8x256xf32>
    %cst_55 = arith.constant 1.000000e+00 : f32
    %268 = vector.broadcast %cst_55 : f32 to vector<8x256xf32>
    %269 = arith.addf %268, %267 : vector<8x256xf32>
    %270 = arith.divf %268, %269 : vector<8x256xf32>
    %271 = vector.extract_strided_slice %251 {offsets = [0, 512], sizes = [8, 256], strides = [1, 1]} : vector<8x768xf32> to vector<8x256xf32>
    %272 = vector.extract_strided_slice %254 {offsets = [0, 512], sizes = [8, 256], strides = [1, 1]} : vector<8x768xf32> to vector<8x256xf32>
    %273 = arith.mulf %262, %272 : vector<8x256xf32>
    %274 = arith.addf %271, %273 : vector<8x256xf32>
    %275 = math.tanh %274 : vector<8x256xf32>
    %cst_56 = arith.constant 1.000000e+00 : f32
    %276 = vector.broadcast %cst_56 : f32 to vector<8x256xf32>
    %277 = arith.subf %276, %270 : vector<8x256xf32>
    %278 = arith.mulf %277, %275 : vector<8x256xf32>
    %279 = arith.mulf %270, %189 : vector<8x256xf32>
    %280 = arith.addf %278, %279 : vector<8x256xf32>
    %281 = arith.addf %280, %1 : vector<8x256xf32>
    %c0_57 = arith.constant 0 : index
    %c0_58 = arith.constant 0 : index
    %282 = vector.load %arg10[%c0_57, %c0_58] : memref<8x256xf32, #tpu.memory_space<vmem>>, vector<8x256xf32>
    tpu.vector_store %arg10[%c0_57, %c0_58], %281 {strides = array<i32>} : memref<8x256xf32, #tpu.memory_space<vmem>>, vector<8x256xf32>,
    return
  }
  func.func @transform_0(%arg0: i32) -> (i32, i32, i32) {
    %c0_i32 = arith.constant 0 : i32
    %c0_i32_0 = arith.constant 0 : i32
    %c0_i32_1 = arith.constant 0 : i32
    return %arg0, %c0_i32, %c0_i32_0 : i32, i32, i32
  }
  func.func @transform_1(%arg0: i32) -> (i32, i32) {
    %c0_i32 = arith.constant 0 : i32
    %c0_i32_0 = arith.constant 0 : i32
    return %arg0, %c0_i32 : i32, i32
  }
  func.func @transform_2(%arg0: i32) -> (i32, i32, i32) {
    %c0_i32 = arith.constant 0 : i32
    %c0_i32_0 = arith.constant 0 : i32
    %c0_i32_1 = arith.constant 0 : i32
    %c0_i32_2 = arith.constant 0 : i32
    return %c0_i32, %c0_i32_0, %c0_i32_1 : i32, i32, i32
  }
  func.func @transform_3(%arg0: i32) -> (i32, i32, i32) {
    %c0_i32 = arith.constant 0 : i32
    %c0_i32_0 = arith.constant 0 : i32
    %c0_i32_1 = arith.constant 0 : i32
    %c0_i32_2 = arith.constant 0 : i32
    return %c0_i32, %c0_i32_0, %c0_i32_1 : i32, i32, i32
  }
  func.func @transform_4(%arg0: i32) -> (i32, i32, i32) {
    %c0_i32 = arith.constant 0 : i32
    %c0_i32_0 = arith.constant 0 : i32
    %c0_i32_1 = arith.constant 0 : i32
    %c0_i32_2 = arith.constant 0 : i32
    return %c0_i32, %c0_i32_0, %c0_i32_1 : i32, i32, i32
  }
  func.func @transform_5(%arg0: i32) -> (i32, i32) {
    %c0_i32 = arith.constant 0 : i32
    %c0_i32_0 = arith.constant 0 : i32
    %c0_i32_1 = arith.constant 0 : i32
    return %c0_i32, %c0_i32_0 : i32, i32
  }
  func.func @transform_6(%arg0: i32) -> (i32, i32) {
    %c0_i32 = arith.constant 0 : i32
    %c0_i32_0 = arith.constant 0 : i32
    %c0_i32_1 = arith.constant 0 : i32
    return %c0_i32, %c0_i32_0 : i32, i32
  }
  func.func @transform_7(%arg0: i32) -> (i32, i32) {
    %c0_i32 = arith.constant 0 : i32
    %c0_i32_0 = arith.constant 0 : i32
    %c0_i32_1 = arith.constant 0 : i32
    return %c0_i32, %c0_i32_0 : i32, i32
  }
  func.func @transform_8(%arg0: i32) -> (i32, i32) {
    %c0_i32 = arith.constant 0 : i32
    %c0_i32_0 = arith.constant 0 : i32
    %c0_i32_1 = arith.constant 0 : i32
    return %c0_i32, %c0_i32_0 : i32, i32
  }
  func.func @transform_9(%arg0: i32) -> (i32, i32) {
    %c0_i32 = arith.constant 0 : i32
    %c0_i32_0 = arith.constant 0 : i32
    return %arg0, %c0_i32 : i32, i32
  }
}

</mosaic_0001>

<llo_original>
// kernel: tpu_custom_call.1
$region0: #{tpu_custom_call.1}
  #allocation0 [shape = 'u32[]', space=smem, size = 0x4, offset = 0x4, fixed_abs, tag = 'smem constant byte address 0x4 - core index']
  #allocation1 [shape = 'u32[144,128]{1,0:T(1,128)}', space=vmem, size = 0x12000, scoped, tag = 'internal scratch']
  %s0 = inlined_call_operand.hbm [shape: f32[8,8,8], index: 0, kind: input, shape index: {}]
  %s1 = inlined_call_operand.hbm [shape: f32[8,256], index: 1, kind: input, shape index: {}]
  %s2 = inlined_call_operand.hbm [shape: f32[3,256,256], index: 2, kind: input, shape index: {}]
  %s3 = inlined_call_operand.hbm [shape: f32[3,256,256], index: 3, kind: input, shape index: {}]
  %s4 = inlined_call_operand.vmem [shape: f32[3,1,256], index: 4, kind: input, shape index: {}]
  %s5 = inlined_call_operand.hbm [shape: f32[256,768], index: 5, kind: input, shape index: {}]
  %s6 = inlined_call_operand.hbm [shape: f32[256,768], index: 6, kind: input, shape index: {}]
  %s7 = inlined_call_operand.vmem [shape: f32[1,768], index: 7, kind: input, shape index: {}]
  %s8 = inlined_call_operand.vmem [shape: f32[1,768], index: 8, kind: input, shape index: {}]
  %s9 = inlined_call_operand.hbm [shape: f32[8,256], index: 9, kind: output, shape index: {}]
  %s10 = sld [smem:[#allocation0]]
  $region70: #{tpu_custom_call.1} parent=0
    _
  %s12 = ssub.s32 1, %s10
  %s13 = scalar_select 0, %s12, %s10
  $region1: #{tpu_custom_call.1} parent=0
    #allocation2 [shape = 'u8[32768]{0}', space=vmem, size = 0x8000, scoped, tag = 'input window, operand 0, single buffered']
    #allocation3 [shape = 's32[1]{0}', space=sflag, size = 0x4, scoped, tag = 'scoped memory for tpu_custom_call.1']
    #allocation4 [shape = 's32[1]{0}', space=sflag, size = 0x4, scoped, tag = 'scoped memory for tpu_custom_call.1']
    #allocation5 [shape = 'u8[8192]{0}', space=vmem, size = 0x2000, scoped, tag = 'input window, operand 1, single buffered']
    #allocation6 [shape = 's32[1]{0}', space=sflag, size = 0x4, scoped, tag = 'scoped memory for tpu_custom_call.1']
    #allocation7 [shape = 'u8[786432]{0}', space=vmem, size = 0xc0000, scoped, tag = 'input window, operand 2, single buffered']
    #allocation8 [shape = 'u8[786432]{0}', space=vmem, size = 0xc0000, scoped, tag = 'input window, operand 3, single buffered']
    #allocation9 [shape = 's32[1]{0}', space=sflag, size = 0x4, scoped, tag = 'scoped memory for tpu_custom_call.1']
    #allocation10 [shape = 'u8[786432]{0}', space=vmem, size = 0xc0000, scoped, tag = 'input window, operand 5, single buffered']
    #allocation11 [shape = 'u8[786432]{0}', space=vmem, size = 0xc0000, scoped, tag = 'input window, operand 6, single buffered']
    #allocation12 [shape = 's32[1]{0}', space=sflag, size = 0x4, scoped, tag = 'scoped memory for tpu_custom_call.1']
    #allocation13 [shape = 'u8[8192]{0}', space=vmem, size = 0x2000, scoped, tag = 'output window, operand 0, single buffered']
    %14 = vsyncpa [#allocation3], 0
    %15 = vsyncpa [#allocation6], 0
    %16 = vsyncpa [#allocation9], 0
    %17 = vsyncpa [#allocation12], 0
    %18 = vsyncpa [#allocation4], 0
    // Predicated region
    $region2: #{tpu_custom_call.1} parent=1 // pred_check
      _
    $region3: #{tpu_custom_call.1} parent=1 // pred_check_branch
      %20 = sbr.rel (0) target = $region5
    $region4: #{tpu_custom_call.1} parent=1 // pred_region
      %s22 = ssub.s32 1024, 1024
      %23 = vsyncadd [#allocation3], %s22
      %s24 = sshll.u32 [#allocation2], 4
      %s25 = int_to_ptr.vmem [resolvable:$true] %s24
      %30 = dma.hbm_to_vmem [thread:$0]  %s0, 1024, %s25, [#allocation3], 128, 128, 8
    $region5: #{tpu_custom_call.1} parent=1 // pred_fallthru
      _
    // Predicated region
    $region6: #{tpu_custom_call.1} parent=1 // pred_check
      _
    $region7: #{tpu_custom_call.1} parent=1 // pred_check_branch
      %32 = sbr.rel (0) target = $region9
    $region8: #{tpu_custom_call.1} parent=1 // pred_region
      %s34 = ssub.s32 256, 256
      %35 = vsyncadd [#allocation6], %s34
      %s37 = sshll.u32 [#allocation5], 4
      %s38 = int_to_ptr.vmem [resolvable:$true] %s37
      %40 = dma.hbm_to_vmem [thread:$0]  %s1, 256, %s38, [#allocation6]
    $region9: #{tpu_custom_call.1} parent=1 // pred_fallthru
      _
    // Predicated region
    $region10: #{tpu_custom_call.1} parent=1 // pred_check
      _
    $region11: #{tpu_custom_call.1} parent=1 // pred_check_branch
      %42 = sbr.rel (0) target = $region13
    $region12: #{tpu_custom_call.1} parent=1 // pred_region
      %s44 = ssub.s32 24576, 24576
      %45 = vsyncadd [#allocation6], %s44
      %s46 = sshll.u32 [#allocation7], 4
      %s47 = int_to_ptr.vmem [resolvable:$true] %s46
      %52 = dma.hbm_to_vmem [thread:$0]  %s2, 24576, %s47, [#allocation6], 256, 256, 16
    $region13: #{tpu_custom_call.1} parent=1 // pred_fallthru
      _
    // Predicated region
    $region14: #{tpu_custom_call.1} parent=1 // pred_check
      _
    $region15: #{tpu_custom_call.1} parent=1 // pred_check_branch
      %54 = sbr.rel (0) target = $region17
    $region16: #{tpu_custom_call.1} parent=1 // pred_region
      %s56 = ssub.s32 24576, 24576
      %57 = vsyncadd [#allocation9], %s56
      %s58 = sshll.u32 [#allocation8], 4
      %s59 = int_to_ptr.vmem [resolvable:$true] %s58
      %64 = dma.hbm_to_vmem [thread:$0]  %s3, 24576, %s59, [#allocation9], 256, 256, 16
    $region17: #{tpu_custom_call.1} parent=1 // pred_fallthru
      _
    // Predicated region
    $region18: #{tpu_custom_call.1} parent=1 // pred_check
      _
    $region19: #{tpu_custom_call.1} parent=1 // pred_check_branch
      %66 = sbr.rel (0) target = $region21
    $region20: #{tpu_custom_call.1} parent=1 // pred_region
      _
    $region21: #{tpu_custom_call.1} parent=1 // pred_fallthru
      _
    // Predicated region
    $region22: #{tpu_custom_call.1} parent=1 // pred_check
      _
    $region23: #{tpu_custom_call.1} parent=1 // pred_check_branch
      %68 = sbr.rel (0) target = $region25
    $region24: #{tpu_custom_call.1} parent=1 // pred_region
      %s70 = ssub.s32 24576, 24576
      %71 = vsyncadd [#allocation9], %s70
      %s72 = sshll.u32 [#allocation10], 4
      %s73 = int_to_ptr.vmem [resolvable:$true] %s72
      %78 = dma.hbm_to_vmem [thread:$0]  %s5, 24576, %s73, [#allocation9], 768, 768, 48
    $region25: #{tpu_custom_call.1} parent=1 // pred_fallthru
      _
    // Predicated region
    $region26: #{tpu_custom_call.1} parent=1 // pred_check
      _
    $region27: #{tpu_custom_call.1} parent=1 // pred_check_branch
      %80 = sbr.rel (0) target = $region29
    $region28: #{tpu_custom_call.1} parent=1 // pred_region
      %s82 = ssub.s32 24576, 24576
      %83 = vsyncadd [#allocation12], %s82
      %s84 = sshll.u32 [#allocation11], 4
      %s85 = int_to_ptr.vmem [resolvable:$true] %s84
      %90 = dma.hbm_to_vmem [thread:$0]  %s6, 24576, %s85, [#allocation12], 768, 768, 48
    $region29: #{tpu_custom_call.1} parent=1 // pred_fallthru
      _
    // Predicated region
    $region30: #{tpu_custom_call.1} parent=1 // pred_check
      _
    $region31: #{tpu_custom_call.1} parent=1 // pred_check_branch
      %92 = sbr.rel (0) target = $region33
    $region32: #{tpu_custom_call.1} parent=1 // pred_region
      _
    $region33: #{tpu_custom_call.1} parent=1 // pred_fallthru
      _
    // Predicated region
    $region34: #{tpu_custom_call.1} parent=1 // pred_check
      _
    $region35: #{tpu_custom_call.1} parent=1 // pred_check_branch
      %94 = sbr.rel (0) target = $region37
    $region36: #{tpu_custom_call.1} parent=1 // pred_region
      _
    $region37: #{tpu_custom_call.1} parent=1 // pred_fallthru
      _
    // Predicated region
    $region38: #{tpu_custom_call.1} parent=1 // pred_check
      _
    $region39: #{tpu_custom_call.1} parent=1 // pred_check_branch
      %96 = sbr.rel (0) target = $region41
    $region40: #{tpu_custom_call.1} parent=1 // pred_region
      %97 = dma.done [#allocation3], 1024
    $region41: #{tpu_custom_call.1} parent=1 // pred_fallthru
      _
    // Predicated region
    $region42: #{tpu_custom_call.1} parent=1 // pred_check
      _
    $region43: #{tpu_custom_call.1} parent=1 // pred_check_branch
      %99 = sbr.rel (0) target = $region45
    $region44: #{tpu_custom_call.1} parent=1 // pred_region
      %100 = dma.done [#allocation6], 256
    $region45: #{tpu_custom_call.1} parent=1 // pred_fallthru
      _
    // Predicated region
    $region46: #{tpu_custom_call.1} parent=1 // pred_check
      _
    $region47: #{tpu_custom_call.1} parent=1 // pred_check_branch
      %102 = sbr.rel (0) target = $region49
    $region48: #{tpu_custom_call.1} parent=1 // pred_region
      %103 = dma.done [#allocation6], 24576
    $region49: #{tpu_custom_call.1} parent=1 // pred_fallthru
      _
    // Predicated region
    $region50: #{tpu_custom_call.1} parent=1 // pred_check
      _
    $region51: #{tpu_custom_call.1} parent=1 // pred_check_branch
      %105 = sbr.rel (0) target = $region53
    $region52: #{tpu_custom_call.1} parent=1 // pred_region
      %106 = dma.done [#allocation9], 24576
    $region53: #{tpu_custom_call.1} parent=1 // pred_fallthru
      _
    // Predicated region
    $region54: #{tpu_custom_call.1} parent=1 // pred_check
      _
    $region55: #{tpu_custom_call.1} parent=1 // pred_check_branch
      %108 = sbr.rel (0) target = $region57
    $region56: #{tpu_custom_call.1} parent=1 // pred_region
      %109 = dma.done [#allocation9], 24576
    $region57: #{tpu_custom_call.1} parent=1 // pred_fallthru
      _
    // Predicated region
    $region58: #{tpu_custom_call.1} parent=1 // pred_check
      _
    $region59: #{tpu_custom_call.1} parent=1 // pred_check_branch
      %111 = sbr.rel (0) target = $region61
    $region60: #{tpu_custom_call.1} parent=1 // pred_region
      %112 = dma.done [#allocation12], 24576
    $region61: #{tpu_custom_call.1} parent=1 // pred_fallthru
      _
    %v113 = vld [vmem:[#allocation2] sm:$0xff]
    %v114 = vld [vmem:[#allocation2 + $0x8] sm:$0xff]
    %v115 = vld [vmem:[#allocation2 + $0x10] sm:$0xff]
    %v116 = vld [vmem:[#allocation2 + $0x18] sm:$0xff]
    %v117 = vld [vmem:[#allocation2 + $0x20] sm:$0xff]
    %v118 = vld [vmem:[#allocation2 + $0x28] sm:$0xff]
    %v119 = vld [vmem:[#allocation2 + $0x30] sm:$0xff]
    %v120 = vld [vmem:[#allocation2 + $0x38] sm:$0xff]
    %v121 = vld [vmem:[#allocation5] sm:$0xff]
    %v122 = vld [vmem:[#allocation5 + $0x8] sm:$0xff]
    %v123 = vld [vmem:[#allocation10] sm:$0xff]
    %v124 = vld [vmem:[#allocation10 + $0x8] sm:$0xff]
    %v125 = vld [vmem:[#allocation10 + $0x10] sm:$0xff]
    %v126 = vld [vmem:[#allocation10 + $0x18] sm:$0xff]
    %v127 = vld [vmem:[#allocation10 + $0x20] sm:$0xff]
    %v128 = vld [vmem:[#allocation10 + $0x28] sm:$0xff]
    %v129 = vld [vmem:[#allocation10 + $0x30] sm:$0xff]
    %v130 = vld [vmem:[#allocation10 + $0x38] sm:$0xff]
    %v131 = vld [vmem:[#allocation10 + $0x40] sm:$0xff]
    %v132 = vld [vmem:[#allocation10 + $0x48] sm:$0xff]
    %v133 = vld [vmem:[#allocation10 + $0x50] sm:$0xff]
    %v134 = vld [vmem:[#allocation10 + $0x58] sm:$0xff]
    %v135 = vld [vmem:[#allocation10 + $0x60] sm:$0xff]
    %v136 = vld [vmem:[#allocation10 + $0x68] sm:$0xff]
    %v137 = vld [vmem:[#allocation10 + $0x70] sm:$0xff]
    %v138 = vld [vmem:[#allocation10 + $0x78] sm:$0xff]
    %v139 = vld [vmem:[#allocation10 + $0x80] sm:$0xff]
    %v140 = vld [vmem:[#allocation10 + $0x88] sm:$0xff]
    %v141 = vld [vmem:[#allocation10 + $0x90] sm:$0xff]
    %v142 = vld [vmem:[#allocation10 + $0x98] sm:$0xff]
    %v143 = vld [vmem:[#allocation10 + $0xa0] sm:$0xff]
    %v144 = vld [vmem:[#allocation10 + $0xa8] sm:$0xff]
    %v145 = vld [vmem:[#allocation10 + $0xb0] sm:$0xff]
    %v146 = vld [vmem:[#allocation10 + $0xb8] sm:$0xff]
    %v147 = vld [vmem:[#allocation10 + $0xc0] sm:$0xff]
    %v148 = vld [vmem:[#allocation10 + $0xc8] sm:$0xff]
    %v149 = vld [vmem:[#allocation10 + $0xd0] sm:$0xff]
    %v150 = vld [vmem:[#allocation10 + $0xd8] sm:$0xff]
    %v151 = vld [vmem:[#allocation10 + $0xe0] sm:$0xff]
    %v152 = vld [vmem:[#allocation10 + $0xe8] sm:$0xff]
    %v153 = vld [vmem:[#allocation10 + $0xf0] sm:$0xff]
    %v154 = vld [vmem:[#allocation10 + $0xf8] sm:$0xff]
    %v155 = vld [vmem:[#allocation10 + $0x100] sm:$0xff]
    %v156 = vld [vmem:[#allocation10 + $0x108] sm:$0xff]
    %v157 = vld [vmem:[#allocation10 + $0x110] sm:$0xff]
    %v158 = vld [vmem:[#allocation10 + $0x118] sm:$0xff]
    %v159 = vld [vmem:[#allocation10 + $0x120] sm:$0xff]
    %v160 = vld [vmem:[#allocation10 + $0x128] sm:$0xff]
    %v161 = vld [vmem:[#allocation10 + $0x130] sm:$0xff]
    %v162 = vld [vmem:[#allocation10 + $0x138] sm:$0xff]
    %v163 = vld [vmem:[#allocation10 + $0x140] sm:$0xff]
    %v164 = vld [vmem:[#allocation10 + $0x148] sm:$0xff]
    %v165 = vld [vmem:[#allocation10 + $0x150] sm:$0xff]
    %v166 = vld [vmem:[#allocation10 + $0x158] sm:$0xff]
    %v167 = vld [vmem:[#allocation10 + $0x160] sm:$0xff]
    %v168 = vld [vmem:[#allocation10 + $0x168] sm:$0xff]
    %v169 = vld [vmem:[#allocation10 + $0x170] sm:$0xff]
    %v170 = vld [vmem:[#allocation10 + $0x178] sm:$0xff]
    %v171 = vld [vmem:[#allocation10 + $0x180] sm:$0xff]
    %v172 = vld [vmem:[#allocation10 + $0x188] sm:$0xff]
    %v173 = vld [vmem:[#allocation10 + $0x190] sm:$0xff]
    %v174 = vld [vmem:[#allocation10 + $0x198] sm:$0xff]
    %v175 = vld [vmem:[#allocation10 + $0x1a0] sm:$0xff]
    %v176 = vld [vmem:[#allocation10 + $0x1a8] sm:$0xff]
    %v177 = vld [vmem:[#allocation10 + $0x1b0] sm:$0xff]
    %v178 = vld [vmem:[#allocation10 + $0x1b8] sm:$0xff]
    %v179 = vld [vmem:[#allocation10 + $0x1c0] sm:$0xff]
    %v180 = vld [vmem:[#allocation10 + $0x1c8] sm:$0xff]
    %v181 = vld [vmem:[#allocation10 + $0x1d0] sm:$0xff]
    %v182 = vld [vmem:[#allocation10 + $0x1d8] sm:$0xff]
    %v183 = vld [vmem:[#allocation10 + $0x1e0] sm:$0xff]
    %v184 = vld [vmem:[#allocation10 + $0x1e8] sm:$0xff]
    %v185 = vld [vmem:[#allocation10 + $0x1f0] sm:$0xff]
    %v186 = vld [vmem:[#allocation10 + $0x1f8] sm:$0xff]
    %v187 = vld [vmem:[#allocation10 + $0x200] sm:$0xff]
    %v188 = vld [vmem:[#allocation10 + $0x208] sm:$0xff]
    %v189 = vld [vmem:[#allocation10 + $0x210] sm:$0xff]
    %v190 = vld [vmem:[#allocation10 + $0x218] sm:$0xff]
    %v191 = vld [vmem:[#allocation10 + $0x220] sm:$0xff]
    %v192 = vld [vmem:[#allocation10 + $0x228] sm:$0xff]
    %v193 = vld [vmem:[#allocation10 + $0x230] sm:$0xff]
    %v194 = vld [vmem:[#allocation10 + $0x238] sm:$0xff]
    %v195 = vld [vmem:[#allocation10 + $0x240] sm:$0xff]
    %v196 = vld [vmem:[#allocation10 + $0x248] sm:$0xff]
    %v197 = vld [vmem:[#allocation10 + $0x250] sm:$0xff]
    %v198 = vld [vmem:[#allocation10 + $0x258] sm:$0xff]
    %v199 = vld [vmem:[#allocation10 + $0x260] sm:$0xff]
    %v200 = vld [vmem:[#allocation10 + $0x268] sm:$0xff]
    %v201 = vld [vmem:[#allocation10 + $0x270] sm:$0xff]
    %v202 = vld [vmem:[#allocation10 + $0x278] sm:$0xff]
    %v203 = vld [vmem:[#allocation10 + $0x280] sm:$0xff]
    %v204 = vld [vmem:[#allocation10 + $0x288] sm:$0xff]
    %v205 = vld [vmem:[#allocation10 + $0x290] sm:$0xff]
    %v206 = vld [vmem:[#allocation10 + $0x298] sm:$0xff]
    %v207 = vld [vmem:[#allocation10 + $0x2a0] sm:$0xff]
    %v208 = vld [vmem:[#allocation10 + $0x2a8] sm:$0xff]
    %v209 = vld [vmem:[#allocation10 + $0x2b0] sm:$0xff]
    %v210 = vld [vmem:[#allocation10 + $0x2b8] sm:$0xff]
    %v211 = vld [vmem:[#allocation10 + $0x2c0] sm:$0xff]
    %v212 = vld [vmem:[#allocation10 + $0x2c8] sm:$0xff]
    %v213 = vld [vmem:[#allocation10 + $0x2d0] sm:$0xff]
    %v214 = vld [vmem:[#allocation10 + $0x2d8] sm:$0xff]
    %v215 = vld [vmem:[#allocation10 + $0x2e0] sm:$0xff]
    %v216 = vld [vmem:[#allocation10 + $0x2e8] sm:$0xff]
    %v217 = vld [vmem:[#allocation10 + $0x2f0] sm:$0xff]
    %v218 = vld [vmem:[#allocation10 + $0x2f8] sm:$0xff]
    %v219 = vld [vmem:[#allocation10 + $0x300] sm:$0xff]
    %v220 = vld [vmem:[#allocation10 + $0x308] sm:$0xff]
    %v221 = vld [vmem:[#allocation10 + $0x310] sm:$0xff]
    %v222 = vld [vmem:[#allocation10 + $0x318] sm:$0xff]
    %v223 = vld [vmem:[#allocation10 + $0x320] sm:$0xff]
    %v224 = vld [vmem:[#allocation10 + $0x328] sm:$0xff]
    %v225 = vld [vmem:[#allocation10 + $0x330] sm:$0xff]
    %v226 = vld [vmem:[#allocation10 + $0x338] sm:$0xff]
    %v227 = vld [vmem:[#allocation10 + $0x340] sm:$0xff]
    %v228 = vld [vmem:[#allocation10 + $0x348] sm:$0xff]
    %v229 = vld [vmem:[#allocation10 + $0x350] sm:$0xff]
    %v230 = vld [vmem:[#allocation10 + $0x358] sm:$0xff]
    %v231 = vld [vmem:[#allocation10 + $0x360] sm:$0xff]
    %v232 = vld [vmem:[#allocation10 + $0x368] sm:$0xff]
    %v233 = vld [vmem:[#allocation10 + $0x370] sm:$0xff]
    %v234 = vld [vmem:[#allocation10 + $0x378] sm:$0xff]
    %v235 = vld [vmem:[#allocation10 + $0x380] sm:$0xff]
    %v236 = vld [vmem:[#allocation10 + $0x388] sm:$0xff]
    %v237 = vld [vmem:[#allocation10 + $0x390] sm:$0xff]
    %v238 = vld [vmem:[#allocation10 + $0x398] sm:$0xff]
    %v239 = vld [vmem:[#allocation10 + $0x3a0] sm:$0xff]
    %v240 = vld [vmem:[#allocation10 + $0x3a8] sm:$0xff]
    %v241 = vld [vmem:[#allocation10 + $0x3b0] sm:$0xff]
    %v242 = vld [vmem:[#allocation10 + $0x3b8] sm:$0xff]
    %v243 = vld [vmem:[#allocation10 + $0x3c0] sm:$0xff]
    %v244 = vld [vmem:[#allocation10 + $0x3c8] sm:$0xff]
    %v245 = vld [vmem:[#allocation10 + $0x3d0] sm:$0xff]
    %v246 = vld [vmem:[#allocation10 + $0x3d8] sm:$0xff]
    %v247 = vld [vmem:[#allocation10 + $0x3e0] sm:$0xff]
    %v248 = vld [vmem:[#allocation10 + $0x3e8] sm:$0xff]
    %v249 = vld [vmem:[#allocation10 + $0x3f0] sm:$0xff]
    %v250 = vld [vmem:[#allocation10 + $0x3f8] sm:$0xff]
    %v251 = vld [vmem:[#allocation10 + $0x400] sm:$0xff]
    %v252 = vld [vmem:[#allocation10 + $0x408] sm:$0xff]
    %v253 = vld [vmem:[#allocation10 + $0x410] sm:$0xff]
    %v254 = vld [vmem:[#allocation10 + $0x418] sm:$0xff]
    %v255 = vld [vmem:[#allocation10 + $0x420] sm:$0xff]
    %v256 = vld [vmem:[#allocation10 + $0x428] sm:$0xff]
    %v257 = vld [vmem:[#allocation10 + $0x430] sm:$0xff]
    %v258 = vld [vmem:[#allocation10 + $0x438] sm:$0xff]
    %v259 = vld [vmem:[#allocation10 + $0x440] sm:$0xff]
    %v260 = vld [vmem:[#allocation10 + $0x448] sm:$0xff]
    %v261 = vld [vmem:[#allocation10 + $0x450] sm:$0xff]
    %v262 = vld [vmem:[#allocation10 + $0x458] sm:$0xff]
    %v263 = vld [vmem:[#allocation10 + $0x460] sm:$0xff]
    %v264 = vld [vmem:[#allocation10 + $0x468] sm:$0xff]
    %v265 = vld [vmem:[#allocation10 + $0x470] sm:$0xff]
    %v266 = vld [vmem:[#allocation10 + $0x478] sm:$0xff]
    %v267 = vld [vmem:[#allocation10 + $0x480] sm:$0xff]
    %v268 = vld [vmem:[#allocation10 + $0x488] sm:$0xff]
    %v269 = vld [vmem:[#allocation10 + $0x490] sm:$0xff]
    %v270 = vld [vmem:[#allocation10 + $0x498] sm:$0xff]
    %v271 = vld [vmem:[#allocation10 + $0x4a0] sm:$0xff]
    %v272 = vld [vmem:[#allocation10 + $0x4a8] sm:$0xff]
    %v273 = vld [vmem:[#allocation10 + $0x4b0] sm:$0xff]
    %v274 = vld [vmem:[#allocation10 + $0x4b8] sm:$0xff]
    %v275 = vld [vmem:[#allocation10 + $0x4c0] sm:$0xff]
    %v276 = vld [vmem:[#allocation10 + $0x4c8] sm:$0xff]
    %v277 = vld [vmem:[#allocation10 + $0x4d0] sm:$0xff]
    %v278 = vld [vmem:[#allocation10 + $0x4d8] sm:$0xff]
    %v279 = vld [vmem:[#allocation10 + $0x4e0] sm:$0xff]
    %v280 = vld [vmem:[#allocation10 + $0x4e8] sm:$0xff]
    %v281 = vld [vmem:[#allocation10 + $0x4f0] sm:$0xff]
    %v282 = vld [vmem:[#allocation10 + $0x4f8] sm:$0xff]
    %v283 = vld [vmem:[#allocation10 + $0x500] sm:$0xff]
    %v284 = vld [vmem:[#allocation10 + $0x508] sm:$0xff]
    %v285 = vld [vmem:[#allocation10 + $0x510] sm:$0xff]
    %v286 = vld [vmem:[#allocation10 + $0x518] sm:$0xff]
    %v287 = vld [vmem:[#allocation10 + $0x520] sm:$0xff]
    %v288 = vld [vmem:[#allocation10 + $0x528] sm:$0xff]
    %v289 = vld [vmem:[#allocation10 + $0x530] sm:$0xff]
    %v290 = vld [vmem:[#allocation10 + $0x538] sm:$0xff]
    %v291 = vld [vmem:[#allocation10 + $0x540] sm:$0xff]
    %v292 = vld [vmem:[#allocation10 + $0x548] sm:$0xff]
    %v293 = vld [vmem:[#allocation10 + $0x550] sm:$0xff]
    %v294 = vld [vmem:[#allocation10 + $0x558] sm:$0xff]
    %v295 = vld [vmem:[#allocation10 + $0x560] sm:$0xff]
    %v296 = vld [vmem:[#allocation10 + $0x568] sm:$0xff]
    %v297 = vld [vmem:[#allocation10 + $0x570] sm:$0xff]
    %v298 = vld [vmem:[#allocation10 + $0x578] sm:$0xff]
    %v299 = vld [vmem:[#allocation10 + $0x580] sm:$0xff]
    %v300 = vld [vmem:[#allocation10 + $0x588] sm:$0xff]
    %v301 = vld [vmem:[#allocation10 + $0x590] sm:$0xff]
    %v302 = vld [vmem:[#allocation10 + $0x598] sm:$0xff]
    %v303 = vld [vmem:[#allocation10 + $0x5a0] sm:$0xff]
    %v304 = vld [vmem:[#allocation10 + $0x5a8] sm:$0xff]
    %v305 = vld [vmem:[#allocation10 + $0x5b0] sm:$0xff]
    %v306 = vld [vmem:[#allocation10 + $0x5b8] sm:$0xff]
    %v307 = vld [vmem:[#allocation10 + $0x5c0] sm:$0xff]
    %v308 = vld [vmem:[#allocation10 + $0x5c8] sm:$0xff]
    %v309 = vld [vmem:[#allocation10 + $0x5d0] sm:$0xff]
    %v310 = vld [vmem:[#allocation10 + $0x5d8] sm:$0xff]
    %v311 = vld [vmem:[#allocation10 + $0x5e0] sm:$0xff]
    %v312 = vld [vmem:[#allocation10 + $0x5e8] sm:$0xff]
    %v313 = vld [vmem:[#allocation10 + $0x5f0] sm:$0xff]
    %v314 = vld [vmem:[#allocation10 + $0x5f8] sm:$0xff]
    %v315 = vld [vmem:[#allocation11] sm:$0xff]
    %v316 = vld [vmem:[#allocation11 + $0x8] sm:$0xff]
    %v317 = vld [vmem:[#allocation11 + $0x10] sm:$0xff]
    %v318 = vld [vmem:[#allocation11 + $0x18] sm:$0xff]
    %v319 = vld [vmem:[#allocation11 + $0x20] sm:$0xff]
    %v320 = vld [vmem:[#allocation11 + $0x28] sm:$0xff]
    %v321 = vld [vmem:[#allocation11 + $0x30] sm:$0xff]
    %v322 = vld [vmem:[#allocation11 + $0x38] sm:$0xff]
    %v323 = vld [vmem:[#allocation11 + $0x40] sm:$0xff]
    %v324 = vld [vmem:[#allocation11 + $0x48] sm:$0xff]
    %v325 = vld [vmem:[#allocation11 + $0x50] sm:$0xff]
    %v326 = vld [vmem:[#allocation11 + $0x58] sm:$0xff]
    %v327 = vld [vmem:[#allocation11 + $0x60] sm:$0xff]
    %v328 = vld [vmem:[#allocation11 + $0x68] sm:$0xff]
    %v329 = vld [vmem:[#allocation11 + $0x70] sm:$0xff]
    %v330 = vld [vmem:[#allocation11 + $0x78] sm:$0xff]
    %v331 = vld [vmem:[#allocation11 + $0x80] sm:$0xff]
    %v332 = vld [vmem:[#allocation11 + $0x88] sm:$0xff]
    %v333 = vld [vmem:[#allocation11 + $0x90] sm:$0xff]
    %v334 = vld [vmem:[#allocation11 + $0x98] sm:$0xff]
    %v335 = vld [vmem:[#allocation11 + $0xa0] sm:$0xff]
    %v336 = vld [vmem:[#allocation11 + $0xa8] sm:$0xff]
    %v337 = vld [vmem:[#allocation11 + $0xb0] sm:$0xff]
    %v338 = vld [vmem:[#allocation11 + $0xb8] sm:$0xff]
    %v339 = vld [vmem:[#allocation11 + $0xc0] sm:$0xff]
    %v340 = vld [vmem:[#allocation11 + $0xc8] sm:$0xff]
    %v341 = vld [vmem:[#allocation11 + $0xd0] sm:$0xff]
    %v342 = vld [vmem:[#allocation11 + $0xd8] sm:$0xff]
    %v343 = vld [vmem:[#allocation11 + $0xe0] sm:$0xff]
    %v344 = vld [vmem:[#allocation11 + $0xe8] sm:$0xff]
    %v345 = vld [vmem:[#allocation11 + $0xf0] sm:$0xff]
    %v346 = vld [vmem:[#allocation11 + $0xf8] sm:$0xff]
    %v347 = vld [vmem:[#allocation11 + $0x100] sm:$0xff]
    %v348 = vld [vmem:[#allocation11 + $0x108] sm:$0xff]
    %v349 = vld [vmem:[#allocation11 + $0x110] sm:$0xff]
    %v350 = vld [vmem:[#allocation11 + $0x118] sm:$0xff]
    %v351 = vld [vmem:[#allocation11 + $0x120] sm:$0xff]
    %v352 = vld [vmem:[#allocation11 + $0x128] sm:$0xff]
    %v353 = vld [vmem:[#allocation11 + $0x130] sm:$0xff]
    %v354 = vld [vmem:[#allocation11 + $0x138] sm:$0xff]
    %v355 = vld [vmem:[#allocation11 + $0x140] sm:$0xff]
    %v356 = vld [vmem:[#allocation11 + $0x148] sm:$0xff]
    %v357 = vld [vmem:[#allocation11 + $0x150] sm:$0xff]
    %v358 = vld [vmem:[#allocation11 + $0x158] sm:$0xff]
    %v359 = vld [vmem:[#allocation11 + $0x160] sm:$0xff]
    %v360 = vld [vmem:[#allocation11 + $0x168] sm:$0xff]
    %v361 = vld [vmem:[#allocation11 + $0x170] sm:$0xff]
    %v362 = vld [vmem:[#allocation11 + $0x178] sm:$0xff]
    %v363 = vld [vmem:[#allocation11 + $0x180] sm:$0xff]
    %v364 = vld [vmem:[#allocation11 + $0x188] sm:$0xff]
    %v365 = vld [vmem:[#allocation11 + $0x190] sm:$0xff]
    %v366 = vld [vmem:[#allocation11 + $0x198] sm:$0xff]
    %v367 = vld [vmem:[#allocation11 + $0x1a0] sm:$0xff]
    %v368 = vld [vmem:[#allocation11 + $0x1a8] sm:$0xff]
    %v369 = vld [vmem:[#allocation11 + $0x1b0] sm:$0xff]
    %v370 = vld [vmem:[#allocation11 + $0x1b8] sm:$0xff]
    %v371 = vld [vmem:[#allocation11 + $0x1c0] sm:$0xff]
    %v372 = vld [vmem:[#allocation11 + $0x1c8] sm:$0xff]
    %v373 = vld [vmem:[#allocation11 + $0x1d0] sm:$0xff]
    %v374 = vld [vmem:[#allocation11 + $0x1d8] sm:$0xff]
    %v375 = vld [vmem:[#allocation11 + $0x1e0] sm:$0xff]
    %v376 = vld [vmem:[#allocation11 + $0x1e8] sm:$0xff]
    %v377 = vld [vmem:[#allocation11 + $0x1f0] sm:$0xff]
    %v378 = vld [vmem:[#allocation11 + $0x1f8] sm:$0xff]
    %v379 = vld [vmem:[#allocation11 + $0x200] sm:$0xff]
    %v380 = vld [vmem:[#allocation11 + $0x208] sm:$0xff]
    %v381 = vld [vmem:[#allocation11 + $0x210] sm:$0xff]
    %v382 = vld [vmem:[#allocation11 + $0x218] sm:$0xff]
    %v383 = vld [vmem:[#allocation11 + $0x220] sm:$0xff]
    %v384 = vld [vmem:[#allocation11 + $0x228] sm:$0xff]
    %v385 = vld [vmem:[#allocation11 + $0x230] sm:$0xff]
    %v386 = vld [vmem:[#allocation11 + $0x238] sm:$0xff]
    %v387 = vld [vmem:[#allocation11 + $0x240] sm:$0xff]
    %v388 = vld [vmem:[#allocation11 + $0x248] sm:$0xff]
    %v389 = vld [vmem:[#allocation11 + $0x250] sm:$0xff]
    %v390 = vld [vmem:[#allocation11 + $0x258] sm:$0xff]
    %v391 = vld [vmem:[#allocation11 + $0x260] sm:$0xff]
    %v392 = vld [vmem:[#allocation11 + $0x268] sm:$0xff]
    %v393 = vld [vmem:[#allocation11 + $0x270] sm:$0xff]
    %v394 = vld [vmem:[#allocation11 + $0x278] sm:$0xff]
    %v395 = vld [vmem:[#allocation11 + $0x280] sm:$0xff]
    %v396 = vld [vmem:[#allocation11 + $0x288] sm:$0xff]
    %v397 = vld [vmem:[#allocation11 + $0x290] sm:$0xff]
    %v398 = vld [vmem:[#allocation11 + $0x298] sm:$0xff]
    %v399 = vld [vmem:[#allocation11 + $0x2a0] sm:$0xff]
    %v400 = vld [vmem:[#allocation11 + $0x2a8] sm:$0xff]
    %v401 = vld [vmem:[#allocation11 + $0x2b0] sm:$0xff]
    %v402 = vld [vmem:[#allocation11 + $0x2b8] sm:$0xff]
    %v403 = vld [vmem:[#allocation11 + $0x2c0] sm:$0xff]
    %v404 = vld [vmem:[#allocation11 + $0x2c8] sm:$0xff]
    %v405 = vld [vmem:[#allocation11 + $0x2d0] sm:$0xff]
    %v406 = vld [vmem:[#allocation11 + $0x2d8] sm:$0xff]
    %v407 = vld [vmem:[#allocation11 + $0x2e0] sm:$0xff]
    %v408 = vld [vmem:[#allocation11 + $0x2e8] sm:$0xff]
    %v409 = vld [vmem:[#allocation11 + $0x2f0] sm:$0xff]
    %v410 = vld [vmem:[#allocation11 + $0x2f8] sm:$0xff]
    %v411 = vld [vmem:[#allocation11 + $0x300] sm:$0xff]
    %v412 = vld [vmem:[#allocation11 + $0x308] sm:$0xff]
    %v413 = vld [vmem:[#allocation11 + $0x310] sm:$0xff]
    %v414 = vld [vmem:[#allocation11 + $0x318] sm:$0xff]
    %v415 = vld [vmem:[#allocation11 + $0x320] sm:$0xff]
    %v416 = vld [vmem:[#allocation11 + $0x328] sm:$0xff]
    %v417 = vld [vmem:[#allocation11 + $0x330] sm:$0xff]
    %v418 = vld [vmem:[#allocation11 + $0x338] sm:$0xff]
    %v419 = vld [vmem:[#allocation11 + $0x340] sm:$0xff]
    %v420 = vld [vmem:[#allocation11 + $0x348] sm:$0xff]
    %v421 = vld [vmem:[#allocation11 + $0x350] sm:$0xff]
    %v422 = vld [vmem:[#allocation11 + $0x358] sm:$0xff]
    %v423 = vld [vmem:[#allocation11 + $0x360] sm:$0xff]
    %v424 = vld [vmem:[#allocation11 + $0x368] sm:$0xff]
    %v425 = vld [vmem:[#allocation11 + $0x370] sm:$0xff]
    %v426 = vld [vmem:[#allocation11 + $0x378] sm:$0xff]
    %v427 = vld [vmem:[#allocation11 + $0x380] sm:$0xff]
    %v428 = vld [vmem:[#allocation11 + $0x388] sm:$0xff]
    %v429 = vld [vmem:[#allocation11 + $0x390] sm:$0xff]
    %v430 = vld [vmem:[#allocation11 + $0x398] sm:$0xff]
    %v431 = vld [vmem:[#allocation11 + $0x3a0] sm:$0xff]
    %v432 = vld [vmem:[#allocation11 + $0x3a8] sm:$0xff]
    %v433 = vld [vmem:[#allocation11 + $0x3b0] sm:$0xff]
    %v434 = vld [vmem:[#allocation11 + $0x3b8] sm:$0xff]
    %v435 = vld [vmem:[#allocation11 + $0x3c0] sm:$0xff]
    %v436 = vld [vmem:[#allocation11 + $0x3c8] sm:$0xff]
    %v437 = vld [vmem:[#allocation11 + $0x3d0] sm:$0xff]
    %v438 = vld [vmem:[#allocation11 + $0x3d8] sm:$0xff]
    %v439 = vld [vmem:[#allocation11 + $0x3e0] sm:$0xff]
    %v440 = vld [vmem:[#allocation11 + $0x3e8] sm:$0xff]
    %v441 = vld [vmem:[#allocation11 + $0x3f0] sm:$0xff]
    %v442 = vld [vmem:[#allocation11 + $0x3f8] sm:$0xff]
    %v443 = vld [vmem:[#allocation11 + $0x400] sm:$0xff]
    %v444 = vld [vmem:[#allocation11 + $0x408] sm:$0xff]
    %v445 = vld [vmem:[#allocation11 + $0x410] sm:$0xff]
    %v446 = vld [vmem:[#allocation11 + $0x418] sm:$0xff]
    %v447 = vld [vmem:[#allocation11 + $0x420] sm:$0xff]
    %v448 = vld [vmem:[#allocation11 + $0x428] sm:$0xff]
    %v449 = vld [vmem:[#allocation11 + $0x430] sm:$0xff]
    %v450 = vld [vmem:[#allocation11 + $0x438] sm:$0xff]
    %v451 = vld [vmem:[#allocation11 + $0x440] sm:$0xff]
    %v452 = vld [vmem:[#allocation11 + $0x448] sm:$0xff]
    %v453 = vld [vmem:[#allocation11 + $0x450] sm:$0xff]
    %v454 = vld [vmem:[#allocation11 + $0x458] sm:$0xff]
    %v455 = vld [vmem:[#allocation11 + $0x460] sm:$0xff]
    %v456 = vld [vmem:[#allocation11 + $0x468] sm:$0xff]
    %v457 = vld [vmem:[#allocation11 + $0x470] sm:$0xff]
    %v458 = vld [vmem:[#allocation11 + $0x478] sm:$0xff]
    %v459 = vld [vmem:[#allocation11 + $0x480] sm:$0xff]
    %v460 = vld [vmem:[#allocation11 + $0x488] sm:$0xff]
    %v461 = vld [vmem:[#allocation11 + $0x490] sm:$0xff]
    %v462 = vld [vmem:[#allocation11 + $0x498] sm:$0xff]
    %v463 = vld [vmem:[#allocation11 + $0x4a0] sm:$0xff]
    %v464 = vld [vmem:[#allocation11 + $0x4a8] sm:$0xff]
    %v465 = vld [vmem:[#allocation11 + $0x4b0] sm:$0xff]
    %v466 = vld [vmem:[#allocation11 + $0x4b8] sm:$0xff]
    %v467 = vld [vmem:[#allocation11 + $0x4c0] sm:$0xff]
    %v468 = vld [vmem:[#allocation11 + $0x4c8] sm:$0xff]
    %v469 = vld [vmem:[#allocation11 + $0x4d0] sm:$0xff]
    %v470 = vld [vmem:[#allocation11 + $0x4d8] sm:$0xff]
    %v471 = vld [vmem:[#allocation11 + $0x4e0] sm:$0xff]
    %v472 = vld [vmem:[#allocation11 + $0x4e8] sm:$0xff]
    %v473 = vld [vmem:[#allocation11 + $0x4f0] sm:$0xff]
    %v474 = vld [vmem:[#allocation11 + $0x4f8] sm:$0xff]
    %v475 = vld [vmem:[#allocation11 + $0x500] sm:$0xff]
    %v476 = vld [vmem:[#allocation11 + $0x508] sm:$0xff]
    %v477 = vld [vmem:[#allocation11 + $0x510] sm:$0xff]
    %v478 = vld [vmem:[#allocation11 + $0x518] sm:$0xff]
    %v479 = vld [vmem:[#allocation11 + $0x520] sm:$0xff]
    %v480 = vld [vmem:[#allocation11 + $0x528] sm:$0xff]
    %v481 = vld [vmem:[#allocation11 + $0x530] sm:$0xff]
    %v482 = vld [vmem:[#allocation11 + $0x538] sm:$0xff]
    %v483 = vld [vmem:[#allocation11 + $0x540] sm:$0xff]
    %v484 = vld [vmem:[#allocation11 + $0x548] sm:$0xff]
    %v485 = vld [vmem:[#allocation11 + $0x550] sm:$0xff]
    %v486 = vld [vmem:[#allocation11 + $0x558] sm:$0xff]
    %v487 = vld [vmem:[#allocation11 + $0x560] sm:$0xff]
    %v488 = vld [vmem:[#allocation11 + $0x568] sm:$0xff]
    %v489 = vld [vmem:[#allocation11 + $0x570] sm:$0xff]
    %v490 = vld [vmem:[#allocation11 + $0x578] sm:$0xff]
    %v491 = vld [vmem:[#allocation11 + $0x580] sm:$0xff]
    %v492 = vld [vmem:[#allocation11 + $0x588] sm:$0xff]
    %v493 = vld [vmem:[#allocation11 + $0x590] sm:$0xff]
    %v494 = vld [vmem:[#allocation11 + $0x598] sm:$0xff]
    %v495 = vld [vmem:[#allocation11 + $0x5a0] sm:$0xff]
    %v496 = vld [vmem:[#allocation11 + $0x5a8] sm:$0xff]
    %v497 = vld [vmem:[#allocation11 + $0x5b0] sm:$0xff]
    %v498 = vld [vmem:[#allocation11 + $0x5b8] sm:$0xff]
    %v499 = vld [vmem:[#allocation11 + $0x5c0] sm:$0xff]
    %v500 = vld [vmem:[#allocation11 + $0x5c8] sm:$0xff]
    %v501 = vld [vmem:[#allocation11 + $0x5d0] sm:$0xff]
    %v502 = vld [vmem:[#allocation11 + $0x5d8] sm:$0xff]
    %v503 = vld [vmem:[#allocation11 + $0x5e0] sm:$0xff]
    %v504 = vld [vmem:[#allocation11 + $0x5e8] sm:$0xff]
    %v505 = vld [vmem:[#allocation11 + $0x5f0] sm:$0xff]
    %v506 = vld [vmem:[#allocation11 + $0x5f8] sm:$0xff]
    %v507 = vld [vmem:[%s7] sm:$0x3f]
    %v508 = vld [vmem:[%s8] sm:$0x3f]
    %v509 = vld [vmem:[#allocation7] sm:$0xff]
    %v510 = vld [vmem:[#allocation7 + $0x8] sm:$0xff]
    %v511 = vld [vmem:[#allocation7 + $0x10] sm:$0xff]
    %v512 = vld [vmem:[#allocation7 + $0x18] sm:$0xff]
    %v513 = vld [vmem:[#allocation7 + $0x20] sm:$0xff]
    %v514 = vld [vmem:[#allocation7 + $0x28] sm:$0xff]
    %v515 = vld [vmem:[#allocation7 + $0x30] sm:$0xff]
    %v516 = vld [vmem:[#allocation7 + $0x38] sm:$0xff]
    %v517 = vld [vmem:[#allocation7 + $0x40] sm:$0xff]
    %v518 = vld [vmem:[#allocation7 + $0x48] sm:$0xff]
    %v519 = vld [vmem:[#allocation7 + $0x50] sm:$0xff]
    %v520 = vld [vmem:[#allocation7 + $0x58] sm:$0xff]
    %v521 = vld [vmem:[#allocation7 + $0x60] sm:$0xff]
    %v522 = vld [vmem:[#allocation7 + $0x68] sm:$0xff]
    %v523 = vld [vmem:[#allocation7 + $0x70] sm:$0xff]
    %v524 = vld [vmem:[#allocation7 + $0x78] sm:$0xff]
    %v525 = vld [vmem:[#allocation7 + $0x80] sm:$0xff]
    %v526 = vld [vmem:[#allocation7 + $0x88] sm:$0xff]
    %v527 = vld [vmem:[#allocation7 + $0x90] sm:$0xff]
    %v528 = vld [vmem:[#allocation7 + $0x98] sm:$0xff]
    %v529 = vld [vmem:[#allocation7 + $0xa0] sm:$0xff]
    %v530 = vld [vmem:[#allocation7 + $0xa8] sm:$0xff]
    %v531 = vld [vmem:[#allocation7 + $0xb0] sm:$0xff]
    %v532 = vld [vmem:[#allocation7 + $0xb8] sm:$0xff]
    %v533 = vld [vmem:[#allocation7 + $0xc0] sm:$0xff]
    %v534 = vld [vmem:[#allocation7 + $0xc8] sm:$0xff]
    %v535 = vld [vmem:[#allocation7 + $0xd0] sm:$0xff]
    %v536 = vld [vmem:[#allocation7 + $0xd8] sm:$0xff]
    %v537 = vld [vmem:[#allocation7 + $0xe0] sm:$0xff]
    %v538 = vld [vmem:[#allocation7 + $0xe8] sm:$0xff]
    %v539 = vld [vmem:[#allocation7 + $0xf0] sm:$0xff]
    %v540 = vld [vmem:[#allocation7 + $0xf8] sm:$0xff]
    %v541 = vld [vmem:[#allocation7 + $0x100] sm:$0xff]
    %v542 = vld [vmem:[#allocation7 + $0x108] sm:$0xff]
    %v543 = vld [vmem:[#allocation7 + $0x110] sm:$0xff]
    %v544 = vld [vmem:[#allocation7 + $0x118] sm:$0xff]
    %v545 = vld [vmem:[#allocation7 + $0x120] sm:$0xff]
    %v546 = vld [vmem:[#allocation7 + $0x128] sm:$0xff]
    %v547 = vld [vmem:[#allocation7 + $0x130] sm:$0xff]
    %v548 = vld [vmem:[#allocation7 + $0x138] sm:$0xff]
    %v549 = vld [vmem:[#allocation7 + $0x140] sm:$0xff]
    %v550 = vld [vmem:[#allocation7 + $0x148] sm:$0xff]
    %v551 = vld [vmem:[#allocation7 + $0x150] sm:$0xff]
    %v552 = vld [vmem:[#allocation7 + $0x158] sm:$0xff]
    %v553 = vld [vmem:[#allocation7 + $0x160] sm:$0xff]
    %v554 = vld [vmem:[#allocation7 + $0x168] sm:$0xff]
    %v555 = vld [vmem:[#allocation7 + $0x170] sm:$0xff]
    %v556 = vld [vmem:[#allocation7 + $0x178] sm:$0xff]
    %v557 = vld [vmem:[#allocation7 + $0x180] sm:$0xff]
    %v558 = vld [vmem:[#allocation7 + $0x188] sm:$0xff]
    %v559 = vld [vmem:[#allocation7 + $0x190] sm:$0xff]
    %v560 = vld [vmem:[#allocation7 + $0x198] sm:$0xff]
    %v561 = vld [vmem:[#allocation7 + $0x1a0] sm:$0xff]
    %v562 = vld [vmem:[#allocation7 + $0x1a8] sm:$0xff]
    %v563 = vld [vmem:[#allocation7 + $0x1b0] sm:$0xff]
    %v564 = vld [vmem:[#allocation7 + $0x1b8] sm:$0xff]
    %v565 = vld [vmem:[#allocation7 + $0x1c0] sm:$0xff]
    %v566 = vld [vmem:[#allocation7 + $0x1c8] sm:$0xff]
    %v567 = vld [vmem:[#allocation7 + $0x1d0] sm:$0xff]
    %v568 = vld [vmem:[#allocation7 + $0x1d8] sm:$0xff]
    %v569 = vld [vmem:[#allocation7 + $0x1e0] sm:$0xff]
    %v570 = vld [vmem:[#allocation7 + $0x1e8] sm:$0xff]
    %v571 = vld [vmem:[#allocation7 + $0x1f0] sm:$0xff]
    %v572 = vld [vmem:[#allocation7 + $0x1f8] sm:$0xff]
    %573 = vmatprep.subr.mxu0 %v510
    %574 = vmatpush1.msra.mxu0 %v509
    %575 = vmatprep.subr.mxu0 %v512
    %576 = vmatpush1.msra.mxu0 %v511
    %577 = vmatprep.subr.mxu0 %v514
    %578 = vmatpush1.msra.mxu0 %v513
    %579 = vmatprep.subr.mxu0 %v516
    %580 = vmatpush1.msra.mxu0 %v515
    %581 = vmatprep.subr.mxu0 %v518
    %582 = vmatpush1.msra.mxu0 %v517
    %583 = vmatprep.subr.mxu0 %v520
    %584 = vmatpush1.msra.mxu0 %v519
    %585 = vmatprep.subr.mxu0 %v522
    %586 = vmatpush1.msra.mxu0 %v521
    %587 = vmatprep.subr.mxu0 %v524
    %588 = vmatpush1.msra.mxu0 %v523
    %589 = vmatprep.subr.mxu0 %v526
    %590 = vmatpush1.msra.mxu0 %v525
    %591 = vmatprep.subr.mxu0 %v528
    %592 = vmatpush1.msra.mxu0 %v527
    %593 = vmatprep.subr.mxu0 %v530
    %594 = vmatpush1.msra.mxu0 %v529
    %595 = vmatprep.subr.mxu0 %v532
    %596 = vmatpush1.msra.mxu0 %v531
    %597 = vmatprep.subr.mxu0 %v534
    %598 = vmatpush1.msra.mxu0 %v533
    %599 = vmatprep.subr.mxu0 %v536
    %600 = vmatpush1.msra.mxu0 %v535
    %601 = vmatprep.subr.mxu0 %v538
    %602 = vmatpush1.msra.mxu0 %v537
    %603 = vmatprep.subr.mxu0 %v540
    %604 = vmatpush1.msra.mxu0 %v539
    %605 = vmatprep.subr.mxu0 %v542
    %606 = vmatpush1.msra.mxu0 %v541
    %607 = vmatprep.subr.mxu0 %v544
    %608 = vmatpush1.msra.mxu0 %v543
    %609 = vmatprep.subr.mxu0 %v546
    %610 = vmatpush1.msra.mxu0 %v545
    %611 = vmatprep.subr.mxu0 %v548
    %612 = vmatpush1.msra.mxu0 %v547
    %613 = vmatprep.subr.mxu0 %v550
    %614 = vmatpush1.msra.mxu0 %v549
    %615 = vmatprep.subr.mxu0 %v552
    %616 = vmatpush1.msra.mxu0 %v551
    %617 = vmatprep.subr.mxu0 %v554
    %618 = vmatpush1.msra.mxu0 %v553
    %619 = vmatprep.subr.mxu0 %v556
    %620 = vmatpush1.msra.mxu0 %v555
    %621 = vmatprep.subr.mxu0 %v558
    %622 = vmatpush1.msra.mxu0 %v557
    %623 = vmatprep.subr.mxu0 %v560
    %624 = vmatpush1.msra.mxu0 %v559
    %625 = vmatprep.subr.mxu0 %v562
    %626 = vmatpush1.msra.mxu0 %v561
    %627 = vmatprep.subr.mxu0 %v564
    %628 = vmatpush1.msra.mxu0 %v563
    %629 = vmatprep.subr.mxu0 %v566
    %630 = vmatpush1.msra.mxu0 %v565
    %631 = vmatprep.subr.mxu0 %v568
    %632 = vmatpush1.msra.mxu0 %v567
    %633 = vmatprep.subr.mxu0 %v570
    %634 = vmatpush1.msra.mxu0 %v569
    %635 = vmatprep.subr.mxu0 %v572
    %636 = vmatpush1.msra.mxu0 %v571
    %637 = vmatprep.mubr.f32.mxu0 %v122
    %638 = vmatmul.mubr.f32.gmra.mrb[0].mxu0 %v121
    %v639 = vpop.f32.mrb[0].mxu0
    %v640 = vadd.f32 0.0, %v639
    %v641 = vpop.f32.mrb[0].mxu0
    %v642 = vadd.f32 0.0, %v641
    %643 = vdwg.mxu0
    %645 = vrot.lane.b32.xlu0 %v640, 96
    %v646 = vpop.permute.xlu0 %645
    %648 = vrot.lane.b32.xlu0 %v640, 64
    %v649 = vpop.permute.xlu0 %648
    %651 = vrot.lane.b32.xlu0 %v640, 32
    %v652 = vpop.permute.xlu0 %651
    %655 = vrot.lane.b32.xlu0 %v642, 96
    %v656 = vpop.permute.xlu0 %655
    %658 = vrot.lane.b32.xlu0 %v642, 64
    %v659 = vpop.permute.xlu0 %658
    %661 = vrot.lane.b32.xlu0 %v642, 32
    %v662 = vpop.permute.xlu0 %661
    %v664 = vcombine.low %v640, %v649
    %v665 = vcombine.high %v640, %v649
    %v667 = vunpack.c.l.s4 1983009808
    %v668 = vunpack.c.0.s8 %v667
    %v669 = vlaneseq
    %v670 = vshrl.u32 %v669, 7
    %v671 = vsub.s32 %v668, %v670
    %v672 = vrot.slane %v664, %v671
    %v674 = vunpack.c.l.s4 1983009808
    %v675 = vunpack.c.0.s8 %v674
    %v676 = vlaneseq
    %v677 = vshrl.u32 %v676, 7
    %v678 = vsub.s32 %v675, %v677
    %v679 = vrot.slane %v665, %v678
    %v680 = vcombine.low %v646, %v652
    %v681 = vcombine.high %v646, %v652
    %v683 = vunpack.c.l.s4 1983009808
    %v684 = vunpack.c.0.s8 %v683
    %v685 = vlaneseq
    %v686 = vshrl.u32 %v685, 7
    %v687 = vsub.s32 %v684, %v686
    %v688 = vrot.slane %v680, %v687
    %v690 = vunpack.c.l.s4 1983009808
    %v691 = vunpack.c.0.s8 %v690
    %v692 = vlaneseq
    %v693 = vshrl.u32 %v692, 7
    %v694 = vsub.s32 %v691, %v693
    %v695 = vrot.slane %v681, %v694
    %v696 = vcombine.low %v642, %v659
    %v697 = vcombine.high %v642, %v659
    %v699 = vunpack.c.l.s4 1983009808
    %v700 = vunpack.c.0.s8 %v699
    %v701 = vlaneseq
    %v702 = vshrl.u32 %v701, 7
    %v703 = vsub.s32 %v700, %v702
    %v704 = vrot.slane %v696, %v703
    %v706 = vunpack.c.l.s4 1983009808
    %v707 = vunpack.c.0.s8 %v706
    %v708 = vlaneseq
    %v709 = vshrl.u32 %v708, 7
    %v710 = vsub.s32 %v707, %v709
    %v711 = vrot.slane %v697, %v710
    %v712 = vcombine.low %v656, %v662
    %v713 = vcombine.high %v656, %v662
    %v715 = vunpack.c.l.s4 1983009808
    %v716 = vunpack.c.0.s8 %v715
    %v717 = vlaneseq
    %v718 = vshrl.u32 %v717, 7
    %v719 = vsub.s32 %v716, %v718
    %v720 = vrot.slane %v712, %v719
    %v722 = vunpack.c.l.s4 1983009808
    %v723 = vunpack.c.0.s8 %v722
    %v724 = vlaneseq
    %v725 = vshrl.u32 %v724, 7
    %v726 = vsub.s32 %v723, %v725
    %v727 = vrot.slane %v713, %v726
    %v728 = vcombine.low %v672, %v688
    %v729 = vcombine.high %v672, %v688
    %v731 = vunpack.c.l.s4 1934713408
    %v732 = vunpack.c.0.s8 %v731
    %v733 = vlaneseq
    %v734 = vshrl.u32 %v733, 7
    %v735 = vsub.s32 %v732, %v734
    %v736 = vrot.slane %v728, %v735
    %v738 = vunpack.c.l.s4 1934713408
    %v739 = vunpack.c.0.s8 %v738
    %v740 = vlaneseq
    %v741 = vshrl.u32 %v740, 7
    %v742 = vsub.s32 %v739, %v741
    %v743 = vrot.slane %v729, %v742
    %v744 = vcombine.low %v679, %v695
    %v745 = vcombine.high %v679, %v695
    %v747 = vunpack.c.l.s4 1934713408
    %v748 = vunpack.c.0.s8 %v747
    %v749 = vlaneseq
    %v750 = vshrl.u32 %v749, 7
    %v751 = vsub.s32 %v748, %v750
    %v752 = vrot.slane %v744, %v751
    %v754 = vunpack.c.l.s4 1934713408
    %v755 = vunpack.c.0.s8 %v754
    %v756 = vlaneseq
    %v757 = vshrl.u32 %v756, 7
    %v758 = vsub.s32 %v755, %v757
    %v759 = vrot.slane %v745, %v758
    %v760 = vcombine.low %v704, %v720
    %v761 = vcombine.high %v704, %v720
    %v763 = vunpack.c.l.s4 1934713408
    %v764 = vunpack.c.0.s8 %v763
    %v765 = vlaneseq
    %v766 = vshrl.u32 %v765, 7
    %v767 = vsub.s32 %v764, %v766
    %v768 = vrot.slane %v760, %v767
    %v770 = vunpack.c.l.s4 1934713408
    %v771 = vunpack.c.0.s8 %v770
    %v772 = vlaneseq
    %v773 = vshrl.u32 %v772, 7
    %v774 = vsub.s32 %v771, %v773
    %v775 = vrot.slane %v761, %v774
    %v776 = vcombine.low %v711, %v727
    %v777 = vcombine.high %v711, %v727
    %v779 = vunpack.c.l.s4 1934713408
    %v780 = vunpack.c.0.s8 %v779
    %v781 = vlaneseq
    %v782 = vshrl.u32 %v781, 7
    %v783 = vsub.s32 %v780, %v782
    %v784 = vrot.slane %v776, %v783
    %v786 = vunpack.c.l.s4 1934713408
    %v787 = vunpack.c.0.s8 %v786
    %v788 = vlaneseq
    %v789 = vshrl.u32 %v788, 7
    %v790 = vsub.s32 %v787, %v789
    %v791 = vrot.slane %v777, %v790
    %v792 = vcombine.low %v736, %v768
    %v793 = vcombine.high %v736, %v768
    %v794 = vcombine.low %v743, %v775
    %v795 = vcombine.high %v743, %v775
    %v796 = vcombine.low %v752, %v784
    %v797 = vcombine.high %v752, %v784
    %v798 = vcombine.low %v759, %v791
    %v799 = vcombine.high %v759, %v791
    %801 = vset.pattern.permute.xlu0 0
    %802 = vperm.xlu0 %801, %v113
    %v803 = vpop.permute.xlu0 %802
    %806 = vset.pattern.permute.xlu0 0
    %807 = vperm.xlu0 %806, %v114
    %v808 = vpop.permute.xlu0 %807
    %811 = vset.pattern.permute.xlu0 0
    %812 = vperm.xlu0 %811, %v115
    %v813 = vpop.permute.xlu0 %812
    %816 = vset.pattern.permute.xlu0 0
    %817 = vperm.xlu0 %816, %v116
    %v818 = vpop.permute.xlu0 %817
    %821 = vset.pattern.permute.xlu0 0
    %822 = vperm.xlu0 %821, %v117
    %v823 = vpop.permute.xlu0 %822
    %826 = vset.pattern.permute.xlu0 0
    %827 = vperm.xlu0 %826, %v118
    %v828 = vpop.permute.xlu0 %827
    %831 = vset.pattern.permute.xlu0 0
    %832 = vperm.xlu0 %831, %v119
    %v833 = vpop.permute.xlu0 %832
    %836 = vset.pattern.permute.xlu0 0
    %837 = vperm.xlu0 %836, %v120
    %v838 = vpop.permute.xlu0 %837
    %v840 = vlaneseq
    %v841 = vshrl.u32 %v840, 7
    %v842 = vsub.s32 0, %v841
    %v843 = vrot.slane %v792, %v842
    %v844 = vlaneseq
    %v845 = vshrl.u32 %v844, 7
    %v846 = vsub.s32 0, %v845
    %v847 = vrot.slane %v793, %v846
    %v848 = vlaneseq
    %v849 = vshrl.u32 %v848, 7
    %v850 = vsub.s32 0, %v849
    %v851 = vrot.slane %v794, %v850
    %v852 = vlaneseq
    %v853 = vshrl.u32 %v852, 7
    %v854 = vsub.s32 0, %v853
    %v855 = vrot.slane %v795, %v854
    %v856 = vlaneseq
    %v857 = vshrl.u32 %v856, 7
    %v858 = vsub.s32 0, %v857
    %v859 = vrot.slane %v796, %v858
    %v860 = vlaneseq
    %v861 = vshrl.u32 %v860, 7
    %v862 = vsub.s32 0, %v861
    %v863 = vrot.slane %v797, %v862
    %v864 = vlaneseq
    %v865 = vshrl.u32 %v864, 7
    %v866 = vsub.s32 0, %v865
    %v867 = vrot.slane %v798, %v866
    %v868 = vlaneseq
    %v869 = vshrl.u32 %v868, 7
    %v870 = vsub.s32 0, %v869
    %v871 = vrot.slane %v799, %v870
    %v872 = vmul.f32 %v803, %v843
    %v873 = vmul.f32 %v808, %v847
    %v874 = vmul.f32 %v813, %v851
    %v875 = vmul.f32 %v818, %v855
    %v876 = vmul.f32 %v823, %v859
    %v877 = vmul.f32 %v828, %v863
    %v878 = vmul.f32 %v833, %v867
    %v879 = vmul.f32 %v838, %v871
    %880 = vset.pattern.permute.xlu0 1
    %881 = vperm.xlu0 %880, %v113
    %v882 = vpop.permute.xlu0 %881
    %884 = vset.pattern.permute.xlu0 1
    %885 = vperm.xlu0 %884, %v114
    %v886 = vpop.permute.xlu0 %885
    %888 = vset.pattern.permute.xlu0 1
    %889 = vperm.xlu0 %888, %v115
    %v890 = vpop.permute.xlu0 %889
    %892 = vset.pattern.permute.xlu0 1
    %893 = vperm.xlu0 %892, %v116
    %v894 = vpop.permute.xlu0 %893
    %896 = vset.pattern.permute.xlu0 1
    %897 = vperm.xlu0 %896, %v117
    %v898 = vpop.permute.xlu0 %897
    %900 = vset.pattern.permute.xlu0 1
    %901 = vperm.xlu0 %900, %v118
    %v902 = vpop.permute.xlu0 %901
    %904 = vset.pattern.permute.xlu0 1
    %905 = vperm.xlu0 %904, %v119
    %v906 = vpop.permute.xlu0 %905
    %908 = vset.pattern.permute.xlu0 1
    %909 = vperm.xlu0 %908, %v120
    %v910 = vpop.permute.xlu0 %909
    %v912 = vlaneseq
    %v913 = vshrl.u32 %v912, 7
    %v914 = vsub.s32 1, %v913
    %v915 = vrot.slane %v792, %v914
    %v916 = vlaneseq
    %v917 = vshrl.u32 %v916, 7
    %v918 = vsub.s32 1, %v917
    %v919 = vrot.slane %v793, %v918
    %v920 = vlaneseq
    %v921 = vshrl.u32 %v920, 7
    %v922 = vsub.s32 1, %v921
    %v923 = vrot.slane %v794, %v922
    %v924 = vlaneseq
    %v925 = vshrl.u32 %v924, 7
    %v926 = vsub.s32 1, %v925
    %v927 = vrot.slane %v795, %v926
    %v928 = vlaneseq
    %v929 = vshrl.u32 %v928, 7
    %v930 = vsub.s32 1, %v929
    %v931 = vrot.slane %v796, %v930
    %v932 = vlaneseq
    %v933 = vshrl.u32 %v932, 7
    %v934 = vsub.s32 1, %v933
    %v935 = vrot.slane %v797, %v934
    %v936 = vlaneseq
    %v937 = vshrl.u32 %v936, 7
    %v938 = vsub.s32 1, %v937
    %v939 = vrot.slane %v798, %v938
    %v940 = vlaneseq
    %v941 = vshrl.u32 %v940, 7
    %v942 = vsub.s32 1, %v941
    %v943 = vrot.slane %v799, %v942
    %v944 = vmul.f32 %v882, %v915
    %v945 = vmul.f32 %v886, %v919
    %v946 = vmul.f32 %v890, %v923
    %v947 = vmul.f32 %v894, %v927
    %v948 = vmul.f32 %v898, %v931
    %v949 = vmul.f32 %v902, %v935
    %v950 = vmul.f32 %v906, %v939
    %v951 = vmul.f32 %v910, %v943
    %v952 = vadd.f32 %v872, %v944
    %v953 = vadd.f32 %v873, %v945
    %v954 = vadd.f32 %v874, %v946
    %v955 = vadd.f32 %v875, %v947
    %v956 = vadd.f32 %v876, %v948
    %v957 = vadd.f32 %v877, %v949
    %v958 = vadd.f32 %v878, %v950
    %v959 = vadd.f32 %v879, %v951
    %960 = vset.pattern.permute.xlu0 2
    %961 = vperm.xlu0 %960, %v113
    %v962 = vpop.permute.xlu0 %961
    %964 = vset.pattern.permute.xlu0 2
    %965 = vperm.xlu0 %964, %v114
    %v966 = vpop.permute.xlu0 %965
    %968 = vset.pattern.permute.xlu0 2
    %969 = vperm.xlu0 %968, %v115
    %v970 = vpop.permute.xlu0 %969
    %972 = vset.pattern.permute.xlu0 2
    %973 = vperm.xlu0 %972, %v116
    %v974 = vpop.permute.xlu0 %973
    %976 = vset.pattern.permute.xlu0 2
    %977 = vperm.xlu0 %976, %v117
    %v978 = vpop.permute.xlu0 %977
    %980 = vset.pattern.permute.xlu0 2
    %981 = vperm.xlu0 %980, %v118
    %v982 = vpop.permute.xlu0 %981
    %984 = vset.pattern.permute.xlu0 2
    %985 = vperm.xlu0 %984, %v119
    %v986 = vpop.permute.xlu0 %985
    %988 = vset.pattern.permute.xlu0 2
    %989 = vperm.xlu0 %988, %v120
    %v990 = vpop.permute.xlu0 %989
    %v992 = vlaneseq
    %v993 = vshrl.u32 %v992, 7
    %v994 = vsub.s32 2, %v993
    %v995 = vrot.slane %v792, %v994
    %v996 = vlaneseq
    %v997 = vshrl.u32 %v996, 7
    %v998 = vsub.s32 2, %v997
    %v999 = vrot.slane %v793, %v998
    %v1000 = vlaneseq
    %v1001 = vshrl.u32 %v1000, 7
    %v1002 = vsub.s32 2, %v1001
    %v1003 = vrot.slane %v794, %v1002
    %v1004 = vlaneseq
    %v1005 = vshrl.u32 %v1004, 7
    %v1006 = vsub.s32 2, %v1005
    %v1007 = vrot.slane %v795, %v1006
    %v1008 = vlaneseq
    %v1009 = vshrl.u32 %v1008, 7
    %v1010 = vsub.s32 2, %v1009
    %v1011 = vrot.slane %v796, %v1010
    %v1012 = vlaneseq
    %v1013 = vshrl.u32 %v1012, 7
    %v1014 = vsub.s32 2, %v1013
    %v1015 = vrot.slane %v797, %v1014
    %v1016 = vlaneseq
    %v1017 = vshrl.u32 %v1016, 7
    %v1018 = vsub.s32 2, %v1017
    %v1019 = vrot.slane %v798, %v1018
    %v1020 = vlaneseq
    %v1021 = vshrl.u32 %v1020, 7
    %v1022 = vsub.s32 2, %v1021
    %v1023 = vrot.slane %v799, %v1022
    %v1024 = vmul.f32 %v962, %v995
    %v1025 = vmul.f32 %v966, %v999
    %v1026 = vmul.f32 %v970, %v1003
    %v1027 = vmul.f32 %v974, %v1007
    %v1028 = vmul.f32 %v978, %v1011
    %v1029 = vmul.f32 %v982, %v1015
    %v1030 = vmul.f32 %v986, %v1019
    %v1031 = vmul.f32 %v990, %v1023
    %v1032 = vadd.f32 %v952, %v1024
    %v1033 = vadd.f32 %v953, %v1025
    %v1034 = vadd.f32 %v954, %v1026
    %v1035 = vadd.f32 %v955, %v1027
    %v1036 = vadd.f32 %v956, %v1028
    %v1037 = vadd.f32 %v957, %v1029
    %v1038 = vadd.f32 %v958, %v1030
    %v1039 = vadd.f32 %v959, %v1031
    %1040 = vset.pattern.permute.xlu0 3
    %1041 = vperm.xlu0 %1040, %v113
    %v1042 = vpop.permute.xlu0 %1041
    %1044 = vset.pattern.permute.xlu0 3
    %1045 = vperm.xlu0 %1044, %v114
    %v1046 = vpop.permute.xlu0 %1045
    %1048 = vset.pattern.permute.xlu0 3
    %1049 = vperm.xlu0 %1048, %v115
    %v1050 = vpop.permute.xlu0 %1049
    %1052 = vset.pattern.permute.xlu0 3
    %1053 = vperm.xlu0 %1052, %v116
    %v1054 = vpop.permute.xlu0 %1053
    %1056 = vset.pattern.permute.xlu0 3
    %1057 = vperm.xlu0 %1056, %v117
    %v1058 = vpop.permute.xlu0 %1057
    %1060 = vset.pattern.permute.xlu0 3
    %1061 = vperm.xlu0 %1060, %v118
    %v1062 = vpop.permute.xlu0 %1061
    %1064 = vset.pattern.permute.xlu0 3
    %1065 = vperm.xlu0 %1064, %v119
    %v1066 = vpop.permute.xlu0 %1065
    %1068 = vset.pattern.permute.xlu0 3
    %1069 = vperm.xlu0 %1068, %v120
    %v1070 = vpop.permute.xlu0 %1069
    %v1072 = vlaneseq
    %v1073 = vshrl.u32 %v1072, 7
    %v1074 = vsub.s32 3, %v1073
    %v1075 = vrot.slane %v792, %v1074
    %v1076 = vlaneseq
    %v1077 = vshrl.u32 %v1076, 7
    %v1078 = vsub.s32 3, %v1077
    %v1079 = vrot.slane %v793, %v1078
    %v1080 = vlaneseq
    %v1081 = vshrl.u32 %v1080, 7
    %v1082 = vsub.s32 3, %v1081
    %v1083 = vrot.slane %v794, %v1082
    %v1084 = vlaneseq
    %v1085 = vshrl.u32 %v1084, 7
    %v1086 = vsub.s32 3, %v1085
    %v1087 = vrot.slane %v795, %v1086
    %v1088 = vlaneseq
    %v1089 = vshrl.u32 %v1088, 7
    %v1090 = vsub.s32 3, %v1089
    %v1091 = vrot.slane %v796, %v1090
    %v1092 = vlaneseq
    %v1093 = vshrl.u32 %v1092, 7
    %v1094 = vsub.s32 3, %v1093
    %v1095 = vrot.slane %v797, %v1094
    %v1096 = vlaneseq
    %v1097 = vshrl.u32 %v1096, 7
    %v1098 = vsub.s32 3, %v1097
    %v1099 = vrot.slane %v798, %v1098
    %v1100 = vlaneseq
    %v1101 = vshrl.u32 %v1100, 7
    %v1102 = vsub.s32 3, %v1101
    %v1103 = vrot.slane %v799, %v1102
    %v1104 = vmul.f32 %v1042, %v1075
    %v1105 = vmul.f32 %v1046, %v1079
    %v1106 = vmul.f32 %v1050, %v1083
    %v1107 = vmul.f32 %v1054, %v1087
    %v1108 = vmul.f32 %v1058, %v1091
    %v1109 = vmul.f32 %v1062, %v1095
    %v1110 = vmul.f32 %v1066, %v1099
    %v1111 = vmul.f32 %v1070, %v1103
    %v1112 = vadd.f32 %v1032, %v1104
    %v1113 = vadd.f32 %v1033, %v1105
    %v1114 = vadd.f32 %v1034, %v1106
    %v1115 = vadd.f32 %v1035, %v1107
    %v1116 = vadd.f32 %v1036, %v1108
    %v1117 = vadd.f32 %v1037, %v1109
    %v1118 = vadd.f32 %v1038, %v1110
    %v1119 = vadd.f32 %v1039, %v1111
    %1120 = vset.pattern.permute.xlu0 4
    %1121 = vperm.xlu0 %1120, %v113
    %v1122 = vpop.permute.xlu0 %1121
    %1124 = vset.pattern.permute.xlu0 4
    %1125 = vperm.xlu0 %1124, %v114
    %v1126 = vpop.permute.xlu0 %1125
    %1128 = vset.pattern.permute.xlu0 4
    %1129 = vperm.xlu0 %1128, %v115
    %v1130 = vpop.permute.xlu0 %1129
    %1132 = vset.pattern.permute.xlu0 4
    %1133 = vperm.xlu0 %1132, %v116
    %v1134 = vpop.permute.xlu0 %1133
    %1136 = vset.pattern.permute.xlu0 4
    %1137 = vperm.xlu0 %1136, %v117
    %v1138 = vpop.permute.xlu0 %1137
    %1140 = vset.pattern.permute.xlu0 4
    %1141 = vperm.xlu0 %1140, %v118
    %v1142 = vpop.permute.xlu0 %1141
    %1144 = vset.pattern.permute.xlu0 4
    %1145 = vperm.xlu0 %1144, %v119
    %v1146 = vpop.permute.xlu0 %1145
    %1148 = vset.pattern.permute.xlu0 4
    %1149 = vperm.xlu0 %1148, %v120
    %v1150 = vpop.permute.xlu0 %1149
    %v1152 = vlaneseq
    %v1153 = vshrl.u32 %v1152, 7
    %v1154 = vsub.s32 4, %v1153
    %v1155 = vrot.slane %v792, %v1154
    %v1156 = vlaneseq
    %v1157 = vshrl.u32 %v1156, 7
    %v1158 = vsub.s32 4, %v1157
    %v1159 = vrot.slane %v793, %v1158
    %v1160 = vlaneseq
    %v1161 = vshrl.u32 %v1160, 7
    %v1162 = vsub.s32 4, %v1161
    %v1163 = vrot.slane %v794, %v1162
    %v1164 = vlaneseq
    %v1165 = vshrl.u32 %v1164, 7
    %v1166 = vsub.s32 4, %v1165
    %v1167 = vrot.slane %v795, %v1166
    %v1168 = vlaneseq
    %v1169 = vshrl.u32 %v1168, 7
    %v1170 = vsub.s32 4, %v1169
    %v1171 = vrot.slane %v796, %v1170
    %v1172 = vlaneseq
    %v1173 = vshrl.u32 %v1172, 7
    %v1174 = vsub.s32 4, %v1173
    %v1175 = vrot.slane %v797, %v1174
    %v1176 = vlaneseq
    %v1177 = vshrl.u32 %v1176, 7
    %v1178 = vsub.s32 4, %v1177
    %v1179 = vrot.slane %v798, %v1178
    %v1180 = vlaneseq
    %v1181 = vshrl.u32 %v1180, 7
    %v1182 = vsub.s32 4, %v1181
    %v1183 = vrot.slane %v799, %v1182
    %v1184 = vmul.f32 %v1122, %v1155
    %v1185 = vmul.f32 %v1126, %v1159
    %v1186 = vmul.f32 %v1130, %v1163
    %v1187 = vmul.f32 %v1134, %v1167
    %v1188 = vmul.f32 %v1138, %v1171
    %v1189 = vmul.f32 %v1142, %v1175
    %v1190 = vmul.f32 %v1146, %v1179
    %v1191 = vmul.f32 %v1150, %v1183
    %v1192 = vadd.f32 %v1112, %v1184
    %v1193 = vadd.f32 %v1113, %v1185
    %v1194 = vadd.f32 %v1114, %v1186
    %v1195 = vadd.f32 %v1115, %v1187
    %v1196 = vadd.f32 %v1116, %v1188
    %v1197 = vadd.f32 %v1117, %v1189
    %v1198 = vadd.f32 %v1118, %v1190
    %v1199 = vadd.f32 %v1119, %v1191
    %1200 = vset.pattern.permute.xlu0 5
    %1201 = vperm.xlu0 %1200, %v113
    %v1202 = vpop.permute.xlu0 %1201
    %1204 = vset.pattern.permute.xlu0 5
    %1205 = vperm.xlu0 %1204, %v114
    %v1206 = vpop.permute.xlu0 %1205
    %1208 = vset.pattern.permute.xlu0 5
    %1209 = vperm.xlu0 %1208, %v115
    %v1210 = vpop.permute.xlu0 %1209
    %1212 = vset.pattern.permute.xlu0 5
    %1213 = vperm.xlu0 %1212, %v116
    %v1214 = vpop.permute.xlu0 %1213
    %1216 = vset.pattern.permute.xlu0 5
    %1217 = vperm.xlu0 %1216, %v117
    %v1218 = vpop.permute.xlu0 %1217
    %1220 = vset.pattern.permute.xlu0 5
    %1221 = vperm.xlu0 %1220, %v118
    %v1222 = vpop.permute.xlu0 %1221
    %1224 = vset.pattern.permute.xlu0 5
    %1225 = vperm.xlu0 %1224, %v119
    %v1226 = vpop.permute.xlu0 %1225
    %1228 = vset.pattern.permute.xlu0 5
    %1229 = vperm.xlu0 %1228, %v120
    %v1230 = vpop.permute.xlu0 %1229
    %v1232 = vlaneseq
    %v1233 = vshrl.u32 %v1232, 7
    %v1234 = vsub.s32 5, %v1233
    %v1235 = vrot.slane %v792, %v1234
    %v1236 = vlaneseq
    %v1237 = vshrl.u32 %v1236, 7
    %v1238 = vsub.s32 5, %v1237
    %v1239 = vrot.slane %v793, %v1238
    %v1240 = vlaneseq
    %v1241 = vshrl.u32 %v1240, 7
    %v1242 = vsub.s32 5, %v1241
    %v1243 = vrot.slane %v794, %v1242
    %v1244 = vlaneseq
    %v1245 = vshrl.u32 %v1244, 7
    %v1246 = vsub.s32 5, %v1245
    %v1247 = vrot.slane %v795, %v1246
    %v1248 = vlaneseq
    %v1249 = vshrl.u32 %v1248, 7
    %v1250 = vsub.s32 5, %v1249
    %v1251 = vrot.slane %v796, %v1250
    %v1252 = vlaneseq
    %v1253 = vshrl.u32 %v1252, 7
    %v1254 = vsub.s32 5, %v1253
    %v1255 = vrot.slane %v797, %v1254
    %v1256 = vlaneseq
    %v1257 = vshrl.u32 %v1256, 7
    %v1258 = vsub.s32 5, %v1257
    %v1259 = vrot.slane %v798, %v1258
    %v1260 = vlaneseq
    %v1261 = vshrl.u32 %v1260, 7
    %v1262 = vsub.s32 5, %v1261
    %v1263 = vrot.slane %v799, %v1262
    %v1264 = vmul.f32 %v1202, %v1235
    %v1265 = vmul.f32 %v1206, %v1239
    %v1266 = vmul.f32 %v1210, %v1243
    %v1267 = vmul.f32 %v1214, %v1247
    %v1268 = vmul.f32 %v1218, %v1251
    %v1269 = vmul.f32 %v1222, %v1255
    %v1270 = vmul.f32 %v1226, %v1259
    %v1271 = vmul.f32 %v1230, %v1263
    %v1272 = vadd.f32 %v1192, %v1264
    %v1273 = vadd.f32 %v1193, %v1265
    %v1274 = vadd.f32 %v1194, %v1266
    %v1275 = vadd.f32 %v1195, %v1267
    %v1276 = vadd.f32 %v1196, %v1268
    %v1277 = vadd.f32 %v1197, %v1269
    %v1278 = vadd.f32 %v1198, %v1270
    %v1279 = vadd.f32 %v1199, %v1271
    %1280 = vset.pattern.permute.xlu0 6
    %1281 = vperm.xlu0 %1280, %v113
    %v1282 = vpop.permute.xlu0 %1281
    %1284 = vset.pattern.permute.xlu0 6
    %1285 = vperm.xlu0 %1284, %v114
    %v1286 = vpop.permute.xlu0 %1285
    %1288 = vset.pattern.permute.xlu0 6
    %1289 = vperm.xlu0 %1288, %v115
    %v1290 = vpop.permute.xlu0 %1289
    %1292 = vset.pattern.permute.xlu0 6
    %1293 = vperm.xlu0 %1292, %v116
    %v1294 = vpop.permute.xlu0 %1293
    %1296 = vset.pattern.permute.xlu0 6
    %1297 = vperm.xlu0 %1296, %v117
    %v1298 = vpop.permute.xlu0 %1297
    %1300 = vset.pattern.permute.xlu0 6
    %1301 = vperm.xlu0 %1300, %v118
    %v1302 = vpop.permute.xlu0 %1301
    %1304 = vset.pattern.permute.xlu0 6
    %1305 = vperm.xlu0 %1304, %v119
    %v1306 = vpop.permute.xlu0 %1305
    %1308 = vset.pattern.permute.xlu0 6
    %1309 = vperm.xlu0 %1308, %v120
    %v1310 = vpop.permute.xlu0 %1309
    %v1312 = vlaneseq
    %v1313 = vshrl.u32 %v1312, 7
    %v1314 = vsub.s32 6, %v1313
    %v1315 = vrot.slane %v792, %v1314
    %v1316 = vlaneseq
    %v1317 = vshrl.u32 %v1316, 7
    %v1318 = vsub.s32 6, %v1317
    %v1319 = vrot.slane %v793, %v1318
    %v1320 = vlaneseq
    %v1321 = vshrl.u32 %v1320, 7
    %v1322 = vsub.s32 6, %v1321
    %v1323 = vrot.slane %v794, %v1322
    %v1324 = vlaneseq
    %v1325 = vshrl.u32 %v1324, 7
    %v1326 = vsub.s32 6, %v1325
    %v1327 = vrot.slane %v795, %v1326
    %v1328 = vlaneseq
    %v1329 = vshrl.u32 %v1328, 7
    %v1330 = vsub.s32 6, %v1329
    %v1331 = vrot.slane %v796, %v1330
    %v1332 = vlaneseq
    %v1333 = vshrl.u32 %v1332, 7
    %v1334 = vsub.s32 6, %v1333
    %v1335 = vrot.slane %v797, %v1334
    %v1336 = vlaneseq
    %v1337 = vshrl.u32 %v1336, 7
    %v1338 = vsub.s32 6, %v1337
    %v1339 = vrot.slane %v798, %v1338
    %v1340 = vlaneseq
    %v1341 = vshrl.u32 %v1340, 7
    %v1342 = vsub.s32 6, %v1341
    %v1343 = vrot.slane %v799, %v1342
    %v1344 = vmul.f32 %v1282, %v1315
    %v1345 = vmul.f32 %v1286, %v1319
    %v1346 = vmul.f32 %v1290, %v1323
    %v1347 = vmul.f32 %v1294, %v1327
    %v1348 = vmul.f32 %v1298, %v1331
    %v1349 = vmul.f32 %v1302, %v1335
    %v1350 = vmul.f32 %v1306, %v1339
    %v1351 = vmul.f32 %v1310, %v1343
    %v1352 = vadd.f32 %v1272, %v1344
    %v1353 = vadd.f32 %v1273, %v1345
    %v1354 = vadd.f32 %v1274, %v1346
    %v1355 = vadd.f32 %v1275, %v1347
    %v1356 = vadd.f32 %v1276, %v1348
    %v1357 = vadd.f32 %v1277, %v1349
    %v1358 = vadd.f32 %v1278, %v1350
    %v1359 = vadd.f32 %v1279, %v1351
    %1360 = vset.pattern.permute.xlu0 7
    %1361 = vperm.xlu0 %1360, %v113
    %v1362 = vpop.permute.xlu0 %1361
    %1364 = vset.pattern.permute.xlu0 7
    %1365 = vperm.xlu0 %1364, %v114
    %v1366 = vpop.permute.xlu0 %1365
    %1368 = vset.pattern.permute.xlu0 7
    %1369 = vperm.xlu0 %1368, %v115
    %v1370 = vpop.permute.xlu0 %1369
    %1372 = vset.pattern.permute.xlu0 7
    %1373 = vperm.xlu0 %1372, %v116
    %v1374 = vpop.permute.xlu0 %1373
    %1376 = vset.pattern.permute.xlu0 7
    %1377 = vperm.xlu0 %1376, %v117
    %v1378 = vpop.permute.xlu0 %1377
    %1380 = vset.pattern.permute.xlu0 7
    %1381 = vperm.xlu0 %1380, %v118
    %v1382 = vpop.permute.xlu0 %1381
    %1384 = vset.pattern.permute.xlu0 7
    %1385 = vperm.xlu0 %1384, %v119
    %v1386 = vpop.permute.xlu0 %1385
    %1388 = vset.pattern.permute.xlu0 7
    %1389 = vperm.xlu0 %1388, %v120
    %v1390 = vpop.permute.xlu0 %1389
    %v1392 = vlaneseq
    %v1393 = vshrl.u32 %v1392, 7
    %v1394 = vsub.s32 7, %v1393
    %v1395 = vrot.slane %v792, %v1394
    %v1396 = vlaneseq
    %v1397 = vshrl.u32 %v1396, 7
    %v1398 = vsub.s32 7, %v1397
    %v1399 = vrot.slane %v793, %v1398
    %v1400 = vlaneseq
    %v1401 = vshrl.u32 %v1400, 7
    %v1402 = vsub.s32 7, %v1401
    %v1403 = vrot.slane %v794, %v1402
    %v1404 = vlaneseq
    %v1405 = vshrl.u32 %v1404, 7
    %v1406 = vsub.s32 7, %v1405
    %v1407 = vrot.slane %v795, %v1406
    %v1408 = vlaneseq
    %v1409 = vshrl.u32 %v1408, 7
    %v1410 = vsub.s32 7, %v1409
    %v1411 = vrot.slane %v796, %v1410
    %v1412 = vlaneseq
    %v1413 = vshrl.u32 %v1412, 7
    %v1414 = vsub.s32 7, %v1413
    %v1415 = vrot.slane %v797, %v1414
    %v1416 = vlaneseq
    %v1417 = vshrl.u32 %v1416, 7
    %v1418 = vsub.s32 7, %v1417
    %v1419 = vrot.slane %v798, %v1418
    %v1420 = vlaneseq
    %v1421 = vshrl.u32 %v1420, 7
    %v1422 = vsub.s32 7, %v1421
    %v1423 = vrot.slane %v799, %v1422
    %v1424 = vmul.f32 %v1362, %v1395
    %v1425 = vmul.f32 %v1366, %v1399
    %v1426 = vmul.f32 %v1370, %v1403
    %v1427 = vmul.f32 %v1374, %v1407
    %v1428 = vmul.f32 %v1378, %v1411
    %v1429 = vmul.f32 %v1382, %v1415
    %v1430 = vmul.f32 %v1386, %v1419
    %v1431 = vmul.f32 %v1390, %v1423
    %v1432 = vadd.f32 %v1352, %v1424
    %v1433 = vadd.f32 %v1353, %v1425
    %v1434 = vadd.f32 %v1354, %v1426
    %v1435 = vadd.f32 %v1355, %v1427
    %v1436 = vadd.f32 %v1356, %v1428
    %v1437 = vadd.f32 %v1357, %v1429
    %v1438 = vadd.f32 %v1358, %v1430
    %v1439 = vadd.f32 %v1359, %v1431
    %v1440 = vcombine.low %v1432, %v1434
    %v1441 = vcombine.high %v1432, %v1434
    %v1443 = vunpack.c.l.s4 1983009808
    %v1444 = vunpack.c.0.s8 %v1443
    %v1445 = vlaneseq
    %v1446 = vshrl.u32 %v1445, 7
    %v1447 = vsub.s32 %v1444, %v1446
    %v1448 = vrot.slane %v1440, %v1447
    %v1450 = vunpack.c.l.s4 1983009808
    %v1451 = vunpack.c.0.s8 %v1450
    %v1452 = vlaneseq
    %v1453 = vshrl.u32 %v1452, 7
    %v1454 = vsub.s32 %v1451, %v1453
    %v1455 = vrot.slane %v1441, %v1454
    %v1456 = vcombine.low %v1433, %v1435
    %v1457 = vcombine.high %v1433, %v1435
    %v1459 = vunpack.c.l.s4 1983009808
    %v1460 = vunpack.c.0.s8 %v1459
    %v1461 = vlaneseq
    %v1462 = vshrl.u32 %v1461, 7
    %v1463 = vsub.s32 %v1460, %v1462
    %v1464 = vrot.slane %v1456, %v1463
    %v1466 = vunpack.c.l.s4 1983009808
    %v1467 = vunpack.c.0.s8 %v1466
    %v1468 = vlaneseq
    %v1469 = vshrl.u32 %v1468, 7
    %v1470 = vsub.s32 %v1467, %v1469
    %v1471 = vrot.slane %v1457, %v1470
    %v1472 = vcombine.low %v1436, %v1438
    %v1473 = vcombine.high %v1436, %v1438
    %v1475 = vunpack.c.l.s4 1983009808
    %v1476 = vunpack.c.0.s8 %v1475
    %v1477 = vlaneseq
    %v1478 = vshrl.u32 %v1477, 7
    %v1479 = vsub.s32 %v1476, %v1478
    %v1480 = vrot.slane %v1472, %v1479
    %v1482 = vunpack.c.l.s4 1983009808
    %v1483 = vunpack.c.0.s8 %v1482
    %v1484 = vlaneseq
    %v1485 = vshrl.u32 %v1484, 7
    %v1486 = vsub.s32 %v1483, %v1485
    %v1487 = vrot.slane %v1473, %v1486
    %v1488 = vcombine.low %v1437, %v1439
    %v1489 = vcombine.high %v1437, %v1439
    %v1491 = vunpack.c.l.s4 1983009808
    %v1492 = vunpack.c.0.s8 %v1491
    %v1493 = vlaneseq
    %v1494 = vshrl.u32 %v1493, 7
    %v1495 = vsub.s32 %v1492, %v1494
    %v1496 = vrot.slane %v1488, %v1495
    %v1498 = vunpack.c.l.s4 1983009808
    %v1499 = vunpack.c.0.s8 %v1498
    %v1500 = vlaneseq
    %v1501 = vshrl.u32 %v1500, 7
    %v1502 = vsub.s32 %v1499, %v1501
    %v1503 = vrot.slane %v1489, %v1502
    %v1504 = vcombine.low %v1448, %v1464
    %v1505 = vcombine.high %v1448, %v1464
    %v1507 = vunpack.c.l.s4 1934713408
    %v1508 = vunpack.c.0.s8 %v1507
    %v1509 = vlaneseq
    %v1510 = vshrl.u32 %v1509, 7
    %v1511 = vsub.s32 %v1508, %v1510
    %v1512 = vrot.slane %v1504, %v1511
    %v1514 = vunpack.c.l.s4 1934713408
    %v1515 = vunpack.c.0.s8 %v1514
    %v1516 = vlaneseq
    %v1517 = vshrl.u32 %v1516, 7
    %v1518 = vsub.s32 %v1515, %v1517
    %v1519 = vrot.slane %v1505, %v1518
    %v1520 = vcombine.low %v1455, %v1471
    %v1521 = vcombine.high %v1455, %v1471
    %v1523 = vunpack.c.l.s4 1934713408
    %v1524 = vunpack.c.0.s8 %v1523
    %v1525 = vlaneseq
    %v1526 = vshrl.u32 %v1525, 7
    %v1527 = vsub.s32 %v1524, %v1526
    %v1528 = vrot.slane %v1520, %v1527
    %v1530 = vunpack.c.l.s4 1934713408
    %v1531 = vunpack.c.0.s8 %v1530
    %v1532 = vlaneseq
    %v1533 = vshrl.u32 %v1532, 7
    %v1534 = vsub.s32 %v1531, %v1533
    %v1535 = vrot.slane %v1521, %v1534
    %v1536 = vcombine.low %v1480, %v1496
    %v1537 = vcombine.high %v1480, %v1496
    %v1539 = vunpack.c.l.s4 1934713408
    %v1540 = vunpack.c.0.s8 %v1539
    %v1541 = vlaneseq
    %v1542 = vshrl.u32 %v1541, 7
    %v1543 = vsub.s32 %v1540, %v1542
    %v1544 = vrot.slane %v1536, %v1543
    %v1546 = vunpack.c.l.s4 1934713408
    %v1547 = vunpack.c.0.s8 %v1546
    %v1548 = vlaneseq
    %v1549 = vshrl.u32 %v1548, 7
    %v1550 = vsub.s32 %v1547, %v1549
    %v1551 = vrot.slane %v1537, %v1550
    %v1552 = vcombine.low %v1487, %v1503
    %v1553 = vcombine.high %v1487, %v1503
    %v1555 = vunpack.c.l.s4 1934713408
    %v1556 = vunpack.c.0.s8 %v1555
    %v1557 = vlaneseq
    %v1558 = vshrl.u32 %v1557, 7
    %v1559 = vsub.s32 %v1556, %v1558
    %v1560 = vrot.slane %v1552, %v1559
    %v1562 = vunpack.c.l.s4 1934713408
    %v1563 = vunpack.c.0.s8 %v1562
    %v1564 = vlaneseq
    %v1565 = vshrl.u32 %v1564, 7
    %v1566 = vsub.s32 %v1563, %v1565
    %v1567 = vrot.slane %v1553, %v1566
    %v1568 = vcombine.low %v1512, %v1544
    %v1569 = vcombine.high %v1512, %v1544
    %v1570 = vcombine.low %v1519, %v1551
    %v1571 = vcombine.high %v1519, %v1551
    %v1572 = vcombine.low %v1528, %v1560
    %v1573 = vcombine.high %v1528, %v1560
    %v1574 = vcombine.low %v1535, %v1567
    %v1575 = vcombine.high %v1535, %v1567
    %1577 = vrot.lane.b32.xlu0 %v1569, 32
    %v1578 = vpop.permute.xlu0 %1577
    %1581 = vrot.lane.b32.xlu0 %v1570, 64
    %v1582 = vpop.permute.xlu0 %1581
    %1585 = vrot.lane.b32.xlu0 %v1571, 96
    %v1586 = vpop.permute.xlu0 %1585
    %1589 = vrot.lane.b32.xlu0 %v1573, 32
    %v1590 = vpop.permute.xlu0 %1589
    %1593 = vrot.lane.b32.xlu0 %v1574, 64
    %v1594 = vpop.permute.xlu0 %1593
    %1597 = vrot.lane.b32.xlu0 %v1575, 96
    %v1598 = vpop.permute.xlu0 %1597
    %vm1600 = vcmask 261120
    %v1601 = vsel %vm1600, %v1568, %v1578
    %vm1602 = vcmask 523264
    %v1603 = vsel %vm1602, %v1601, %v1582
    %vm1604 = vcmask 785408
    %v1605 = vsel %vm1604, %v1603, %v1586
    %v1606 = vsel %vm1600, %v1572, %v1590
    %v1607 = vsel %vm1602, %v1606, %v1594
    %v1608 = vsel %vm1604, %v1607, %v1598
    %v1609 = vld [vmem:[#allocation8] sm:$0xff]
    %v1610 = vld [vmem:[#allocation8 + $0x8] sm:$0xff]
    %v1611 = vld [vmem:[#allocation8 + $0x10] sm:$0xff]
    %v1612 = vld [vmem:[#allocation8 + $0x18] sm:$0xff]
    %v1613 = vld [vmem:[#allocation8 + $0x20] sm:$0xff]
    %v1614 = vld [vmem:[#allocation8 + $0x28] sm:$0xff]
    %v1615 = vld [vmem:[#allocation8 + $0x30] sm:$0xff]
    %v1616 = vld [vmem:[#allocation8 + $0x38] sm:$0xff]
    %v1617 = vld [vmem:[#allocation8 + $0x40] sm:$0xff]
    %v1618 = vld [vmem:[#allocation8 + $0x48] sm:$0xff]
    %v1619 = vld [vmem:[#allocation8 + $0x50] sm:$0xff]
    %v1620 = vld [vmem:[#allocation8 + $0x58] sm:$0xff]
    %v1621 = vld [vmem:[#allocation8 + $0x60] sm:$0xff]
    %v1622 = vld [vmem:[#allocation8 + $0x68] sm:$0xff]
    %v1623 = vld [vmem:[#allocation8 + $0x70] sm:$0xff]
    %v1624 = vld [vmem:[#allocation8 + $0x78] sm:$0xff]
    %v1625 = vld [vmem:[#allocation8 + $0x80] sm:$0xff]
    %v1626 = vld [vmem:[#allocation8 + $0x88] sm:$0xff]
    %v1627 = vld [vmem:[#allocation8 + $0x90] sm:$0xff]
    %v1628 = vld [vmem:[#allocation8 + $0x98] sm:$0xff]
    %v1629 = vld [vmem:[#allocation8 + $0xa0] sm:$0xff]
    %v1630 = vld [vmem:[#allocation8 + $0xa8] sm:$0xff]
    %v1631 = vld [vmem:[#allocation8 + $0xb0] sm:$0xff]
    %v1632 = vld [vmem:[#allocation8 + $0xb8] sm:$0xff]
    %v1633 = vld [vmem:[#allocation8 + $0xc0] sm:$0xff]
    %v1634 = vld [vmem:[#allocation8 + $0xc8] sm:$0xff]
    %v1635 = vld [vmem:[#allocation8 + $0xd0] sm:$0xff]
    %v1636 = vld [vmem:[#allocation8 + $0xd8] sm:$0xff]
    %v1637 = vld [vmem:[#allocation8 + $0xe0] sm:$0xff]
    %v1638 = vld [vmem:[#allocation8 + $0xe8] sm:$0xff]
    %v1639 = vld [vmem:[#allocation8 + $0xf0] sm:$0xff]
    %v1640 = vld [vmem:[#allocation8 + $0xf8] sm:$0xff]
    %v1641 = vld [vmem:[#allocation8 + $0x100] sm:$0xff]
    %v1642 = vld [vmem:[#allocation8 + $0x108] sm:$0xff]
    %v1643 = vld [vmem:[#allocation8 + $0x110] sm:$0xff]
    %v1644 = vld [vmem:[#allocation8 + $0x118] sm:$0xff]
    %v1645 = vld [vmem:[#allocation8 + $0x120] sm:$0xff]
    %v1646 = vld [vmem:[#allocation8 + $0x128] sm:$0xff]
    %v1647 = vld [vmem:[#allocation8 + $0x130] sm:$0xff]
    %v1648 = vld [vmem:[#allocation8 + $0x138] sm:$0xff]
    %v1649 = vld [vmem:[#allocation8 + $0x140] sm:$0xff]
    %v1650 = vld [vmem:[#allocation8 + $0x148] sm:$0xff]
    %v1651 = vld [vmem:[#allocation8 + $0x150] sm:$0xff]
    %v1652 = vld [vmem:[#allocation8 + $0x158] sm:$0xff]
    %v1653 = vld [vmem:[#allocation8 + $0x160] sm:$0xff]
    %v1654 = vld [vmem:[#allocation8 + $0x168] sm:$0xff]
    %v1655 = vld [vmem:[#allocation8 + $0x170] sm:$0xff]
    %v1656 = vld [vmem:[#allocation8 + $0x178] sm:$0xff]
    %v1657 = vld [vmem:[#allocation8 + $0x180] sm:$0xff]
    %v1658 = vld [vmem:[#allocation8 + $0x188] sm:$0xff]
    %v1659 = vld [vmem:[#allocation8 + $0x190] sm:$0xff]
    %v1660 = vld [vmem:[#allocation8 + $0x198] sm:$0xff]
    %v1661 = vld [vmem:[#allocation8 + $0x1a0] sm:$0xff]
    %v1662 = vld [vmem:[#allocation8 + $0x1a8] sm:$0xff]
    %v1663 = vld [vmem:[#allocation8 + $0x1b0] sm:$0xff]
    %v1664 = vld [vmem:[#allocation8 + $0x1b8] sm:$0xff]
    %v1665 = vld [vmem:[#allocation8 + $0x1c0] sm:$0xff]
    %v1666 = vld [vmem:[#allocation8 + $0x1c8] sm:$0xff]
    %v1667 = vld [vmem:[#allocation8 + $0x1d0] sm:$0xff]
    %v1668 = vld [vmem:[#allocation8 + $0x1d8] sm:$0xff]
    %v1669 = vld [vmem:[#allocation8 + $0x1e0] sm:$0xff]
    %v1670 = vld [vmem:[#allocation8 + $0x1e8] sm:$0xff]
    %v1671 = vld [vmem:[#allocation8 + $0x1f0] sm:$0xff]
    %v1672 = vld [vmem:[#allocation8 + $0x1f8] sm:$0xff]
    %v1673 = vld [vmem:[%s4] sm:$0x3]
    %v1675 = vlaneseq
    %v1676 = vshrl.u32 %v1675, 7
    %v1677 = vsub.s32 0, %v1676
    %v1678 = vrot.slane %v1673, %v1677
    %v1679 = vlaneseq
    %v1680 = vshrl.u32 %v1679, 7
    %v1681 = vsub.s32 1, %v1680
    %v1682 = vrot.slane %v1673, %v1681
    %1685 = vmatprep.subr.mxu0 %v1610
    %1686 = vmatpush1.msra.mxu0 %v1609
    %1687 = vmatprep.subr.mxu0 %v1612
    %1688 = vmatpush1.msra.mxu0 %v1611
    %1689 = vmatprep.subr.mxu0 %v1614
    %1690 = vmatpush1.msra.mxu0 %v1613
    %1691 = vmatprep.subr.mxu0 %v1616
    %1692 = vmatpush1.msra.mxu0 %v1615
    %1693 = vmatprep.subr.mxu0 %v1618
    %1694 = vmatpush1.msra.mxu0 %v1617
    %1695 = vmatprep.subr.mxu0 %v1620
    %1696 = vmatpush1.msra.mxu0 %v1619
    %1697 = vmatprep.subr.mxu0 %v1622
    %1698 = vmatpush1.msra.mxu0 %v1621
    %1699 = vmatprep.subr.mxu0 %v1624
    %1700 = vmatpush1.msra.mxu0 %v1623
    %1701 = vmatprep.subr.mxu0 %v1626
    %1702 = vmatpush1.msra.mxu0 %v1625
    %1703 = vmatprep.subr.mxu0 %v1628
    %1704 = vmatpush1.msra.mxu0 %v1627
    %1705 = vmatprep.subr.mxu0 %v1630
    %1706 = vmatpush1.msra.mxu0 %v1629
    %1707 = vmatprep.subr.mxu0 %v1632
    %1708 = vmatpush1.msra.mxu0 %v1631
    %1709 = vmatprep.subr.mxu0 %v1634
    %1710 = vmatpush1.msra.mxu0 %v1633
    %1711 = vmatprep.subr.mxu0 %v1636
    %1712 = vmatpush1.msra.mxu0 %v1635
    %1713 = vmatprep.subr.mxu0 %v1638
    %1714 = vmatpush1.msra.mxu0 %v1637
    %1715 = vmatprep.subr.mxu0 %v1640
    %1716 = vmatpush1.msra.mxu0 %v1639
    %1717 = vmatprep.subr.mxu0 %v1642
    %1718 = vmatpush1.msra.mxu0 %v1641
    %1719 = vmatprep.subr.mxu0 %v1644
    %1720 = vmatpush1.msra.mxu0 %v1643
    %1721 = vmatprep.subr.mxu0 %v1646
    %1722 = vmatpush1.msra.mxu0 %v1645
    %1723 = vmatprep.subr.mxu0 %v1648
    %1724 = vmatpush1.msra.mxu0 %v1647
    %1725 = vmatprep.subr.mxu0 %v1650
    %1726 = vmatpush1.msra.mxu0 %v1649
    %1727 = vmatprep.subr.mxu0 %v1652
    %1728 = vmatpush1.msra.mxu0 %v1651
    %1729 = vmatprep.subr.mxu0 %v1654
    %1730 = vmatpush1.msra.mxu0 %v1653
    %1731 = vmatprep.subr.mxu0 %v1656
    %1732 = vmatpush1.msra.mxu0 %v1655
    %1733 = vmatprep.subr.mxu0 %v1658
    %1734 = vmatpush1.msra.mxu0 %v1657
    %1735 = vmatprep.subr.mxu0 %v1660
    %1736 = vmatpush1.msra.mxu0 %v1659
    %1737 = vmatprep.subr.mxu0 %v1662
    %1738 = vmatpush1.msra.mxu0 %v1661
    %1739 = vmatprep.subr.mxu0 %v1664
    %1740 = vmatpush1.msra.mxu0 %v1663
    %1741 = vmatprep.subr.mxu0 %v1666
    %1742 = vmatpush1.msra.mxu0 %v1665
    %1743 = vmatprep.subr.mxu0 %v1668
    %1744 = vmatpush1.msra.mxu0 %v1667
    %1745 = vmatprep.subr.mxu0 %v1670
    %1746 = vmatpush1.msra.mxu0 %v1669
    %1747 = vmatprep.subr.mxu0 %v1672
    %1748 = vmatpush1.msra.mxu0 %v1671
    %1749 = vmatprep.mubr.f32.mxu0 %v1608
    %1750 = vmatmul.mubr.f32.gmra.mrb[0].mxu0 %v1605
    %v1751 = vpop.f32.mrb[0].mxu0
    %v1752 = vadd.f32 %v1678, %v1751
    %v1753 = vpop.f32.mrb[0].mxu0
    %v1754 = vadd.f32 %v1682, %v1753
    %1755 = vdwg.mxu0
    %v1757 = vlaneseq
    %v1758 = vshrl.u32 %v1757, 7
    %v1759 = vsub.s32 0, %v1758
    %v1760 = vrot.slane %v507, %v1759
    %v1761 = vlaneseq
    %v1762 = vshrl.u32 %v1761, 7
    %v1763 = vsub.s32 1, %v1762
    %v1764 = vrot.slane %v507, %v1763
    %v1765 = vlaneseq
    %v1766 = vshrl.u32 %v1765, 7
    %v1767 = vsub.s32 2, %v1766
    %v1768 = vrot.slane %v507, %v1767
    %v1769 = vlaneseq
    %v1770 = vshrl.u32 %v1769, 7
    %v1771 = vsub.s32 3, %v1770
    %v1772 = vrot.slane %v507, %v1771
    %v1773 = vlaneseq
    %v1774 = vshrl.u32 %v1773, 7
    %v1775 = vsub.s32 4, %v1774
    %v1776 = vrot.slane %v507, %v1775
    %v1777 = vlaneseq
    %v1778 = vshrl.u32 %v1777, 7
    %v1779 = vsub.s32 5, %v1778
    %v1780 = vrot.slane %v507, %v1779
    %1787 = vmatprep.subr.mxu0 %v124
    %1788 = vmatpush1.msra.mxu0 %v123
    %1789 = vmatprep.subr.mxu0 %v130
    %1790 = vmatpush1.msra.mxu0 %v129
    %1791 = vmatprep.subr.mxu0 %v136
    %1792 = vmatpush1.msra.mxu0 %v135
    %1793 = vmatprep.subr.mxu0 %v142
    %1794 = vmatpush1.msra.mxu0 %v141
    %1795 = vmatprep.subr.mxu0 %v148
    %1796 = vmatpush1.msra.mxu0 %v147
    %1797 = vmatprep.subr.mxu0 %v154
    %1798 = vmatpush1.msra.mxu0 %v153
    %1799 = vmatprep.subr.mxu0 %v160
    %1800 = vmatpush1.msra.mxu0 %v159
    %1801 = vmatprep.subr.mxu0 %v166
    %1802 = vmatpush1.msra.mxu0 %v165
    %1803 = vmatprep.subr.mxu0 %v172
    %1804 = vmatpush1.msra.mxu0 %v171
    %1805 = vmatprep.subr.mxu0 %v178
    %1806 = vmatpush1.msra.mxu0 %v177
    %1807 = vmatprep.subr.mxu0 %v184
    %1808 = vmatpush1.msra.mxu0 %v183
    %1809 = vmatprep.subr.mxu0 %v190
    %1810 = vmatpush1.msra.mxu0 %v189
    %1811 = vmatprep.subr.mxu0 %v196
    %1812 = vmatpush1.msra.mxu0 %v195
    %1813 = vmatprep.subr.mxu0 %v202
    %1814 = vmatpush1.msra.mxu0 %v201
    %1815 = vmatprep.subr.mxu0 %v208
    %1816 = vmatpush1.msra.mxu0 %v207
    %1817 = vmatprep.subr.mxu0 %v214
    %1818 = vmatpush1.msra.mxu0 %v213
    %1819 = vmatprep.subr.mxu0 %v220
    %1820 = vmatpush1.msra.mxu0 %v219
    %1821 = vmatprep.subr.mxu0 %v226
    %1822 = vmatpush1.msra.mxu0 %v225
    %1823 = vmatprep.subr.mxu0 %v232
    %1824 = vmatpush1.msra.mxu0 %v231
    %1825 = vmatprep.subr.mxu0 %v238
    %1826 = vmatpush1.msra.mxu0 %v237
    %1827 = vmatprep.subr.mxu0 %v244
    %1828 = vmatpush1.msra.mxu0 %v243
    %1829 = vmatprep.subr.mxu0 %v250
    %1830 = vmatpush1.msra.mxu0 %v249
    %1831 = vmatprep.subr.mxu0 %v256
    %1832 = vmatpush1.msra.mxu0 %v255
    %1833 = vmatprep.subr.mxu0 %v262
    %1834 = vmatpush1.msra.mxu0 %v261
    %1835 = vmatprep.subr.mxu0 %v268
    %1836 = vmatpush1.msra.mxu0 %v267
    %1837 = vmatprep.subr.mxu0 %v274
    %1838 = vmatpush1.msra.mxu0 %v273
    %1839 = vmatprep.subr.mxu0 %v280
    %1840 = vmatpush1.msra.mxu0 %v279
    %1841 = vmatprep.subr.mxu0 %v286
    %1842 = vmatpush1.msra.mxu0 %v285
    %1843 = vmatprep.subr.mxu0 %v292
    %1844 = vmatpush1.msra.mxu0 %v291
    %1845 = vmatprep.subr.mxu0 %v298
    %1846 = vmatpush1.msra.mxu0 %v297
    %1847 = vmatprep.subr.mxu0 %v304
    %1848 = vmatpush1.msra.mxu0 %v303
    %1849 = vmatprep.subr.mxu0 %v310
    %1850 = vmatpush1.msra.mxu0 %v309
    %1851 = vmatprep.mubr.f32.mxu0 %v1754
    %1852 = vmatmul.mubr.f32.gmra.mrb[0].mxu0 %v1752
    %v1853 = vpop.f32.mrb[0].mxu0
    %v1854 = vadd.f32 %v1760, %v1853
    %v1855 = vpop.f32.mrb[0].mxu0
    %v1856 = vadd.f32 %v1764, %v1855
    %1857 = vdwg.mxu0
    %1858 = vmatprep.subr.mxu0 %v126
    %1859 = vmatpush1.msra.mxu0 %v125
    %1860 = vmatprep.subr.mxu0 %v132
    %1861 = vmatpush1.msra.mxu0 %v131
    %1862 = vmatprep.subr.mxu0 %v138
    %1863 = vmatpush1.msra.mxu0 %v137
    %1864 = vmatprep.subr.mxu0 %v144
    %1865 = vmatpush1.msra.mxu0 %v143
    %1866 = vmatprep.subr.mxu0 %v150
    %1867 = vmatpush1.msra.mxu0 %v149
    %1868 = vmatprep.subr.mxu0 %v156
    %1869 = vmatpush1.msra.mxu0 %v155
    %1870 = vmatprep.subr.mxu0 %v162
    %1871 = vmatpush1.msra.mxu0 %v161
    %1872 = vmatprep.subr.mxu0 %v168
    %1873 = vmatpush1.msra.mxu0 %v167
    %1874 = vmatprep.subr.mxu0 %v174
    %1875 = vmatpush1.msra.mxu0 %v173
    %1876 = vmatprep.subr.mxu0 %v180
    %1877 = vmatpush1.msra.mxu0 %v179
    %1878 = vmatprep.subr.mxu0 %v186
    %1879 = vmatpush1.msra.mxu0 %v185
    %1880 = vmatprep.subr.mxu0 %v192
    %1881 = vmatpush1.msra.mxu0 %v191
    %1882 = vmatprep.subr.mxu0 %v198
    %1883 = vmatpush1.msra.mxu0 %v197
    %1884 = vmatprep.subr.mxu0 %v204
    %1885 = vmatpush1.msra.mxu0 %v203
    %1886 = vmatprep.subr.mxu0 %v210
    %1887 = vmatpush1.msra.mxu0 %v209
    %1888 = vmatprep.subr.mxu0 %v216
    %1889 = vmatpush1.msra.mxu0 %v215
    %1890 = vmatprep.subr.mxu0 %v222
    %1891 = vmatpush1.msra.mxu0 %v221
    %1892 = vmatprep.subr.mxu0 %v228
    %1893 = vmatpush1.msra.mxu0 %v227
    %1894 = vmatprep.subr.mxu0 %v234
    %1895 = vmatpush1.msra.mxu0 %v233
    %1896 = vmatprep.subr.mxu0 %v240
    %1897 = vmatpush1.msra.mxu0 %v239
    %1898 = vmatprep.subr.mxu0 %v246
    %1899 = vmatpush1.msra.mxu0 %v245
    %1900 = vmatprep.subr.mxu0 %v252
    %1901 = vmatpush1.msra.mxu0 %v251
    %1902 = vmatprep.subr.mxu0 %v258
    %1903 = vmatpush1.msra.mxu0 %v257
    %1904 = vmatprep.subr.mxu0 %v264
    %1905 = vmatpush1.msra.mxu0 %v263
    %1906 = vmatprep.subr.mxu0 %v270
    %1907 = vmatpush1.msra.mxu0 %v269
    %1908 = vmatprep.subr.mxu0 %v276
    %1909 = vmatpush1.msra.mxu0 %v275
    %1910 = vmatprep.subr.mxu0 %v282
    %1911 = vmatpush1.msra.mxu0 %v281
    %1912 = vmatprep.subr.mxu0 %v288
    %1913 = vmatpush1.msra.mxu0 %v287
    %1914 = vmatprep.subr.mxu0 %v294
    %1915 = vmatpush1.msra.mxu0 %v293
    %1916 = vmatprep.subr.mxu0 %v300
    %1917 = vmatpush1.msra.mxu0 %v299
    %1918 = vmatprep.subr.mxu0 %v306
    %1919 = vmatpush1.msra.mxu0 %v305
    %1920 = vmatprep.subr.mxu0 %v312
    %1921 = vmatpush1.msra.mxu0 %v311
    %1922 = vmatprep.mubr.f32.mxu0 %v1754
    %1923 = vmatmul.mubr.f32.gmra.mrb[0].mxu0 %v1752
    %v1924 = vpop.f32.mrb[0].mxu0
    %v1925 = vadd.f32 %v1768, %v1924
    %v1926 = vpop.f32.mrb[0].mxu0
    %v1927 = vadd.f32 %v1772, %v1926
    %1928 = vdwg.mxu0
    %1929 = vmatprep.subr.mxu0 %v128
    %1930 = vmatpush1.msra.mxu0 %v127
    %1931 = vmatprep.subr.mxu0 %v134
    %1932 = vmatpush1.msra.mxu0 %v133
    %1933 = vmatprep.subr.mxu0 %v140
    %1934 = vmatpush1.msra.mxu0 %v139
    %1935 = vmatprep.subr.mxu0 %v146
    %1936 = vmatpush1.msra.mxu0 %v145
    %1937 = vmatprep.subr.mxu0 %v152
    %1938 = vmatpush1.msra.mxu0 %v151
    %1939 = vmatprep.subr.mxu0 %v158
    %1940 = vmatpush1.msra.mxu0 %v157
    %1941 = vmatprep.subr.mxu0 %v164
    %1942 = vmatpush1.msra.mxu0 %v163
    %1943 = vmatprep.subr.mxu0 %v170
    %1944 = vmatpush1.msra.mxu0 %v169
    %1945 = vmatprep.subr.mxu0 %v176
    %1946 = vmatpush1.msra.mxu0 %v175
    %1947 = vmatprep.subr.mxu0 %v182
    %1948 = vmatpush1.msra.mxu0 %v181
    %1949 = vmatprep.subr.mxu0 %v188
    %1950 = vmatpush1.msra.mxu0 %v187
    %1951 = vmatprep.subr.mxu0 %v194
    %1952 = vmatpush1.msra.mxu0 %v193
    %1953 = vmatprep.subr.mxu0 %v200
    %1954 = vmatpush1.msra.mxu0 %v199
    %1955 = vmatprep.subr.mxu0 %v206
    %1956 = vmatpush1.msra.mxu0 %v205
    %1957 = vmatprep.subr.mxu0 %v212
    %1958 = vmatpush1.msra.mxu0 %v211
    %1959 = vmatprep.subr.mxu0 %v218
    %1960 = vmatpush1.msra.mxu0 %v217
    %1961 = vmatprep.subr.mxu0 %v224
    %1962 = vmatpush1.msra.mxu0 %v223
    %1963 = vmatprep.subr.mxu0 %v230
    %1964 = vmatpush1.msra.mxu0 %v229
    %1965 = vmatprep.subr.mxu0 %v236
    %1966 = vmatpush1.msra.mxu0 %v235
    %1967 = vmatprep.subr.mxu0 %v242
    %1968 = vmatpush1.msra.mxu0 %v241
    %1969 = vmatprep.subr.mxu0 %v248
    %1970 = vmatpush1.msra.mxu0 %v247
    %1971 = vmatprep.subr.mxu0 %v254
    %1972 = vmatpush1.msra.mxu0 %v253
    %1973 = vmatprep.subr.mxu0 %v260
    %1974 = vmatpush1.msra.mxu0 %v259
    %1975 = vmatprep.subr.mxu0 %v266
    %1976 = vmatpush1.msra.mxu0 %v265
    %1977 = vmatprep.subr.mxu0 %v272
    %1978 = vmatpush1.msra.mxu0 %v271
    %1979 = vmatprep.subr.mxu0 %v278
    %1980 = vmatpush1.msra.mxu0 %v277
    %1981 = vmatprep.subr.mxu0 %v284
    %1982 = vmatpush1.msra.mxu0 %v283
    %1983 = vmatprep.subr.mxu0 %v290
    %1984 = vmatpush1.msra.mxu0 %v289
    %1985 = vmatprep.subr.mxu0 %v296
    %1986 = vmatpush1.msra.mxu0 %v295
    %1987 = vmatprep.subr.mxu0 %v302
    %1988 = vmatpush1.msra.mxu0 %v301
    %1989 = vmatprep.subr.mxu0 %v308
    %1990 = vmatpush1.msra.mxu0 %v307
    %1991 = vmatprep.subr.mxu0 %v314
    %1992 = vmatpush1.msra.mxu0 %v313
    %1993 = vmatprep.mubr.f32.mxu0 %v1754
    %1994 = vmatmul.mubr.f32.gmra.mrb[0].mxu0 %v1752
    %v1995 = vpop.f32.mrb[0].mxu0
    %v1996 = vadd.f32 %v1776, %v1995
    %v1997 = vpop.f32.mrb[0].mxu0
    %v1998 = vadd.f32 %v1780, %v1997
    %1999 = vdwg.mxu0
    %v2001 = vlaneseq
    %v2002 = vshrl.u32 %v2001, 7
    %v2003 = vsub.s32 0, %v2002
    %v2004 = vrot.slane %v508, %v2003
    %v2005 = vlaneseq
    %v2006 = vshrl.u32 %v2005, 7
    %v2007 = vsub.s32 1, %v2006
    %v2008 = vrot.slane %v508, %v2007
    %v2009 = vlaneseq
    %v2010 = vshrl.u32 %v2009, 7
    %v2011 = vsub.s32 2, %v2010
    %v2012 = vrot.slane %v508, %v2011
    %v2013 = vlaneseq
    %v2014 = vshrl.u32 %v2013, 7
    %v2015 = vsub.s32 3, %v2014
    %v2016 = vrot.slane %v508, %v2015
    %v2017 = vlaneseq
    %v2018 = vshrl.u32 %v2017, 7
    %v2019 = vsub.s32 4, %v2018
    %v2020 = vrot.slane %v508, %v2019
    %v2021 = vlaneseq
    %v2022 = vshrl.u32 %v2021, 7
    %v2023 = vsub.s32 5, %v2022
    %v2024 = vrot.slane %v508, %v2023
    %2031 = vmatprep.subr.mxu0 %v316
    %2032 = vmatpush1.msra.mxu0 %v315
    %2033 = vmatprep.subr.mxu0 %v322
    %2034 = vmatpush1.msra.mxu0 %v321
    %2035 = vmatprep.subr.mxu0 %v328
    %2036 = vmatpush1.msra.mxu0 %v327
    %2037 = vmatprep.subr.mxu0 %v334
    %2038 = vmatpush1.msra.mxu0 %v333
    %2039 = vmatprep.subr.mxu0 %v340
    %2040 = vmatpush1.msra.mxu0 %v339
    %2041 = vmatprep.subr.mxu0 %v346
    %2042 = vmatpush1.msra.mxu0 %v345
    %2043 = vmatprep.subr.mxu0 %v352
    %2044 = vmatpush1.msra.mxu0 %v351
    %2045 = vmatprep.subr.mxu0 %v358
    %2046 = vmatpush1.msra.mxu0 %v357
    %2047 = vmatprep.subr.mxu0 %v364
    %2048 = vmatpush1.msra.mxu0 %v363
    %2049 = vmatprep.subr.mxu0 %v370
    %2050 = vmatpush1.msra.mxu0 %v369
    %2051 = vmatprep.subr.mxu0 %v376
    %2052 = vmatpush1.msra.mxu0 %v375
    %2053 = vmatprep.subr.mxu0 %v382
    %2054 = vmatpush1.msra.mxu0 %v381
    %2055 = vmatprep.subr.mxu0 %v388
    %2056 = vmatpush1.msra.mxu0 %v387
    %2057 = vmatprep.subr.mxu0 %v394
    %2058 = vmatpush1.msra.mxu0 %v393
    %2059 = vmatprep.subr.mxu0 %v400
    %2060 = vmatpush1.msra.mxu0 %v399
    %2061 = vmatprep.subr.mxu0 %v406
    %2062 = vmatpush1.msra.mxu0 %v405
    %2063 = vmatprep.subr.mxu0 %v412
    %2064 = vmatpush1.msra.mxu0 %v411
    %2065 = vmatprep.subr.mxu0 %v418
    %2066 = vmatpush1.msra.mxu0 %v417
    %2067 = vmatprep.subr.mxu0 %v424
    %2068 = vmatpush1.msra.mxu0 %v423
    %2069 = vmatprep.subr.mxu0 %v430
    %2070 = vmatpush1.msra.mxu0 %v429
    %2071 = vmatprep.subr.mxu0 %v436
    %2072 = vmatpush1.msra.mxu0 %v435
    %2073 = vmatprep.subr.mxu0 %v442
    %2074 = vmatpush1.msra.mxu0 %v441
    %2075 = vmatprep.subr.mxu0 %v448
    %2076 = vmatpush1.msra.mxu0 %v447
    %2077 = vmatprep.subr.mxu0 %v454
    %2078 = vmatpush1.msra.mxu0 %v453
    %2079 = vmatprep.subr.mxu0 %v460
    %2080 = vmatpush1.msra.mxu0 %v459
    %2081 = vmatprep.subr.mxu0 %v466
    %2082 = vmatpush1.msra.mxu0 %v465
    %2083 = vmatprep.subr.mxu0 %v472
    %2084 = vmatpush1.msra.mxu0 %v471
    %2085 = vmatprep.subr.mxu0 %v478
    %2086 = vmatpush1.msra.mxu0 %v477
    %2087 = vmatprep.subr.mxu0 %v484
    %2088 = vmatpush1.msra.mxu0 %v483
    %2089 = vmatprep.subr.mxu0 %v490
    %2090 = vmatpush1.msra.mxu0 %v489
    %2091 = vmatprep.subr.mxu0 %v496
    %2092 = vmatpush1.msra.mxu0 %v495
    %2093 = vmatprep.subr.mxu0 %v502
    %2094 = vmatpush1.msra.mxu0 %v501
    %2095 = vmatprep.mubr.f32.mxu0 %v122
    %2096 = vmatmul.mubr.f32.gmra.mrb[0].mxu0 %v121
    %v2097 = vpop.f32.mrb[0].mxu0
    %v2098 = vadd.f32 %v2004, %v2097
    %v2099 = vpop.f32.mrb[0].mxu0
    %v2100 = vadd.f32 %v2008, %v2099
    %2101 = vdwg.mxu0
    %2102 = vmatprep.subr.mxu0 %v318
    %2103 = vmatpush1.msra.mxu0 %v317
    %2104 = vmatprep.subr.mxu0 %v324
    %2105 = vmatpush1.msra.mxu0 %v323
    %2106 = vmatprep.subr.mxu0 %v330
    %2107 = vmatpush1.msra.mxu0 %v329
    %2108 = vmatprep.subr.mxu0 %v336
    %2109 = vmatpush1.msra.mxu0 %v335
    %2110 = vmatprep.subr.mxu0 %v342
    %2111 = vmatpush1.msra.mxu0 %v341
    %2112 = vmatprep.subr.mxu0 %v348
    %2113 = vmatpush1.msra.mxu0 %v347
    %2114 = vmatprep.subr.mxu0 %v354
    %2115 = vmatpush1.msra.mxu0 %v353
    %2116 = vmatprep.subr.mxu0 %v360
    %2117 = vmatpush1.msra.mxu0 %v359
    %2118 = vmatprep.subr.mxu0 %v366
    %2119 = vmatpush1.msra.mxu0 %v365
    %2120 = vmatprep.subr.mxu0 %v372
    %2121 = vmatpush1.msra.mxu0 %v371
    %2122 = vmatprep.subr.mxu0 %v378
    %2123 = vmatpush1.msra.mxu0 %v377
    %2124 = vmatprep.subr.mxu0 %v384
    %2125 = vmatpush1.msra.mxu0 %v383
    %2126 = vmatprep.subr.mxu0 %v390
    %2127 = vmatpush1.msra.mxu0 %v389
    %2128 = vmatprep.subr.mxu0 %v396
    %2129 = vmatpush1.msra.mxu0 %v395
    %2130 = vmatprep.subr.mxu0 %v402
    %2131 = vmatpush1.msra.mxu0 %v401
    %2132 = vmatprep.subr.mxu0 %v408
    %2133 = vmatpush1.msra.mxu0 %v407
    %2134 = vmatprep.subr.mxu0 %v414
    %2135 = vmatpush1.msra.mxu0 %v413
    %2136 = vmatprep.subr.mxu0 %v420
    %2137 = vmatpush1.msra.mxu0 %v419
    %2138 = vmatprep.subr.mxu0 %v426
    %2139 = vmatpush1.msra.mxu0 %v425
    %2140 = vmatprep.subr.mxu0 %v432
    %2141 = vmatpush1.msra.mxu0 %v431
    %2142 = vmatprep.subr.mxu0 %v438
    %2143 = vmatpush1.msra.mxu0 %v437
    %2144 = vmatprep.subr.mxu0 %v444
    %2145 = vmatpush1.msra.mxu0 %v443
    %2146 = vmatprep.subr.mxu0 %v450
    %2147 = vmatpush1.msra.mxu0 %v449
    %2148 = vmatprep.subr.mxu0 %v456
    %2149 = vmatpush1.msra.mxu0 %v455
    %2150 = vmatprep.subr.mxu0 %v462
    %2151 = vmatpush1.msra.mxu0 %v461
    %2152 = vmatprep.subr.mxu0 %v468
    %2153 = vmatpush1.msra.mxu0 %v467
    %2154 = vmatprep.subr.mxu0 %v474
    %2155 = vmatpush1.msra.mxu0 %v473
    %2156 = vmatprep.subr.mxu0 %v480
    %2157 = vmatpush1.msra.mxu0 %v479
    %2158 = vmatprep.subr.mxu0 %v486
    %2159 = vmatpush1.msra.mxu0 %v485
    %2160 = vmatprep.subr.mxu0 %v492
    %2161 = vmatpush1.msra.mxu0 %v491
    %2162 = vmatprep.subr.mxu0 %v498
    %2163 = vmatpush1.msra.mxu0 %v497
    %2164 = vmatprep.subr.mxu0 %v504
    %2165 = vmatpush1.msra.mxu0 %v503
    %2166 = vmatprep.mubr.f32.mxu0 %v122
    %2167 = vmatmul.mubr.f32.gmra.mrb[0].mxu0 %v121
    %v2168 = vpop.f32.mrb[0].mxu0
    %v2169 = vadd.f32 %v2012, %v2168
    %v2170 = vpop.f32.mrb[0].mxu0
    %v2171 = vadd.f32 %v2016, %v2170
    %2172 = vdwg.mxu0
    %2173 = vmatprep.subr.mxu0 %v320
    %2174 = vmatpush1.msra.mxu0 %v319
    %2175 = vmatprep.subr.mxu0 %v326
    %2176 = vmatpush1.msra.mxu0 %v325
    %2177 = vmatprep.subr.mxu0 %v332
    %2178 = vmatpush1.msra.mxu0 %v331
    %2179 = vmatprep.subr.mxu0 %v338
    %2180 = vmatpush1.msra.mxu0 %v337
    %2181 = vmatprep.subr.mxu0 %v344
    %2182 = vmatpush1.msra.mxu0 %v343
    %2183 = vmatprep.subr.mxu0 %v350
    %2184 = vmatpush1.msra.mxu0 %v349
    %2185 = vmatprep.subr.mxu0 %v356
    %2186 = vmatpush1.msra.mxu0 %v355
    %2187 = vmatprep.subr.mxu0 %v362
    %2188 = vmatpush1.msra.mxu0 %v361
    %2189 = vmatprep.subr.mxu0 %v368
    %2190 = vmatpush1.msra.mxu0 %v367
    %2191 = vmatprep.subr.mxu0 %v374
    %2192 = vmatpush1.msra.mxu0 %v373
    %2193 = vmatprep.subr.mxu0 %v380
    %2194 = vmatpush1.msra.mxu0 %v379
    %2195 = vmatprep.subr.mxu0 %v386
    %2196 = vmatpush1.msra.mxu0 %v385
    %2197 = vmatprep.subr.mxu0 %v392
    %2198 = vmatpush1.msra.mxu0 %v391
    %2199 = vmatprep.subr.mxu0 %v398
    %2200 = vmatpush1.msra.mxu0 %v397
    %2201 = vmatprep.subr.mxu0 %v404
    %2202 = vmatpush1.msra.mxu0 %v403
    %2203 = vmatprep.subr.mxu0 %v410
    %2204 = vmatpush1.msra.mxu0 %v409
    %2205 = vmatprep.subr.mxu0 %v416
    %2206 = vmatpush1.msra.mxu0 %v415
    %2207 = vmatprep.subr.mxu0 %v422
    %2208 = vmatpush1.msra.mxu0 %v421
    %2209 = vmatprep.subr.mxu0 %v428
    %2210 = vmatpush1.msra.mxu0 %v427
    %2211 = vmatprep.subr.mxu0 %v434
    %2212 = vmatpush1.msra.mxu0 %v433
    %2213 = vmatprep.subr.mxu0 %v440
    %2214 = vmatpush1.msra.mxu0 %v439
    %2215 = vmatprep.subr.mxu0 %v446
    %2216 = vmatpush1.msra.mxu0 %v445
    %2217 = vmatprep.subr.mxu0 %v452
    %2218 = vmatpush1.msra.mxu0 %v451
    %2219 = vmatprep.subr.mxu0 %v458
    %2220 = vmatpush1.msra.mxu0 %v457
    %2221 = vmatprep.subr.mxu0 %v464
    %2222 = vmatpush1.msra.mxu0 %v463
    %2223 = vmatprep.subr.mxu0 %v470
    %2224 = vmatpush1.msra.mxu0 %v469
    %2225 = vmatprep.subr.mxu0 %v476
    %2226 = vmatpush1.msra.mxu0 %v475
    %2227 = vmatprep.subr.mxu0 %v482
    %2228 = vmatpush1.msra.mxu0 %v481
    %2229 = vmatprep.subr.mxu0 %v488
    %2230 = vmatpush1.msra.mxu0 %v487
    %2231 = vmatprep.subr.mxu0 %v494
    %2232 = vmatpush1.msra.mxu0 %v493
    %2233 = vmatprep.subr.mxu0 %v500
    %2234 = vmatpush1.msra.mxu0 %v499
    %2235 = vmatprep.subr.mxu0 %v506
    %2236 = vmatpush1.msra.mxu0 %v505
    %2237 = vmatprep.mubr.f32.mxu0 %v122
    %2238 = vmatmul.mubr.f32.gmra.mrb[0].mxu0 %v121
    %v2239 = vpop.f32.mrb[0].mxu0
    %v2240 = vadd.f32 %v2020, %v2239
    %v2241 = vpop.f32.mrb[0].mxu0
    %v2242 = vadd.f32 %v2024, %v2241
    %2243 = vdwg.mxu0
    %v2244 = vadd.f32 %v1854, %v2098
    %v2245 = vadd.f32 %v1856, %v2100
    %v2246 = vxor.u32 %v2244, 2147483648
    %v2247 = vxor.u32 %v2245, 2147483648
    %v2248 = vmul.f32 %v2246, 1.442695
    %v2249 = vpow.pop %v2248
    %v2250 = vmul.f32 %v2247, 1.442695
    %v2251 = vpow.pop %v2250
    %v2252 = vadd.f32 %v2249, 1.0
    %v2253 = vadd.f32 %v2251, 1.0
    %v2254 = vrcp.pop %v2252
    %v2255 = vmul.f32 1.0, %v2254
    %v2256 = vrcp.pop %v2253
    %v2257 = vmul.f32 1.0, %v2256
    %v2258 = vadd.f32 %v1925, %v2169
    %v2259 = vadd.f32 %v1927, %v2171
    %v2260 = vxor.u32 %v2258, 2147483648
    %v2261 = vxor.u32 %v2259, 2147483648
    %v2262 = vmul.f32 %v2260, 1.442695
    %v2263 = vpow.pop %v2262
    %v2264 = vmul.f32 %v2261, 1.442695
    %v2265 = vpow.pop %v2264
    %v2266 = vadd.f32 %v2263, 1.0
    %v2267 = vadd.f32 %v2265, 1.0
    %v2268 = vrcp.pop %v2266
    %v2269 = vmul.f32 1.0, %v2268
    %v2270 = vrcp.pop %v2267
    %v2271 = vmul.f32 1.0, %v2270
    %v2272 = vmul.f32 %v2255, %v2240
    %v2273 = vmul.f32 %v2257, %v2242
    %v2274 = vadd.f32 %v1996, %v2272
    %v2275 = vadd.f32 %v1998, %v2273
    %v2276 = vtanh.pop %v2274
    %v2277 = vtanh.pop %v2275
    %v2278 = vsub.f32 1.0, %v2269
    %v2279 = vsub.f32 1.0, %v2271
    %v2280 = vmul.f32 %v2278, %v2276
    %v2281 = vmul.f32 %v2279, %v2277
    %v2282 = vmul.f32 %v2269, %v121
    %v2283 = vmul.f32 %v2271, %v122
    %v2284 = vadd.f32 %v2280, %v2282
    %v2285 = vadd.f32 %v2281, %v2283
    %v2286 = vadd.f32 %v2284, %v121
    %v2287 = vadd.f32 %v2285, %v122
    %s2288 = scalar_lea.vmem [#allocation7], 512
    %v2289 = vld [vmem:[%s2288] sm:$0xff]
    %v2290 = vld [vmem:[%s2288 + $0x8] sm:$0xff]
    %v2291 = vld [vmem:[%s2288 + $0x10] sm:$0xff]
    %v2292 = vld [vmem:[%s2288 + $0x18] sm:$0xff]
    %v2293 = vld [vmem:[%s2288 + $0x20] sm:$0xff]
    %v2294 = vld [vmem:[%s2288 + $0x28] sm:$0xff]
    %v2295 = vld [vmem:[%s2288 + $0x30] sm:$0xff]
    %v2296 = vld [vmem:[%s2288 + $0x38] sm:$0xff]
    %v2297 = vld [vmem:[%s2288 + $0x40] sm:$0xff]
    %v2298 = vld [vmem:[%s2288 + $0x48] sm:$0xff]
    %v2299 = vld [vmem:[%s2288 + $0x50] sm:$0xff]
    %v2300 = vld [vmem:[%s2288 + $0x58] sm:$0xff]
    %v2301 = vld [vmem:[%s2288 + $0x60] sm:$0xff]
    %v2302 = vld [vmem:[%s2288 + $0x68] sm:$0xff]
    %v2303 = vld [vmem:[%s2288 + $0x70] sm:$0xff]
    %v2304 = vld [vmem:[%s2288 + $0x78] sm:$0xff]
    %v2305 = vld [vmem:[%s2288 + $0x80] sm:$0xff]
    %v2306 = vld [vmem:[%s2288 + $0x88] sm:$0xff]
    %v2307 = vld [vmem:[%s2288 + $0x90] sm:$0xff]
    %v2308 = vld [vmem:[%s2288 + $0x98] sm:$0xff]
    %v2309 = vld [vmem:[%s2288 + $0xa0] sm:$0xff]
    %v2310 = vld [vmem:[%s2288 + $0xa8] sm:$0xff]
    %v2311 = vld [vmem:[%s2288 + $0xb0] sm:$0xff]
    %v2312 = vld [vmem:[%s2288 + $0xb8] sm:$0xff]
    %v2313 = vld [vmem:[%s2288 + $0xc0] sm:$0xff]
    %v2314 = vld [vmem:[%s2288 + $0xc8] sm:$0xff]
    %v2315 = vld [vmem:[%s2288 + $0xd0] sm:$0xff]
    %v2316 = vld [vmem:[%s2288 + $0xd8] sm:$0xff]
    %v2317 = vld [vmem:[%s2288 + $0xe0] sm:$0xff]
    %v2318 = vld [vmem:[%s2288 + $0xe8] sm:$0xff]
    %v2319 = vld [vmem:[%s2288 + $0xf0] sm:$0xff]
    %v2320 = vld [vmem:[%s2288 + $0xf8] sm:$0xff]
    %v2321 = vld [vmem:[%s2288 + $0x100] sm:$0xff]
    %v2322 = vld [vmem:[%s2288 + $0x108] sm:$0xff]
    %v2323 = vld [vmem:[%s2288 + $0x110] sm:$0xff]
    %v2324 = vld [vmem:[%s2288 + $0x118] sm:$0xff]
    %v2325 = vld [vmem:[%s2288 + $0x120] sm:$0xff]
    %v2326 = vld [vmem:[%s2288 + $0x128] sm:$0xff]
    %v2327 = vld [vmem:[%s2288 + $0x130] sm:$0xff]
    %v2328 = vld [vmem:[%s2288 + $0x138] sm:$0xff]
    %v2329 = vld [vmem:[%s2288 + $0x140] sm:$0xff]
    %v2330 = vld [vmem:[%s2288 + $0x148] sm:$0xff]
    %v2331 = vld [vmem:[%s2288 + $0x150] sm:$0xff]
    %v2332 = vld [vmem:[%s2288 + $0x158] sm:$0xff]
    %v2333 = vld [vmem:[%s2288 + $0x160] sm:$0xff]
    %v2334 = vld [vmem:[%s2288 + $0x168] sm:$0xff]
    %v2335 = vld [vmem:[%s2288 + $0x170] sm:$0xff]
    %v2336 = vld [vmem:[%s2288 + $0x178] sm:$0xff]
    %v2337 = vld [vmem:[%s2288 + $0x180] sm:$0xff]
    %v2338 = vld [vmem:[%s2288 + $0x188] sm:$0xff]
    %v2339 = vld [vmem:[%s2288 + $0x190] sm:$0xff]
    %v2340 = vld [vmem:[%s2288 + $0x198] sm:$0xff]
    %v2341 = vld [vmem:[%s2288 + $0x1a0] sm:$0xff]
    %v2342 = vld [vmem:[%s2288 + $0x1a8] sm:$0xff]
    %v2343 = vld [vmem:[%s2288 + $0x1b0] sm:$0xff]
    %v2344 = vld [vmem:[%s2288 + $0x1b8] sm:$0xff]
    %v2345 = vld [vmem:[%s2288 + $0x1c0] sm:$0xff]
    %v2346 = vld [vmem:[%s2288 + $0x1c8] sm:$0xff]
    %v2347 = vld [vmem:[%s2288 + $0x1d0] sm:$0xff]
    %v2348 = vld [vmem:[%s2288 + $0x1d8] sm:$0xff]
    %v2349 = vld [vmem:[%s2288 + $0x1e0] sm:$0xff]
    %v2350 = vld [vmem:[%s2288 + $0x1e8] sm:$0xff]
    %v2351 = vld [vmem:[%s2288 + $0x1f0] sm:$0xff]
    %v2352 = vld [vmem:[%s2288 + $0x1f8] sm:$0xff]
    %2353 = vmatprep.subr.mxu0 %v2290
    %2354 = vmatpush1.msra.mxu0 %v2289
    %2355 = vmatprep.subr.mxu0 %v2292
    %2356 = vmatpush1.msra.mxu0 %v2291
    %2357 = vmatprep.subr.mxu0 %v2294
    %2358 = vmatpush1.msra.mxu0 %v2293
    %2359 = vmatprep.subr.mxu0 %v2296
    %2360 = vmatpush1.msra.mxu0 %v2295
    %2361 = vmatprep.subr.mxu0 %v2298
    %2362 = vmatpush1.msra.mxu0 %v2297
    %2363 = vmatprep.subr.mxu0 %v2300
    %2364 = vmatpush1.msra.mxu0 %v2299
    %2365 = vmatprep.subr.mxu0 %v2302
    %2366 = vmatpush1.msra.mxu0 %v2301
    %2367 = vmatprep.subr.mxu0 %v2304
    %2368 = vmatpush1.msra.mxu0 %v2303
    %2369 = vmatprep.subr.mxu0 %v2306
    %2370 = vmatpush1.msra.mxu0 %v2305
    %2371 = vmatprep.subr.mxu0 %v2308
    %2372 = vmatpush1.msra.mxu0 %v2307
    %2373 = vmatprep.subr.mxu0 %v2310
    %2374 = vmatpush1.msra.mxu0 %v2309
    %2375 = vmatprep.subr.mxu0 %v2312
    %2376 = vmatpush1.msra.mxu0 %v2311
    %2377 = vmatprep.subr.mxu0 %v2314
    %2378 = vmatpush1.msra.mxu0 %v2313
    %2379 = vmatprep.subr.mxu0 %v2316
    %2380 = vmatpush1.msra.mxu0 %v2315
    %2381 = vmatprep.subr.mxu0 %v2318
    %2382 = vmatpush1.msra.mxu0 %v2317
    %2383 = vmatprep.subr.mxu0 %v2320
    %2384 = vmatpush1.msra.mxu0 %v2319
    %2385 = vmatprep.subr.mxu0 %v2322
    %2386 = vmatpush1.msra.mxu0 %v2321
    %2387 = vmatprep.subr.mxu0 %v2324
    %2388 = vmatpush1.msra.mxu0 %v2323
    %2389 = vmatprep.subr.mxu0 %v2326
    %2390 = vmatpush1.msra.mxu0 %v2325
    %2391 = vmatprep.subr.mxu0 %v2328
    %2392 = vmatpush1.msra.mxu0 %v2327
    %2393 = vmatprep.subr.mxu0 %v2330
    %2394 = vmatpush1.msra.mxu0 %v2329
    %2395 = vmatprep.subr.mxu0 %v2332
    %2396 = vmatpush1.msra.mxu0 %v2331
    %2397 = vmatprep.subr.mxu0 %v2334
    %2398 = vmatpush1.msra.mxu0 %v2333
    %2399 = vmatprep.subr.mxu0 %v2336
    %2400 = vmatpush1.msra.mxu0 %v2335
    %2401 = vmatprep.subr.mxu0 %v2338
    %2402 = vmatpush1.msra.mxu0 %v2337
    %2403 = vmatprep.subr.mxu0 %v2340
    %2404 = vmatpush1.msra.mxu0 %v2339
    %2405 = vmatprep.subr.mxu0 %v2342
    %2406 = vmatpush1.msra.mxu0 %v2341
    %2407 = vmatprep.subr.mxu0 %v2344
    %2408 = vmatpush1.msra.mxu0 %v2343
    %2409 = vmatprep.subr.mxu0 %v2346
    %2410 = vmatpush1.msra.mxu0 %v2345
    %2411 = vmatprep.subr.mxu0 %v2348
    %2412 = vmatpush1.msra.mxu0 %v2347
    %2413 = vmatprep.subr.mxu0 %v2350
    %2414 = vmatpush1.msra.mxu0 %v2349
    %2415 = vmatprep.subr.mxu0 %v2352
    %2416 = vmatpush1.msra.mxu0 %v2351
    %2417 = vmatprep.mubr.f32.mxu0 %v2287
    %2418 = vmatmul.mubr.f32.gmra.mrb[0].mxu0 %v2286
    %v2419 = vpop.f32.mrb[0].mxu0
    %v2420 = vadd.f32 0.0, %v2419
    %v2421 = vpop.f32.mrb[0].mxu0
    %v2422 = vadd.f32 0.0, %v2421
    %2423 = vdwg.mxu0
    %2425 = vrot.lane.b32.xlu0 %v2420, 96
    %v2426 = vpop.permute.xlu0 %2425
    %2428 = vrot.lane.b32.xlu0 %v2420, 64
    %v2429 = vpop.permute.xlu0 %2428
    %2431 = vrot.lane.b32.xlu0 %v2420, 32
    %v2432 = vpop.permute.xlu0 %2431
    %2435 = vrot.lane.b32.xlu0 %v2422, 96
    %v2436 = vpop.permute.xlu0 %2435
    %2438 = vrot.lane.b32.xlu0 %v2422, 64
    %v2439 = vpop.permute.xlu0 %2438
    %2441 = vrot.lane.b32.xlu0 %v2422, 32
    %v2442 = vpop.permute.xlu0 %2441
    %v2444 = vcombine.low %v2420, %v2429
    %v2445 = vcombine.high %v2420, %v2429
    %v2447 = vunpack.c.l.s4 1983009808
    %v2448 = vunpack.c.0.s8 %v2447
    %v2449 = vlaneseq
    %v2450 = vshrl.u32 %v2449, 7
    %v2451 = vsub.s32 %v2448, %v2450
    %v2452 = vrot.slane %v2444, %v2451
    %v2454 = vunpack.c.l.s4 1983009808
    %v2455 = vunpack.c.0.s8 %v2454
    %v2456 = vlaneseq
    %v2457 = vshrl.u32 %v2456, 7
    %v2458 = vsub.s32 %v2455, %v2457
    %v2459 = vrot.slane %v2445, %v2458
    %v2460 = vcombine.low %v2426, %v2432
    %v2461 = vcombine.high %v2426, %v2432
    %v2463 = vunpack.c.l.s4 1983009808
    %v2464 = vunpack.c.0.s8 %v2463
    %v2465 = vlaneseq
    %v2466 = vshrl.u32 %v2465, 7
    %v2467 = vsub.s32 %v2464, %v2466
    %v2468 = vrot.slane %v2460, %v2467
    %v2470 = vunpack.c.l.s4 1983009808
    %v2471 = vunpack.c.0.s8 %v2470
    %v2472 = vlaneseq
    %v2473 = vshrl.u32 %v2472, 7
    %v2474 = vsub.s32 %v2471, %v2473
    %v2475 = vrot.slane %v2461, %v2474
    %v2476 = vcombine.low %v2422, %v2439
    %v2477 = vcombine.high %v2422, %v2439
    %v2479 = vunpack.c.l.s4 1983009808
    %v2480 = vunpack.c.0.s8 %v2479
    %v2481 = vlaneseq
    %v2482 = vshrl.u32 %v2481, 7
    %v2483 = vsub.s32 %v2480, %v2482
    %v2484 = vrot.slane %v2476, %v2483
    %v2486 = vunpack.c.l.s4 1983009808
    %v2487 = vunpack.c.0.s8 %v2486
    %v2488 = vlaneseq
    %v2489 = vshrl.u32 %v2488, 7
    %v2490 = vsub.s32 %v2487, %v2489
    %v2491 = vrot.slane %v2477, %v2490
    %v2492 = vcombine.low %v2436, %v2442
    %v2493 = vcombine.high %v2436, %v2442
    %v2495 = vunpack.c.l.s4 1983009808
    %v2496 = vunpack.c.0.s8 %v2495
    %v2497 = vlaneseq
    %v2498 = vshrl.u32 %v2497, 7
    %v2499 = vsub.s32 %v2496, %v2498
    %v2500 = vrot.slane %v2492, %v2499
    %v2502 = vunpack.c.l.s4 1983009808
    %v2503 = vunpack.c.0.s8 %v2502
    %v2504 = vlaneseq
    %v2505 = vshrl.u32 %v2504, 7
    %v2506 = vsub.s32 %v2503, %v2505
    %v2507 = vrot.slane %v2493, %v2506
    %v2508 = vcombine.low %v2452, %v2468
    %v2509 = vcombine.high %v2452, %v2468
    %v2511 = vunpack.c.l.s4 1934713408
    %v2512 = vunpack.c.0.s8 %v2511
    %v2513 = vlaneseq
    %v2514 = vshrl.u32 %v2513, 7
    %v2515 = vsub.s32 %v2512, %v2514
    %v2516 = vrot.slane %v2508, %v2515
    %v2518 = vunpack.c.l.s4 1934713408
    %v2519 = vunpack.c.0.s8 %v2518
    %v2520 = vlaneseq
    %v2521 = vshrl.u32 %v2520, 7
    %v2522 = vsub.s32 %v2519, %v2521
    %v2523 = vrot.slane %v2509, %v2522
    %v2524 = vcombine.low %v2459, %v2475
    %v2525 = vcombine.high %v2459, %v2475
    %v2527 = vunpack.c.l.s4 1934713408
    %v2528 = vunpack.c.0.s8 %v2527
    %v2529 = vlaneseq
    %v2530 = vshrl.u32 %v2529, 7
    %v2531 = vsub.s32 %v2528, %v2530
    %v2532 = vrot.slane %v2524, %v2531
    %v2534 = vunpack.c.l.s4 1934713408
    %v2535 = vunpack.c.0.s8 %v2534
    %v2536 = vlaneseq
    %v2537 = vshrl.u32 %v2536, 7
    %v2538 = vsub.s32 %v2535, %v2537
    %v2539 = vrot.slane %v2525, %v2538
    %v2540 = vcombine.low %v2484, %v2500
    %v2541 = vcombine.high %v2484, %v2500
    %v2543 = vunpack.c.l.s4 1934713408
    %v2544 = vunpack.c.0.s8 %v2543
    %v2545 = vlaneseq
    %v2546 = vshrl.u32 %v2545, 7
    %v2547 = vsub.s32 %v2544, %v2546
    %v2548 = vrot.slane %v2540, %v2547
    %v2550 = vunpack.c.l.s4 1934713408
    %v2551 = vunpack.c.0.s8 %v2550
    %v2552 = vlaneseq
    %v2553 = vshrl.u32 %v2552, 7
    %v2554 = vsub.s32 %v2551, %v2553
    %v2555 = vrot.slane %v2541, %v2554
    %v2556 = vcombine.low %v2491, %v2507
    %v2557 = vcombine.high %v2491, %v2507
    %v2559 = vunpack.c.l.s4 1934713408
    %v2560 = vunpack.c.0.s8 %v2559
    %v2561 = vlaneseq
    %v2562 = vshrl.u32 %v2561, 7
    %v2563 = vsub.s32 %v2560, %v2562
    %v2564 = vrot.slane %v2556, %v2563
    %v2566 = vunpack.c.l.s4 1934713408
    %v2567 = vunpack.c.0.s8 %v2566
    %v2568 = vlaneseq
    %v2569 = vshrl.u32 %v2568, 7
    %v2570 = vsub.s32 %v2567, %v2569
    %v2571 = vrot.slane %v2557, %v2570
    %v2572 = vcombine.low %v2516, %v2548
    %v2573 = vcombine.high %v2516, %v2548
    %v2574 = vcombine.low %v2523, %v2555
    %v2575 = vcombine.high %v2523, %v2555
    %v2576 = vcombine.low %v2532, %v2564
    %v2577 = vcombine.high %v2532, %v2564
    %v2578 = vcombine.low %v2539, %v2571
    %v2579 = vcombine.high %v2539, %v2571
    %v2580 = vlaneseq
    %v2581 = vshrl.u32 %v2580, 7
    %v2582 = vsub.s32 0, %v2581
    %v2583 = vrot.slane %v2572, %v2582
    %v2584 = vlaneseq
    %v2585 = vshrl.u32 %v2584, 7
    %v2586 = vsub.s32 0, %v2585
    %v2587 = vrot.slane %v2573, %v2586
    %v2588 = vlaneseq
    %v2589 = vshrl.u32 %v2588, 7
    %v2590 = vsub.s32 0, %v2589
    %v2591 = vrot.slane %v2574, %v2590
    %v2592 = vlaneseq
    %v2593 = vshrl.u32 %v2592, 7
    %v2594 = vsub.s32 0, %v2593
    %v2595 = vrot.slane %v2575, %v2594
    %v2596 = vlaneseq
    %v2597 = vshrl.u32 %v2596, 7
    %v2598 = vsub.s32 0, %v2597
    %v2599 = vrot.slane %v2576, %v2598
    %v2600 = vlaneseq
    %v2601 = vshrl.u32 %v2600, 7
    %v2602 = vsub.s32 0, %v2601
    %v2603 = vrot.slane %v2577, %v2602
    %v2604 = vlaneseq
    %v2605 = vshrl.u32 %v2604, 7
    %v2606 = vsub.s32 0, %v2605
    %v2607 = vrot.slane %v2578, %v2606
    %v2608 = vlaneseq
    %v2609 = vshrl.u32 %v2608, 7
    %v2610 = vsub.s32 0, %v2609
    %v2611 = vrot.slane %v2579, %v2610
    %v2612 = vmul.f32 %v803, %v2583
    %v2613 = vmul.f32 %v808, %v2587
    %v2614 = vmul.f32 %v813, %v2591
    %v2615 = vmul.f32 %v818, %v2595
    %v2616 = vmul.f32 %v823, %v2599
    %v2617 = vmul.f32 %v828, %v2603
    %v2618 = vmul.f32 %v833, %v2607
    %v2619 = vmul.f32 %v838, %v2611
    %v2620 = vlaneseq
    %v2621 = vshrl.u32 %v2620, 7
    %v2622 = vsub.s32 1, %v2621
    %v2623 = vrot.slane %v2572, %v2622
    %v2624 = vlaneseq
    %v2625 = vshrl.u32 %v2624, 7
    %v2626 = vsub.s32 1, %v2625
    %v2627 = vrot.slane %v2573, %v2626
    %v2628 = vlaneseq
    %v2629 = vshrl.u32 %v2628, 7
    %v2630 = vsub.s32 1, %v2629
    %v2631 = vrot.slane %v2574, %v2630
    %v2632 = vlaneseq
    %v2633 = vshrl.u32 %v2632, 7
    %v2634 = vsub.s32 1, %v2633
    %v2635 = vrot.slane %v2575, %v2634
    %v2636 = vlaneseq
    %v2637 = vshrl.u32 %v2636, 7
    %v2638 = vsub.s32 1, %v2637
    %v2639 = vrot.slane %v2576, %v2638
    %v2640 = vlaneseq
    %v2641 = vshrl.u32 %v2640, 7
    %v2642 = vsub.s32 1, %v2641
    %v2643 = vrot.slane %v2577, %v2642
    %v2644 = vlaneseq
    %v2645 = vshrl.u32 %v2644, 7
    %v2646 = vsub.s32 1, %v2645
    %v2647 = vrot.slane %v2578, %v2646
    %v2648 = vlaneseq
    %v2649 = vshrl.u32 %v2648, 7
    %v2650 = vsub.s32 1, %v2649
    %v2651 = vrot.slane %v2579, %v2650
    %v2652 = vmul.f32 %v882, %v2623
    %v2653 = vmul.f32 %v886, %v2627
    %v2654 = vmul.f32 %v890, %v2631
    %v2655 = vmul.f32 %v894, %v2635
    %v2656 = vmul.f32 %v898, %v2639
    %v2657 = vmul.f32 %v902, %v2643
    %v2658 = vmul.f32 %v906, %v2647
    %v2659 = vmul.f32 %v910, %v2651
    %v2660 = vadd.f32 %v2612, %v2652
    %v2661 = vadd.f32 %v2613, %v2653
    %v2662 = vadd.f32 %v2614, %v2654
    %v2663 = vadd.f32 %v2615, %v2655
    %v2664 = vadd.f32 %v2616, %v2656
    %v2665 = vadd.f32 %v2617, %v2657
    %v2666 = vadd.f32 %v2618, %v2658
    %v2667 = vadd.f32 %v2619, %v2659
    %v2668 = vlaneseq
    %v2669 = vshrl.u32 %v2668, 7
    %v2670 = vsub.s32 2, %v2669
    %v2671 = vrot.slane %v2572, %v2670
    %v2672 = vlaneseq
    %v2673 = vshrl.u32 %v2672, 7
    %v2674 = vsub.s32 2, %v2673
    %v2675 = vrot.slane %v2573, %v2674
    %v2676 = vlaneseq
    %v2677 = vshrl.u32 %v2676, 7
    %v2678 = vsub.s32 2, %v2677
    %v2679 = vrot.slane %v2574, %v2678
    %v2680 = vlaneseq
    %v2681 = vshrl.u32 %v2680, 7
    %v2682 = vsub.s32 2, %v2681
    %v2683 = vrot.slane %v2575, %v2682
    %v2684 = vlaneseq
    %v2685 = vshrl.u32 %v2684, 7
    %v2686 = vsub.s32 2, %v2685
    %v2687 = vrot.slane %v2576, %v2686
    %v2688 = vlaneseq
    %v2689 = vshrl.u32 %v2688, 7
    %v2690 = vsub.s32 2, %v2689
    %v2691 = vrot.slane %v2577, %v2690
    %v2692 = vlaneseq
    %v2693 = vshrl.u32 %v2692, 7
    %v2694 = vsub.s32 2, %v2693
    %v2695 = vrot.slane %v2578, %v2694
    %v2696 = vlaneseq
    %v2697 = vshrl.u32 %v2696, 7
    %v2698 = vsub.s32 2, %v2697
    %v2699 = vrot.slane %v2579, %v2698
    %v2700 = vmul.f32 %v962, %v2671
    %v2701 = vmul.f32 %v966, %v2675
    %v2702 = vmul.f32 %v970, %v2679
    %v2703 = vmul.f32 %v974, %v2683
    %v2704 = vmul.f32 %v978, %v2687
    %v2705 = vmul.f32 %v982, %v2691
    %v2706 = vmul.f32 %v986, %v2695
    %v2707 = vmul.f32 %v990, %v2699
    %v2708 = vadd.f32 %v2660, %v2700
    %v2709 = vadd.f32 %v2661, %v2701
    %v2710 = vadd.f32 %v2662, %v2702
    %v2711 = vadd.f32 %v2663, %v2703
    %v2712 = vadd.f32 %v2664, %v2704
    %v2713 = vadd.f32 %v2665, %v2705
    %v2714 = vadd.f32 %v2666, %v2706
    %v2715 = vadd.f32 %v2667, %v2707
    %v2716 = vlaneseq
    %v2717 = vshrl.u32 %v2716, 7
    %v2718 = vsub.s32 3, %v2717
    %v2719 = vrot.slane %v2572, %v2718
    %v2720 = vlaneseq
    %v2721 = vshrl.u32 %v2720, 7
    %v2722 = vsub.s32 3, %v2721
    %v2723 = vrot.slane %v2573, %v2722
    %v2724 = vlaneseq
    %v2725 = vshrl.u32 %v2724, 7
    %v2726 = vsub.s32 3, %v2725
    %v2727 = vrot.slane %v2574, %v2726
    %v2728 = vlaneseq
    %v2729 = vshrl.u32 %v2728, 7
    %v2730 = vsub.s32 3, %v2729
    %v2731 = vrot.slane %v2575, %v2730
    %v2732 = vlaneseq
    %v2733 = vshrl.u32 %v2732, 7
    %v2734 = vsub.s32 3, %v2733
    %v2735 = vrot.slane %v2576, %v2734
    %v2736 = vlaneseq
    %v2737 = vshrl.u32 %v2736, 7
    %v2738 = vsub.s32 3, %v2737
    %v2739 = vrot.slane %v2577, %v2738
    %v2740 = vlaneseq
    %v2741 = vshrl.u32 %v2740, 7
    %v2742 = vsub.s32 3, %v2741
    %v2743 = vrot.slane %v2578, %v2742
    %v2744 = vlaneseq
    %v2745 = vshrl.u32 %v2744, 7
    %v2746 = vsub.s32 3, %v2745
    %v2747 = vrot.slane %v2579, %v2746
    %v2748 = vmul.f32 %v1042, %v2719
    %v2749 = vmul.f32 %v1046, %v2723
    %v2750 = vmul.f32 %v1050, %v2727
    %v2751 = vmul.f32 %v1054, %v2731
    %v2752 = vmul.f32 %v1058, %v2735
    %v2753 = vmul.f32 %v1062, %v2739
    %v2754 = vmul.f32 %v1066, %v2743
    %v2755 = vmul.f32 %v1070, %v2747
    %v2756 = vadd.f32 %v2708, %v2748
    %v2757 = vadd.f32 %v2709, %v2749
    %v2758 = vadd.f32 %v2710, %v2750
    %v2759 = vadd.f32 %v2711, %v2751
    %v2760 = vadd.f32 %v2712, %v2752
    %v2761 = vadd.f32 %v2713, %v2753
    %v2762 = vadd.f32 %v2714, %v2754
    %v2763 = vadd.f32 %v2715, %v2755
    %v2764 = vlaneseq
    %v2765 = vshrl.u32 %v2764, 7
    %v2766 = vsub.s32 4, %v2765
    %v2767 = vrot.slane %v2572, %v2766
    %v2768 = vlaneseq
    %v2769 = vshrl.u32 %v2768, 7
    %v2770 = vsub.s32 4, %v2769
    %v2771 = vrot.slane %v2573, %v2770
    %v2772 = vlaneseq
    %v2773 = vshrl.u32 %v2772, 7
    %v2774 = vsub.s32 4, %v2773
    %v2775 = vrot.slane %v2574, %v2774
    %v2776 = vlaneseq
    %v2777 = vshrl.u32 %v2776, 7
    %v2778 = vsub.s32 4, %v2777
    %v2779 = vrot.slane %v2575, %v2778
    %v2780 = vlaneseq
    %v2781 = vshrl.u32 %v2780, 7
    %v2782 = vsub.s32 4, %v2781
    %v2783 = vrot.slane %v2576, %v2782
    %v2784 = vlaneseq
    %v2785 = vshrl.u32 %v2784, 7
    %v2786 = vsub.s32 4, %v2785
    %v2787 = vrot.slane %v2577, %v2786
    %v2788 = vlaneseq
    %v2789 = vshrl.u32 %v2788, 7
    %v2790 = vsub.s32 4, %v2789
    %v2791 = vrot.slane %v2578, %v2790
    %v2792 = vlaneseq
    %v2793 = vshrl.u32 %v2792, 7
    %v2794 = vsub.s32 4, %v2793
    %v2795 = vrot.slane %v2579, %v2794
    %v2796 = vmul.f32 %v1122, %v2767
    %v2797 = vmul.f32 %v1126, %v2771
    %v2798 = vmul.f32 %v1130, %v2775
    %v2799 = vmul.f32 %v1134, %v2779
    %v2800 = vmul.f32 %v1138, %v2783
    %v2801 = vmul.f32 %v1142, %v2787
    %v2802 = vmul.f32 %v1146, %v2791
    %v2803 = vmul.f32 %v1150, %v2795
    %v2804 = vadd.f32 %v2756, %v2796
    %v2805 = vadd.f32 %v2757, %v2797
    %v2806 = vadd.f32 %v2758, %v2798
    %v2807 = vadd.f32 %v2759, %v2799
    %v2808 = vadd.f32 %v2760, %v2800
    %v2809 = vadd.f32 %v2761, %v2801
    %v2810 = vadd.f32 %v2762, %v2802
    %v2811 = vadd.f32 %v2763, %v2803
    %v2812 = vlaneseq
    %v2813 = vshrl.u32 %v2812, 7
    %v2814 = vsub.s32 5, %v2813
    %v2815 = vrot.slane %v2572, %v2814
    %v2816 = vlaneseq
    %v2817 = vshrl.u32 %v2816, 7
    %v2818 = vsub.s32 5, %v2817
    %v2819 = vrot.slane %v2573, %v2818
    %v2820 = vlaneseq
    %v2821 = vshrl.u32 %v2820, 7
    %v2822 = vsub.s32 5, %v2821
    %v2823 = vrot.slane %v2574, %v2822
    %v2824 = vlaneseq
    %v2825 = vshrl.u32 %v2824, 7
    %v2826 = vsub.s32 5, %v2825
    %v2827 = vrot.slane %v2575, %v2826
    %v2828 = vlaneseq
    %v2829 = vshrl.u32 %v2828, 7
    %v2830 = vsub.s32 5, %v2829
    %v2831 = vrot.slane %v2576, %v2830
    %v2832 = vlaneseq
    %v2833 = vshrl.u32 %v2832, 7
    %v2834 = vsub.s32 5, %v2833
    %v2835 = vrot.slane %v2577, %v2834
    %v2836 = vlaneseq
    %v2837 = vshrl.u32 %v2836, 7
    %v2838 = vsub.s32 5, %v2837
    %v2839 = vrot.slane %v2578, %v2838
    %v2840 = vlaneseq
    %v2841 = vshrl.u32 %v2840, 7
    %v2842 = vsub.s32 5, %v2841
    %v2843 = vrot.slane %v2579, %v2842
    %v2844 = vmul.f32 %v1202, %v2815
    %v2845 = vmul.f32 %v1206, %v2819
    %v2846 = vmul.f32 %v1210, %v2823
    %v2847 = vmul.f32 %v1214, %v2827
    %v2848 = vmul.f32 %v1218, %v2831
    %v2849 = vmul.f32 %v1222, %v2835
    %v2850 = vmul.f32 %v1226, %v2839
    %v2851 = vmul.f32 %v1230, %v2843
    %v2852 = vadd.f32 %v2804, %v2844
    %v2853 = vadd.f32 %v2805, %v2845
    %v2854 = vadd.f32 %v2806, %v2846
    %v2855 = vadd.f32 %v2807, %v2847
    %v2856 = vadd.f32 %v2808, %v2848
    %v2857 = vadd.f32 %v2809, %v2849
    %v2858 = vadd.f32 %v2810, %v2850
    %v2859 = vadd.f32 %v2811, %v2851
    %v2860 = vlaneseq
    %v2861 = vshrl.u32 %v2860, 7
    %v2862 = vsub.s32 6, %v2861
    %v2863 = vrot.slane %v2572, %v2862
    %v2864 = vlaneseq
    %v2865 = vshrl.u32 %v2864, 7
    %v2866 = vsub.s32 6, %v2865
    %v2867 = vrot.slane %v2573, %v2866
    %v2868 = vlaneseq
    %v2869 = vshrl.u32 %v2868, 7
    %v2870 = vsub.s32 6, %v2869
    %v2871 = vrot.slane %v2574, %v2870
    %v2872 = vlaneseq
    %v2873 = vshrl.u32 %v2872, 7
    %v2874 = vsub.s32 6, %v2873
    %v2875 = vrot.slane %v2575, %v2874
    %v2876 = vlaneseq
    %v2877 = vshrl.u32 %v2876, 7
    %v2878 = vsub.s32 6, %v2877
    %v2879 = vrot.slane %v2576, %v2878
    %v2880 = vlaneseq
    %v2881 = vshrl.u32 %v2880, 7
    %v2882 = vsub.s32 6, %v2881
    %v2883 = vrot.slane %v2577, %v2882
    %v2884 = vlaneseq
    %v2885 = vshrl.u32 %v2884, 7
    %v2886 = vsub.s32 6, %v2885
    %v2887 = vrot.slane %v2578, %v2886
    %v2888 = vlaneseq
    %v2889 = vshrl.u32 %v2888, 7
    %v2890 = vsub.s32 6, %v2889
    %v2891 = vrot.slane %v2579, %v2890
    %v2892 = vmul.f32 %v1282, %v2863
    %v2893 = vmul.f32 %v1286, %v2867
    %v2894 = vmul.f32 %v1290, %v2871
    %v2895 = vmul.f32 %v1294, %v2875
    %v2896 = vmul.f32 %v1298, %v2879
    %v2897 = vmul.f32 %v1302, %v2883
    %v2898 = vmul.f32 %v1306, %v2887
    %v2899 = vmul.f32 %v1310, %v2891
    %v2900 = vadd.f32 %v2852, %v2892
    %v2901 = vadd.f32 %v2853, %v2893
    %v2902 = vadd.f32 %v2854, %v2894
    %v2903 = vadd.f32 %v2855, %v2895
    %v2904 = vadd.f32 %v2856, %v2896
    %v2905 = vadd.f32 %v2857, %v2897
    %v2906 = vadd.f32 %v2858, %v2898
    %v2907 = vadd.f32 %v2859, %v2899
    %v2908 = vlaneseq
    %v2909 = vshrl.u32 %v2908, 7
    %v2910 = vsub.s32 7, %v2909
    %v2911 = vrot.slane %v2572, %v2910
    %v2912 = vlaneseq
    %v2913 = vshrl.u32 %v2912, 7
    %v2914 = vsub.s32 7, %v2913
    %v2915 = vrot.slane %v2573, %v2914
    %v2916 = vlaneseq
    %v2917 = vshrl.u32 %v2916, 7
    %v2918 = vsub.s32 7, %v2917
    %v2919 = vrot.slane %v2574, %v2918
    %v2920 = vlaneseq
    %v2921 = vshrl.u32 %v2920, 7
    %v2922 = vsub.s32 7, %v2921
    %v2923 = vrot.slane %v2575, %v2922
    %v2924 = vlaneseq
    %v2925 = vshrl.u32 %v2924, 7
    %v2926 = vsub.s32 7, %v2925
    %v2927 = vrot.slane %v2576, %v2926
    %v2928 = vlaneseq
    %v2929 = vshrl.u32 %v2928, 7
    %v2930 = vsub.s32 7, %v2929
    %v2931 = vrot.slane %v2577, %v2930
    %v2932 = vlaneseq
    %v2933 = vshrl.u32 %v2932, 7
    %v2934 = vsub.s32 7, %v2933
    %v2935 = vrot.slane %v2578, %v2934
    %v2936 = vlaneseq
    %v2937 = vshrl.u32 %v2936, 7
    %v2938 = vsub.s32 7, %v2937
    %v2939 = vrot.slane %v2579, %v2938
    %v2940 = vmul.f32 %v1362, %v2911
    %v2941 = vmul.f32 %v1366, %v2915
    %v2942 = vmul.f32 %v1370, %v2919
    %v2943 = vmul.f32 %v1374, %v2923
    %v2944 = vmul.f32 %v1378, %v2927
    %v2945 = vmul.f32 %v1382, %v2931
    %v2946 = vmul.f32 %v1386, %v2935
    %v2947 = vmul.f32 %v1390, %v2939
    %v2948 = vadd.f32 %v2900, %v2940
    %v2949 = vadd.f32 %v2901, %v2941
    %v2950 = vadd.f32 %v2902, %v2942
    %v2951 = vadd.f32 %v2903, %v2943
    %v2952 = vadd.f32 %v2904, %v2944
    %v2953 = vadd.f32 %v2905, %v2945
    %v2954 = vadd.f32 %v2906, %v2946
    %v2955 = vadd.f32 %v2907, %v2947
    %v2956 = vcombine.low %v2948, %v2950
    %v2957 = vcombine.high %v2948, %v2950
    %v2959 = vunpack.c.l.s4 1983009808
    %v2960 = vunpack.c.0.s8 %v2959
    %v2961 = vlaneseq
    %v2962 = vshrl.u32 %v2961, 7
    %v2963 = vsub.s32 %v2960, %v2962
    %v2964 = vrot.slane %v2956, %v2963
    %v2966 = vunpack.c.l.s4 1983009808
    %v2967 = vunpack.c.0.s8 %v2966
    %v2968 = vlaneseq
    %v2969 = vshrl.u32 %v2968, 7
    %v2970 = vsub.s32 %v2967, %v2969
    %v2971 = vrot.slane %v2957, %v2970
    %v2972 = vcombine.low %v2949, %v2951
    %v2973 = vcombine.high %v2949, %v2951
    %v2975 = vunpack.c.l.s4 1983009808
    %v2976 = vunpack.c.0.s8 %v2975
    %v2977 = vlaneseq
    %v2978 = vshrl.u32 %v2977, 7
    %v2979 = vsub.s32 %v2976, %v2978
    %v2980 = vrot.slane %v2972, %v2979
    %v2982 = vunpack.c.l.s4 1983009808
    %v2983 = vunpack.c.0.s8 %v2982
    %v2984 = vlaneseq
    %v2985 = vshrl.u32 %v2984, 7
    %v2986 = vsub.s32 %v2983, %v2985
    %v2987 = vrot.slane %v2973, %v2986
    %v2988 = vcombine.low %v2952, %v2954
    %v2989 = vcombine.high %v2952, %v2954
    %v2991 = vunpack.c.l.s4 1983009808
    %v2992 = vunpack.c.0.s8 %v2991
    %v2993 = vlaneseq
    %v2994 = vshrl.u32 %v2993, 7
    %v2995 = vsub.s32 %v2992, %v2994
    %v2996 = vrot.slane %v2988, %v2995
    %v2998 = vunpack.c.l.s4 1983009808
    %v2999 = vunpack.c.0.s8 %v2998
    %v3000 = vlaneseq
    %v3001 = vshrl.u32 %v3000, 7
    %v3002 = vsub.s32 %v2999, %v3001
    %v3003 = vrot.slane %v2989, %v3002
    %v3004 = vcombine.low %v2953, %v2955
    %v3005 = vcombine.high %v2953, %v2955
    %v3007 = vunpack.c.l.s4 1983009808
    %v3008 = vunpack.c.0.s8 %v3007
    %v3009 = vlaneseq
    %v3010 = vshrl.u32 %v3009, 7
    %v3011 = vsub.s32 %v3008, %v3010
    %v3012 = vrot.slane %v3004, %v3011
    %v3014 = vunpack.c.l.s4 1983009808
    %v3015 = vunpack.c.0.s8 %v3014
    %v3016 = vlaneseq
    %v3017 = vshrl.u32 %v3016, 7
    %v3018 = vsub.s32 %v3015, %v3017
    %v3019 = vrot.slane %v3005, %v3018
    %v3020 = vcombine.low %v2964, %v2980
    %v3021 = vcombine.high %v2964, %v2980
    %v3023 = vunpack.c.l.s4 1934713408
    %v3024 = vunpack.c.0.s8 %v3023
    %v3025 = vlaneseq
    %v3026 = vshrl.u32 %v3025, 7
    %v3027 = vsub.s32 %v3024, %v3026
    %v3028 = vrot.slane %v3020, %v3027
    %v3030 = vunpack.c.l.s4 1934713408
    %v3031 = vunpack.c.0.s8 %v3030
    %v3032 = vlaneseq
    %v3033 = vshrl.u32 %v3032, 7
    %v3034 = vsub.s32 %v3031, %v3033
    %v3035 = vrot.slane %v3021, %v3034
    %v3036 = vcombine.low %v2971, %v2987
    %v3037 = vcombine.high %v2971, %v2987
    %v3039 = vunpack.c.l.s4 1934713408
    %v3040 = vunpack.c.0.s8 %v3039
    %v3041 = vlaneseq
    %v3042 = vshrl.u32 %v3041, 7
    %v3043 = vsub.s32 %v3040, %v3042
    %v3044 = vrot.slane %v3036, %v3043
    %v3046 = vunpack.c.l.s4 1934713408
    %v3047 = vunpack.c.0.s8 %v3046
    %v3048 = vlaneseq
    %v3049 = vshrl.u32 %v3048, 7
    %v3050 = vsub.s32 %v3047, %v3049
    %v3051 = vrot.slane %v3037, %v3050
    %v3052 = vcombine.low %v2996, %v3012
    %v3053 = vcombine.high %v2996, %v3012
    %v3055 = vunpack.c.l.s4 1934713408
    %v3056 = vunpack.c.0.s8 %v3055
    %v3057 = vlaneseq
    %v3058 = vshrl.u32 %v3057, 7
    %v3059 = vsub.s32 %v3056, %v3058
    %v3060 = vrot.slane %v3052, %v3059
    %v3062 = vunpack.c.l.s4 1934713408
    %v3063 = vunpack.c.0.s8 %v3062
    %v3064 = vlaneseq
    %v3065 = vshrl.u32 %v3064, 7
    %v3066 = vsub.s32 %v3063, %v3065
    %v3067 = vrot.slane %v3053, %v3066
    %v3068 = vcombine.low %v3003, %v3019
    %v3069 = vcombine.high %v3003, %v3019
    %v3071 = vunpack.c.l.s4 1934713408
    %v3072 = vunpack.c.0.s8 %v3071
    %v3073 = vlaneseq
    %v3074 = vshrl.u32 %v3073, 7
    %v3075 = vsub.s32 %v3072, %v3074
    %v3076 = vrot.slane %v3068, %v3075
    %v3078 = vunpack.c.l.s4 1934713408
    %v3079 = vunpack.c.0.s8 %v3078
    %v3080 = vlaneseq
    %v3081 = vshrl.u32 %v3080, 7
    %v3082 = vsub.s32 %v3079, %v3081
    %v3083 = vrot.slane %v3069, %v3082
    %v3084 = vcombine.low %v3028, %v3060
    %v3085 = vcombine.high %v3028, %v3060
    %v3086 = vcombine.low %v3035, %v3067
    %v3087 = vcombine.high %v3035, %v3067
    %v3088 = vcombine.low %v3044, %v3076
    %v3089 = vcombine.high %v3044, %v3076
    %v3090 = vcombine.low %v3051, %v3083
    %v3091 = vcombine.high %v3051, %v3083
    %3093 = vrot.lane.b32.xlu0 %v3085, 32
    %v3094 = vpop.permute.xlu0 %3093
    %3097 = vrot.lane.b32.xlu0 %v3086, 64
    %v3098 = vpop.permute.xlu0 %3097
    %3101 = vrot.lane.b32.xlu0 %v3087, 96
    %v3102 = vpop.permute.xlu0 %3101
    %3105 = vrot.lane.b32.xlu0 %v3089, 32
    %v3106 = vpop.permute.xlu0 %3105
    %3109 = vrot.lane.b32.xlu0 %v3090, 64
    %v3110 = vpop.permute.xlu0 %3109
    %3113 = vrot.lane.b32.xlu0 %v3091, 96
    %v3114 = vpop.permute.xlu0 %3113
    %v3116 = vsel %vm1600, %v3084, %v3094
    %v3117 = vsel %vm1602, %v3116, %v3098
    %v3118 = vsel %vm1604, %v3117, %v3102
    %v3119 = vsel %vm1600, %v3088, %v3106
    %v3120 = vsel %vm1602, %v3119, %v3110
    %v3121 = vsel %vm1604, %v3120, %v3114
    %s3122 = scalar_lea.vmem [#allocation8], 512
    %v3123 = vld [vmem:[%s3122] sm:$0xff]
    %v3124 = vld [vmem:[%s3122 + $0x8] sm:$0xff]
    %v3125 = vld [vmem:[%s3122 + $0x10] sm:$0xff]
    %v3126 = vld [vmem:[%s3122 + $0x18] sm:$0xff]
    %v3127 = vld [vmem:[%s3122 + $0x20] sm:$0xff]
    %v3128 = vld [vmem:[%s3122 + $0x28] sm:$0xff]
    %v3129 = vld [vmem:[%s3122 + $0x30] sm:$0xff]
    %v3130 = vld [vmem:[%s3122 + $0x38] sm:$0xff]
    %v3131 = vld [vmem:[%s3122 + $0x40] sm:$0xff]
    %v3132 = vld [vmem:[%s3122 + $0x48] sm:$0xff]
    %v3133 = vld [vmem:[%s3122 + $0x50] sm:$0xff]
    %v3134 = vld [vmem:[%s3122 + $0x58] sm:$0xff]
    %v3135 = vld [vmem:[%s3122 + $0x60] sm:$0xff]
    %v3136 = vld [vmem:[%s3122 + $0x68] sm:$0xff]
    %v3137 = vld [vmem:[%s3122 + $0x70] sm:$0xff]
    %v3138 = vld [vmem:[%s3122 + $0x78] sm:$0xff]
    %v3139 = vld [vmem:[%s3122 + $0x80] sm:$0xff]
    %v3140 = vld [vmem:[%s3122 + $0x88] sm:$0xff]
    %v3141 = vld [vmem:[%s3122 + $0x90] sm:$0xff]
    %v3142 = vld [vmem:[%s3122 + $0x98] sm:$0xff]
    %v3143 = vld [vmem:[%s3122 + $0xa0] sm:$0xff]
    %v3144 = vld [vmem:[%s3122 + $0xa8] sm:$0xff]
    %v3145 = vld [vmem:[%s3122 + $0xb0] sm:$0xff]
    %v3146 = vld [vmem:[%s3122 + $0xb8] sm:$0xff]
    %v3147 = vld [vmem:[%s3122 + $0xc0] sm:$0xff]
    %v3148 = vld [vmem:[%s3122 + $0xc8] sm:$0xff]
    %v3149 = vld [vmem:[%s3122 + $0xd0] sm:$0xff]
    %v3150 = vld [vmem:[%s3122 + $0xd8] sm:$0xff]
    %v3151 = vld [vmem:[%s3122 + $0xe0] sm:$0xff]
    %v3152 = vld [vmem:[%s3122 + $0xe8] sm:$0xff]
    %v3153 = vld [vmem:[%s3122 + $0xf0] sm:$0xff]
    %v3154 = vld [vmem:[%s3122 + $0xf8] sm:$0xff]
    %v3155 = vld [vmem:[%s3122 + $0x100] sm:$0xff]
    %v3156 = vld [vmem:[%s3122 + $0x108] sm:$0xff]
    %v3157 = vld [vmem:[%s3122 + $0x110] sm:$0xff]
    %v3158 = vld [vmem:[%s3122 + $0x118] sm:$0xff]
    %v3159 = vld [vmem:[%s3122 + $0x120] sm:$0xff]
    %v3160 = vld [vmem:[%s3122 + $0x128] sm:$0xff]
    %v3161 = vld [vmem:[%s3122 + $0x130] sm:$0xff]
    %v3162 = vld [vmem:[%s3122 + $0x138] sm:$0xff]
    %v3163 = vld [vmem:[%s3122 + $0x140] sm:$0xff]
    %v3164 = vld [vmem:[%s3122 + $0x148] sm:$0xff]
    %v3165 = vld [vmem:[%s3122 + $0x150] sm:$0xff]
    %v3166 = vld [vmem:[%s3122 + $0x158] sm:$0xff]
    %v3167 = vld [vmem:[%s3122 + $0x160] sm:$0xff]
    %v3168 = vld [vmem:[%s3122 + $0x168] sm:$0xff]
    %v3169 = vld [vmem:[%s3122 + $0x170] sm:$0xff]
    %v3170 = vld [vmem:[%s3122 + $0x178] sm:$0xff]
    %v3171 = vld [vmem:[%s3122 + $0x180] sm:$0xff]
    %v3172 = vld [vmem:[%s3122 + $0x188] sm:$0xff]
    %v3173 = vld [vmem:[%s3122 + $0x190] sm:$0xff]
    %v3174 = vld [vmem:[%s3122 + $0x198] sm:$0xff]
    %v3175 = vld [vmem:[%s3122 + $0x1a0] sm:$0xff]
    %v3176 = vld [vmem:[%s3122 + $0x1a8] sm:$0xff]
    %v3177 = vld [vmem:[%s3122 + $0x1b0] sm:$0xff]
    %v3178 = vld [vmem:[%s3122 + $0x1b8] sm:$0xff]
    %v3179 = vld [vmem:[%s3122 + $0x1c0] sm:$0xff]
    %v3180 = vld [vmem:[%s3122 + $0x1c8] sm:$0xff]
    %v3181 = vld [vmem:[%s3122 + $0x1d0] sm:$0xff]
    %v3182 = vld [vmem:[%s3122 + $0x1d8] sm:$0xff]
    %v3183 = vld [vmem:[%s3122 + $0x1e0] sm:$0xff]
    %v3184 = vld [vmem:[%s3122 + $0x1e8] sm:$0xff]
    %v3185 = vld [vmem:[%s3122 + $0x1f0] sm:$0xff]
    %v3186 = vld [vmem:[%s3122 + $0x1f8] sm:$0xff]
    %s3187 = scalar_lea.vmem %s4, 2
    %v3188 = vld [vmem:[%s3187] sm:$0x3]
    %v3190 = vlaneseq
    %v3191 = vshrl.u32 %v3190, 7
    %v3192 = vsub.s32 0, %v3191
    %v3193 = vrot.slane %v3188, %v3192
    %v3194 = vlaneseq
    %v3195 = vshrl.u32 %v3194, 7
    %v3196 = vsub.s32 1, %v3195
    %v3197 = vrot.slane %v3188, %v3196
    %3200 = vmatprep.subr.mxu0 %v3124
    %3201 = vmatpush1.msra.mxu0 %v3123
    %3202 = vmatprep.subr.mxu0 %v3126
    %3203 = vmatpush1.msra.mxu0 %v3125
    %3204 = vmatprep.subr.mxu0 %v3128
    %3205 = vmatpush1.msra.mxu0 %v3127
    %3206 = vmatprep.subr.mxu0 %v3130
    %3207 = vmatpush1.msra.mxu0 %v3129
    %3208 = vmatprep.subr.mxu0 %v3132
    %3209 = vmatpush1.msra.mxu0 %v3131
    %3210 = vmatprep.subr.mxu0 %v3134
    %3211 = vmatpush1.msra.mxu0 %v3133
    %3212 = vmatprep.subr.mxu0 %v3136
    %3213 = vmatpush1.msra.mxu0 %v3135
    %3214 = vmatprep.subr.mxu0 %v3138
    %3215 = vmatpush1.msra.mxu0 %v3137
    %3216 = vmatprep.subr.mxu0 %v3140
    %3217 = vmatpush1.msra.mxu0 %v3139
    %3218 = vmatprep.subr.mxu0 %v3142
    %3219 = vmatpush1.msra.mxu0 %v3141
    %3220 = vmatprep.subr.mxu0 %v3144
    %3221 = vmatpush1.msra.mxu0 %v3143
    %3222 = vmatprep.subr.mxu0 %v3146
    %3223 = vmatpush1.msra.mxu0 %v3145
    %3224 = vmatprep.subr.mxu0 %v3148
    %3225 = vmatpush1.msra.mxu0 %v3147
    %3226 = vmatprep.subr.mxu0 %v3150
    %3227 = vmatpush1.msra.mxu0 %v3149
    %3228 = vmatprep.subr.mxu0 %v3152
    %3229 = vmatpush1.msra.mxu0 %v3151
    %3230 = vmatprep.subr.mxu0 %v3154
    %3231 = vmatpush1.msra.mxu0 %v3153
    %3232 = vmatprep.subr.mxu0 %v3156
    %3233 = vmatpush1.msra.mxu0 %v3155
    %3234 = vmatprep.subr.mxu0 %v3158
    %3235 = vmatpush1.msra.mxu0 %v3157
    %3236 = vmatprep.subr.mxu0 %v3160
    %3237 = vmatpush1.msra.mxu0 %v3159
    %3238 = vmatprep.subr.mxu0 %v3162
    %3239 = vmatpush1.msra.mxu0 %v3161
    %3240 = vmatprep.subr.mxu0 %v3164
    %3241 = vmatpush1.msra.mxu0 %v3163
    %3242 = vmatprep.subr.mxu0 %v3166
    %3243 = vmatpush1.msra.mxu0 %v3165
    %3244 = vmatprep.subr.mxu0 %v3168
    %3245 = vmatpush1.msra.mxu0 %v3167
    %3246 = vmatprep.subr.mxu0 %v3170
    %3247 = vmatpush1.msra.mxu0 %v3169
    %3248 = vmatprep.subr.mxu0 %v3172
    %3249 = vmatpush1.msra.mxu0 %v3171
    %3250 = vmatprep.subr.mxu0 %v3174
    %3251 = vmatpush1.msra.mxu0 %v3173
    %3252 = vmatprep.subr.mxu0 %v3176
    %3253 = vmatpush1.msra.mxu0 %v3175
    %3254 = vmatprep.subr.mxu0 %v3178
    %3255 = vmatpush1.msra.mxu0 %v3177
    %3256 = vmatprep.subr.mxu0 %v3180
    %3257 = vmatpush1.msra.mxu0 %v3179
    %3258 = vmatprep.subr.mxu0 %v3182
    %3259 = vmatpush1.msra.mxu0 %v3181
    %3260 = vmatprep.subr.mxu0 %v3184
    %3261 = vmatpush1.msra.mxu0 %v3183
    %3262 = vmatprep.subr.mxu0 %v3186
    %3263 = vmatpush1.msra.mxu0 %v3185
    %3264 = vmatprep.mubr.f32.mxu0 %v3121
    %3265 = vmatmul.mubr.f32.gmra.mrb[0].mxu0 %v3118
    %v3266 = vpop.f32.mrb[0].mxu0
    %v3267 = vadd.f32 %v3193, %v3266
    %v3268 = vpop.f32.mrb[0].mxu0
    %v3269 = vadd.f32 %v3197, %v3268
    %3270 = vdwg.mxu0
    %3271 = vmatprep.subr.mxu0 %v124
    %3272 = vmatpush1.msra.mxu0 %v123
    %3273 = vmatprep.subr.mxu0 %v130
    %3274 = vmatpush1.msra.mxu0 %v129
    %3275 = vmatprep.subr.mxu0 %v136
    %3276 = vmatpush1.msra.mxu0 %v135
    %3277 = vmatprep.subr.mxu0 %v142
    %3278 = vmatpush1.msra.mxu0 %v141
    %3279 = vmatprep.subr.mxu0 %v148
    %3280 = vmatpush1.msra.mxu0 %v147
    %3281 = vmatprep.subr.mxu0 %v154
    %3282 = vmatpush1.msra.mxu0 %v153
    %3283 = vmatprep.subr.mxu0 %v160
    %3284 = vmatpush1.msra.mxu0 %v159
    %3285 = vmatprep.subr.mxu0 %v166
    %3286 = vmatpush1.msra.mxu0 %v165
    %3287 = vmatprep.subr.mxu0 %v172
    %3288 = vmatpush1.msra.mxu0 %v171
    %3289 = vmatprep.subr.mxu0 %v178
    %3290 = vmatpush1.msra.mxu0 %v177
    %3291 = vmatprep.subr.mxu0 %v184
    %3292 = vmatpush1.msra.mxu0 %v183
    %3293 = vmatprep.subr.mxu0 %v190
    %3294 = vmatpush1.msra.mxu0 %v189
    %3295 = vmatprep.subr.mxu0 %v196
    %3296 = vmatpush1.msra.mxu0 %v195
    %3297 = vmatprep.subr.mxu0 %v202
    %3298 = vmatpush1.msra.mxu0 %v201
    %3299 = vmatprep.subr.mxu0 %v208
    %3300 = vmatpush1.msra.mxu0 %v207
    %3301 = vmatprep.subr.mxu0 %v214
    %3302 = vmatpush1.msra.mxu0 %v213
    %3303 = vmatprep.subr.mxu0 %v220
    %3304 = vmatpush1.msra.mxu0 %v219
    %3305 = vmatprep.subr.mxu0 %v226
    %3306 = vmatpush1.msra.mxu0 %v225
    %3307 = vmatprep.subr.mxu0 %v232
    %3308 = vmatpush1.msra.mxu0 %v231
    %3309 = vmatprep.subr.mxu0 %v238
    %3310 = vmatpush1.msra.mxu0 %v237
    %3311 = vmatprep.subr.mxu0 %v244
    %3312 = vmatpush1.msra.mxu0 %v243
    %3313 = vmatprep.subr.mxu0 %v250
    %3314 = vmatpush1.msra.mxu0 %v249
    %3315 = vmatprep.subr.mxu0 %v256
    %3316 = vmatpush1.msra.mxu0 %v255
    %3317 = vmatprep.subr.mxu0 %v262
    %3318 = vmatpush1.msra.mxu0 %v261
    %3319 = vmatprep.subr.mxu0 %v268
    %3320 = vmatpush1.msra.mxu0 %v267
    %3321 = vmatprep.subr.mxu0 %v274
    %3322 = vmatpush1.msra.mxu0 %v273
    %3323 = vmatprep.subr.mxu0 %v280
    %3324 = vmatpush1.msra.mxu0 %v279
    %3325 = vmatprep.subr.mxu0 %v286
    %3326 = vmatpush1.msra.mxu0 %v285
    %3327 = vmatprep.subr.mxu0 %v292
    %3328 = vmatpush1.msra.mxu0 %v291
    %3329 = vmatprep.subr.mxu0 %v298
    %3330 = vmatpush1.msra.mxu0 %v297
    %3331 = vmatprep.subr.mxu0 %v304
    %3332 = vmatpush1.msra.mxu0 %v303
    %3333 = vmatprep.subr.mxu0 %v310
    %3334 = vmatpush1.msra.mxu0 %v309
    %3335 = vmatprep.mubr.f32.mxu0 %v3269
    %3336 = vmatmul.mubr.f32.gmra.mrb[0].mxu0 %v3267
    %v3337 = vpop.f32.mrb[0].mxu0
    %v3338 = vadd.f32 %v1760, %v3337
    %v3339 = vpop.f32.mrb[0].mxu0
    %v3340 = vadd.f32 %v1764, %v3339
    %3341 = vdwg.mxu0
    %3342 = vmatprep.subr.mxu0 %v126
    %3343 = vmatpush1.msra.mxu0 %v125
    %3344 = vmatprep.subr.mxu0 %v132
    %3345 = vmatpush1.msra.mxu0 %v131
    %3346 = vmatprep.subr.mxu0 %v138
    %3347 = vmatpush1.msra.mxu0 %v137
    %3348 = vmatprep.subr.mxu0 %v144
    %3349 = vmatpush1.msra.mxu0 %v143
    %3350 = vmatprep.subr.mxu0 %v150
    %3351 = vmatpush1.msra.mxu0 %v149
    %3352 = vmatprep.subr.mxu0 %v156
    %3353 = vmatpush1.msra.mxu0 %v155
    %3354 = vmatprep.subr.mxu0 %v162
    %3355 = vmatpush1.msra.mxu0 %v161
    %3356 = vmatprep.subr.mxu0 %v168
    %3357 = vmatpush1.msra.mxu0 %v167
    %3358 = vmatprep.subr.mxu0 %v174
    %3359 = vmatpush1.msra.mxu0 %v173
    %3360 = vmatprep.subr.mxu0 %v180
    %3361 = vmatpush1.msra.mxu0 %v179
    %3362 = vmatprep.subr.mxu0 %v186
    %3363 = vmatpush1.msra.mxu0 %v185
    %3364 = vmatprep.subr.mxu0 %v192
    %3365 = vmatpush1.msra.mxu0 %v191
    %3366 = vmatprep.subr.mxu0 %v198
    %3367 = vmatpush1.msra.mxu0 %v197
    %3368 = vmatprep.subr.mxu0 %v204
    %3369 = vmatpush1.msra.mxu0 %v203
    %3370 = vmatprep.subr.mxu0 %v210
    %3371 = vmatpush1.msra.mxu0 %v209
    %3372 = vmatprep.subr.mxu0 %v216
    %3373 = vmatpush1.msra.mxu0 %v215
    %3374 = vmatprep.subr.mxu0 %v222
    %3375 = vmatpush1.msra.mxu0 %v221
    %3376 = vmatprep.subr.mxu0 %v228
    %3377 = vmatpush1.msra.mxu0 %v227
    %3378 = vmatprep.subr.mxu0 %v234
    %3379 = vmatpush1.msra.mxu0 %v233
    %3380 = vmatprep.subr.mxu0 %v240
    %3381 = vmatpush1.msra.mxu0 %v239
    %3382 = vmatprep.subr.mxu0 %v246
    %3383 = vmatpush1.msra.mxu0 %v245
    %3384 = vmatprep.subr.mxu0 %v252
    %3385 = vmatpush1.msra.mxu0 %v251
    %3386 = vmatprep.subr.mxu0 %v258
    %3387 = vmatpush1.msra.mxu0 %v257
    %3388 = vmatprep.subr.mxu0 %v264
    %3389 = vmatpush1.msra.mxu0 %v263
    %3390 = vmatprep.subr.mxu0 %v270
    %3391 = vmatpush1.msra.mxu0 %v269
    %3392 = vmatprep.subr.mxu0 %v276
    %3393 = vmatpush1.msra.mxu0 %v275
    %3394 = vmatprep.subr.mxu0 %v282
    %3395 = vmatpush1.msra.mxu0 %v281
    %3396 = vmatprep.subr.mxu0 %v288
    %3397 = vmatpush1.msra.mxu0 %v287
    %3398 = vmatprep.subr.mxu0 %v294
    %3399 = vmatpush1.msra.mxu0 %v293
    %3400 = vmatprep.subr.mxu0 %v300
    %3401 = vmatpush1.msra.mxu0 %v299
    %3402 = vmatprep.subr.mxu0 %v306
    %3403 = vmatpush1.msra.mxu0 %v305
    %3404 = vmatprep.subr.mxu0 %v312
    %3405 = vmatpush1.msra.mxu0 %v311
    %3406 = vmatprep.mubr.f32.mxu0 %v3269
    %3407 = vmatmul.mubr.f32.gmra.mrb[0].mxu0 %v3267
    %v3408 = vpop.f32.mrb[0].mxu0
    %v3409 = vadd.f32 %v1768, %v3408
    %v3410 = vpop.f32.mrb[0].mxu0
    %v3411 = vadd.f32 %v1772, %v3410
    %3412 = vdwg.mxu0
    %3413 = vmatprep.subr.mxu0 %v128
    %3414 = vmatpush1.msra.mxu0 %v127
    %3415 = vmatprep.subr.mxu0 %v134
    %3416 = vmatpush1.msra.mxu0 %v133
    %3417 = vmatprep.subr.mxu0 %v140
    %3418 = vmatpush1.msra.mxu0 %v139
    %3419 = vmatprep.subr.mxu0 %v146
    %3420 = vmatpush1.msra.mxu0 %v145
    %3421 = vmatprep.subr.mxu0 %v152
    %3422 = vmatpush1.msra.mxu0 %v151
    %3423 = vmatprep.subr.mxu0 %v158
    %3424 = vmatpush1.msra.mxu0 %v157
    %3425 = vmatprep.subr.mxu0 %v164
    %3426 = vmatpush1.msra.mxu0 %v163
    %3427 = vmatprep.subr.mxu0 %v170
    %3428 = vmatpush1.msra.mxu0 %v169
    %3429 = vmatprep.subr.mxu0 %v176
    %3430 = vmatpush1.msra.mxu0 %v175
    %3431 = vmatprep.subr.mxu0 %v182
    %3432 = vmatpush1.msra.mxu0 %v181
    %3433 = vmatprep.subr.mxu0 %v188
    %3434 = vmatpush1.msra.mxu0 %v187
    %3435 = vmatprep.subr.mxu0 %v194
    %3436 = vmatpush1.msra.mxu0 %v193
    %3437 = vmatprep.subr.mxu0 %v200
    %3438 = vmatpush1.msra.mxu0 %v199
    %3439 = vmatprep.subr.mxu0 %v206
    %3440 = vmatpush1.msra.mxu0 %v205
    %3441 = vmatprep.subr.mxu0 %v212
    %3442 = vmatpush1.msra.mxu0 %v211
    %3443 = vmatprep.subr.mxu0 %v218
    %3444 = vmatpush1.msra.mxu0 %v217
    %3445 = vmatprep.subr.mxu0 %v224
    %3446 = vmatpush1.msra.mxu0 %v223
    %3447 = vmatprep.subr.mxu0 %v230
    %3448 = vmatpush1.msra.mxu0 %v229
    %3449 = vmatprep.subr.mxu0 %v236
    %3450 = vmatpush1.msra.mxu0 %v235
    %3451 = vmatprep.subr.mxu0 %v242
    %3452 = vmatpush1.msra.mxu0 %v241
    %3453 = vmatprep.subr.mxu0 %v248
    %3454 = vmatpush1.msra.mxu0 %v247
    %3455 = vmatprep.subr.mxu0 %v254
    %3456 = vmatpush1.msra.mxu0 %v253
    %3457 = vmatprep.subr.mxu0 %v260
    %3458 = vmatpush1.msra.mxu0 %v259
    %3459 = vmatprep.subr.mxu0 %v266
    %3460 = vmatpush1.msra.mxu0 %v265
    %3461 = vmatprep.subr.mxu0 %v272
    %3462 = vmatpush1.msra.mxu0 %v271
    %3463 = vmatprep.subr.mxu0 %v278
    %3464 = vmatpush1.msra.mxu0 %v277
    %3465 = vmatprep.subr.mxu0 %v284
    %3466 = vmatpush1.msra.mxu0 %v283
    %3467 = vmatprep.subr.mxu0 %v290
    %3468 = vmatpush1.msra.mxu0 %v289
    %3469 = vmatprep.subr.mxu0 %v296
    %3470 = vmatpush1.msra.mxu0 %v295
    %3471 = vmatprep.subr.mxu0 %v302
    %3472 = vmatpush1.msra.mxu0 %v301
    %3473 = vmatprep.subr.mxu0 %v308
    %3474 = vmatpush1.msra.mxu0 %v307
    %3475 = vmatprep.subr.mxu0 %v314
    %3476 = vmatpush1.msra.mxu0 %v313
    %3477 = vmatprep.mubr.f32.mxu0 %v3269
    %3478 = vmatmul.mubr.f32.gmra.mrb[0].mxu0 %v3267
    %v3479 = vpop.f32.mrb[0].mxu0
    %v3480 = vadd.f32 %v1776, %v3479
    %v3481 = vpop.f32.mrb[0].mxu0
    %v3482 = vadd.f32 %v1780, %v3481
    %3483 = vdwg.mxu0
    %3484 = vmatprep.subr.mxu0 %v316
    %3485 = vmatpush1.msra.mxu0 %v315
    %3486 = vmatprep.subr.mxu0 %v322
    %3487 = vmatpush1.msra.mxu0 %v321
    %3488 = vmatprep.subr.mxu0 %v328
    %3489 = vmatpush1.msra.mxu0 %v327
    %3490 = vmatprep.subr.mxu0 %v334
    %3491 = vmatpush1.msra.mxu0 %v333
    %3492 = vmatprep.subr.mxu0 %v340
    %3493 = vmatpush1.msra.mxu0 %v339
    %3494 = vmatprep.subr.mxu0 %v346
    %3495 = vmatpush1.msra.mxu0 %v345
    %3496 = vmatprep.subr.mxu0 %v352
    %3497 = vmatpush1.msra.mxu0 %v351
    %3498 = vmatprep.subr.mxu0 %v358
    %3499 = vmatpush1.msra.mxu0 %v357
    %3500 = vmatprep.subr.mxu0 %v364
    %3501 = vmatpush1.msra.mxu0 %v363
    %3502 = vmatprep.subr.mxu0 %v370
    %3503 = vmatpush1.msra.mxu0 %v369
    %3504 = vmatprep.subr.mxu0 %v376
    %3505 = vmatpush1.msra.mxu0 %v375
    %3506 = vmatprep.subr.mxu0 %v382
    %3507 = vmatpush1.msra.mxu0 %v381
    %3508 = vmatprep.subr.mxu0 %v388
    %3509 = vmatpush1.msra.mxu0 %v387
    %3510 = vmatprep.subr.mxu0 %v394
    %3511 = vmatpush1.msra.mxu0 %v393
    %3512 = vmatprep.subr.mxu0 %v400
    %3513 = vmatpush1.msra.mxu0 %v399
    %3514 = vmatprep.subr.mxu0 %v406
    %3515 = vmatpush1.msra.mxu0 %v405
    %3516 = vmatprep.subr.mxu0 %v412
    %3517 = vmatpush1.msra.mxu0 %v411
    %3518 = vmatprep.subr.mxu0 %v418
    %3519 = vmatpush1.msra.mxu0 %v417
    %3520 = vmatprep.subr.mxu0 %v424
    %3521 = vmatpush1.msra.mxu0 %v423
    %3522 = vmatprep.subr.mxu0 %v430
    %3523 = vmatpush1.msra.mxu0 %v429
    %3524 = vmatprep.subr.mxu0 %v436
    %3525 = vmatpush1.msra.mxu0 %v435
    %3526 = vmatprep.subr.mxu0 %v442
    %3527 = vmatpush1.msra.mxu0 %v441
    %3528 = vmatprep.subr.mxu0 %v448
    %3529 = vmatpush1.msra.mxu0 %v447
    %3530 = vmatprep.subr.mxu0 %v454
    %3531 = vmatpush1.msra.mxu0 %v453
    %3532 = vmatprep.subr.mxu0 %v460
    %3533 = vmatpush1.msra.mxu0 %v459
    %3534 = vmatprep.subr.mxu0 %v466
    %3535 = vmatpush1.msra.mxu0 %v465
    %3536 = vmatprep.subr.mxu0 %v472
    %3537 = vmatpush1.msra.mxu0 %v471
    %3538 = vmatprep.subr.mxu0 %v478
    %3539 = vmatpush1.msra.mxu0 %v477
    %3540 = vmatprep.subr.mxu0 %v484
    %3541 = vmatpush1.msra.mxu0 %v483
    %3542 = vmatprep.subr.mxu0 %v490
    %3543 = vmatpush1.msra.mxu0 %v489
    %3544 = vmatprep.subr.mxu0 %v496
    %3545 = vmatpush1.msra.mxu0 %v495
    %3546 = vmatprep.subr.mxu0 %v502
    %3547 = vmatpush1.msra.mxu0 %v501
    %3548 = vmatprep.mubr.f32.mxu0 %v2287
    %3549 = vmatmul.mubr.f32.gmra.mrb[0].mxu0 %v2286
    %v3550 = vpop.f32.mrb[0].mxu0
    %v3551 = vadd.f32 %v2004, %v3550
    %v3552 = vpop.f32.mrb[0].mxu0
    %v3553 = vadd.f32 %v2008, %v3552
    %3554 = vdwg.mxu0
    %3555 = vmatprep.subr.mxu0 %v318
    %3556 = vmatpush1.msra.mxu0 %v317
    %3557 = vmatprep.subr.mxu0 %v324
    %3558 = vmatpush1.msra.mxu0 %v323
    %3559 = vmatprep.subr.mxu0 %v330
    %3560 = vmatpush1.msra.mxu0 %v329
    %3561 = vmatprep.subr.mxu0 %v336
    %3562 = vmatpush1.msra.mxu0 %v335
    %3563 = vmatprep.subr.mxu0 %v342
    %3564 = vmatpush1.msra.mxu0 %v341
    %3565 = vmatprep.subr.mxu0 %v348
    %3566 = vmatpush1.msra.mxu0 %v347
    %3567 = vmatprep.subr.mxu0 %v354
    %3568 = vmatpush1.msra.mxu0 %v353
    %3569 = vmatprep.subr.mxu0 %v360
    %3570 = vmatpush1.msra.mxu0 %v359
    %3571 = vmatprep.subr.mxu0 %v366
    %3572 = vmatpush1.msra.mxu0 %v365
    %3573 = vmatprep.subr.mxu0 %v372
    %3574 = vmatpush1.msra.mxu0 %v371
    %3575 = vmatprep.subr.mxu0 %v378
    %3576 = vmatpush1.msra.mxu0 %v377
    %3577 = vmatprep.subr.mxu0 %v384
    %3578 = vmatpush1.msra.mxu0 %v383
    %3579 = vmatprep.subr.mxu0 %v390
    %3580 = vmatpush1.msra.mxu0 %v389
    %3581 = vmatprep.subr.mxu0 %v396
    %3582 = vmatpush1.msra.mxu0 %v395
    %3583 = vmatprep.subr.mxu0 %v402
    %3584 = vmatpush1.msra.mxu0 %v401
    %3585 = vmatprep.subr.mxu0 %v408
    %3586 = vmatpush1.msra.mxu0 %v407
    %3587 = vmatprep.subr.mxu0 %v414
    %3588 = vmatpush1.msra.mxu0 %v413
    %3589 = vmatprep.subr.mxu0 %v420
    %3590 = vmatpush1.msra.mxu0 %v419
    %3591 = vmatprep.subr.mxu0 %v426
    %3592 = vmatpush1.msra.mxu0 %v425
    %3593 = vmatprep.subr.mxu0 %v432
    %3594 = vmatpush1.msra.mxu0 %v431
    %3595 = vmatprep.subr.mxu0 %v438
    %3596 = vmatpush1.msra.mxu0 %v437
    %3597 = vmatprep.subr.mxu0 %v444
    %3598 = vmatpush1.msra.mxu0 %v443
    %3599 = vmatprep.subr.mxu0 %v450
    %3600 = vmatpush1.msra.mxu0 %v449
    %3601 = vmatprep.subr.mxu0 %v456
    %3602 = vmatpush1.msra.mxu0 %v455
    %3603 = vmatprep.subr.mxu0 %v462
    %3604 = vmatpush1.msra.mxu0 %v461
    %3605 = vmatprep.subr.mxu0 %v468
    %3606 = vmatpush1.msra.mxu0 %v467
    %3607 = vmatprep.subr.mxu0 %v474
    %3608 = vmatpush1.msra.mxu0 %v473
    %3609 = vmatprep.subr.mxu0 %v480
    %3610 = vmatpush1.msra.mxu0 %v479
    %3611 = vmatprep.subr.mxu0 %v486
    %3612 = vmatpush1.msra.mxu0 %v485
    %3613 = vmatprep.subr.mxu0 %v492
    %3614 = vmatpush1.msra.mxu0 %v491
    %3615 = vmatprep.subr.mxu0 %v498
    %3616 = vmatpush1.msra.mxu0 %v497
    %3617 = vmatprep.subr.mxu0 %v504
    %3618 = vmatpush1.msra.mxu0 %v503
    %3619 = vmatprep.mubr.f32.mxu0 %v2287
    %3620 = vmatmul.mubr.f32.gmra.mrb[0].mxu0 %v2286
    %v3621 = vpop.f32.mrb[0].mxu0
    %v3622 = vadd.f32 %v2012, %v3621
    %v3623 = vpop.f32.mrb[0].mxu0
    %v3624 = vadd.f32 %v2016, %v3623
    %3625 = vdwg.mxu0
    %3626 = vmatprep.subr.mxu0 %v320
    %3627 = vmatpush1.msra.mxu0 %v319
    %3628 = vmatprep.subr.mxu0 %v326
    %3629 = vmatpush1.msra.mxu0 %v325
    %3630 = vmatprep.subr.mxu0 %v332
    %3631 = vmatpush1.msra.mxu0 %v331
    %3632 = vmatprep.subr.mxu0 %v338
    %3633 = vmatpush1.msra.mxu0 %v337
    %3634 = vmatprep.subr.mxu0 %v344
    %3635 = vmatpush1.msra.mxu0 %v343
    %3636 = vmatprep.subr.mxu0 %v350
    %3637 = vmatpush1.msra.mxu0 %v349
    %3638 = vmatprep.subr.mxu0 %v356
    %3639 = vmatpush1.msra.mxu0 %v355
    %3640 = vmatprep.subr.mxu0 %v362
    %3641 = vmatpush1.msra.mxu0 %v361
    %3642 = vmatprep.subr.mxu0 %v368
    %3643 = vmatpush1.msra.mxu0 %v367
    %3644 = vmatprep.subr.mxu0 %v374
    %3645 = vmatpush1.msra.mxu0 %v373
    %3646 = vmatprep.subr.mxu0 %v380
    %3647 = vmatpush1.msra.mxu0 %v379
    %3648 = vmatprep.subr.mxu0 %v386
    %3649 = vmatpush1.msra.mxu0 %v385
    %3650 = vmatprep.subr.mxu0 %v392
    %3651 = vmatpush1.msra.mxu0 %v391
    %3652 = vmatprep.subr.mxu0 %v398
    %3653 = vmatpush1.msra.mxu0 %v397
    %3654 = vmatprep.subr.mxu0 %v404
    %3655 = vmatpush1.msra.mxu0 %v403
    %3656 = vmatprep.subr.mxu0 %v410
    %3657 = vmatpush1.msra.mxu0 %v409
    %3658 = vmatprep.subr.mxu0 %v416
    %3659 = vmatpush1.msra.mxu0 %v415
    %3660 = vmatprep.subr.mxu0 %v422
    %3661 = vmatpush1.msra.mxu0 %v421
    %3662 = vmatprep.subr.mxu0 %v428
    %3663 = vmatpush1.msra.mxu0 %v427
    %3664 = vmatprep.subr.mxu0 %v434
    %3665 = vmatpush1.msra.mxu0 %v433
    %3666 = vmatprep.subr.mxu0 %v440
    %3667 = vmatpush1.msra.mxu0 %v439
    %3668 = vmatprep.subr.mxu0 %v446
    %3669 = vmatpush1.msra.mxu0 %v445
    %3670 = vmatprep.subr.mxu0 %v452
    %3671 = vmatpush1.msra.mxu0 %v451
    %3672 = vmatprep.subr.mxu0 %v458
    %3673 = vmatpush1.msra.mxu0 %v457
    %3674 = vmatprep.subr.mxu0 %v464
    %3675 = vmatpush1.msra.mxu0 %v463
    %3676 = vmatprep.subr.mxu0 %v470
    %3677 = vmatpush1.msra.mxu0 %v469
    %3678 = vmatprep.subr.mxu0 %v476
    %3679 = vmatpush1.msra.mxu0 %v475
    %3680 = vmatprep.subr.mxu0 %v482
    %3681 = vmatpush1.msra.mxu0 %v481
    %3682 = vmatprep.subr.mxu0 %v488
    %3683 = vmatpush1.msra.mxu0 %v487
    %3684 = vmatprep.subr.mxu0 %v494
    %3685 = vmatpush1.msra.mxu0 %v493
    %3686 = vmatprep.subr.mxu0 %v500
    %3687 = vmatpush1.msra.mxu0 %v499
    %3688 = vmatprep.subr.mxu0 %v506
    %3689 = vmatpush1.msra.mxu0 %v505
    %3690 = vmatprep.mubr.f32.mxu0 %v2287
    %3691 = vmatmul.mubr.f32.gmra.mrb[0].mxu0 %v2286
    %v3692 = vpop.f32.mrb[0].mxu0
    %v3693 = vadd.f32 %v2020, %v3692
    %v3694 = vpop.f32.mrb[0].mxu0
    %v3695 = vadd.f32 %v2024, %v3694
    %3696 = vdwg.mxu0
    %v3697 = vadd.f32 %v3338, %v3551
    %v3698 = vadd.f32 %v3340, %v3553
    %v3699 = vxor.u32 %v3697, 2147483648
    %v3700 = vxor.u32 %v3698, 2147483648
    %v3701 = vmul.f32 %v3699, 1.442695
    %v3702 = vpow.pop %v3701
    %v3703 = vmul.f32 %v3700, 1.442695
    %v3704 = vpow.pop %v3703
    %v3705 = vadd.f32 %v3702, 1.0
    %v3706 = vadd.f32 %v3704, 1.0
    %v3707 = vrcp.pop %v3705
    %v3708 = vmul.f32 1.0, %v3707
    %v3709 = vrcp.pop %v3706
    %v3710 = vmul.f32 1.0, %v3709
    %v3711 = vadd.f32 %v3409, %v3622
    %v3712 = vadd.f32 %v3411, %v3624
    %v3713 = vxor.u32 %v3711, 2147483648
    %v3714 = vxor.u32 %v3712, 2147483648
    %v3715 = vmul.f32 %v3713, 1.442695
    %v3716 = vpow.pop %v3715
    %v3717 = vmul.f32 %v3714, 1.442695
    %v3718 = vpow.pop %v3717
    %v3719 = vadd.f32 %v3716, 1.0
    %v3720 = vadd.f32 %v3718, 1.0
    %v3721 = vrcp.pop %v3719
    %v3722 = vmul.f32 1.0, %v3721
    %v3723 = vrcp.pop %v3720
    %v3724 = vmul.f32 1.0, %v3723
    %v3725 = vmul.f32 %v3708, %v3693
    %v3726 = vmul.f32 %v3710, %v3695
    %v3727 = vadd.f32 %v3480, %v3725
    %v3728 = vadd.f32 %v3482, %v3726
    %v3729 = vtanh.pop %v3727
    %v3730 = vtanh.pop %v3728
    %v3731 = vsub.f32 1.0, %v3722
    %v3732 = vsub.f32 1.0, %v3724
    %v3733 = vmul.f32 %v3731, %v3729
    %v3734 = vmul.f32 %v3732, %v3730
    %v3735 = vmul.f32 %v3722, %v2286
    %v3736 = vmul.f32 %v3724, %v2287
    %v3737 = vadd.f32 %v3733, %v3735
    %v3738 = vadd.f32 %v3734, %v3736
    %v3739 = vadd.f32 %v3737, %v121
    %v3740 = vadd.f32 %v3738, %v122
    %s3741 = scalar_lea.vmem [#allocation7], 1024
    %v3742 = vld [vmem:[%s3741] sm:$0xff]
    %v3743 = vld [vmem:[%s3741 + $0x8] sm:$0xff]
    %v3744 = vld [vmem:[%s3741 + $0x10] sm:$0xff]
    %v3745 = vld [vmem:[%s3741 + $0x18] sm:$0xff]
    %v3746 = vld [vmem:[%s3741 + $0x20] sm:$0xff]
    %v3747 = vld [vmem:[%s3741 + $0x28] sm:$0xff]
    %v3748 = vld [vmem:[%s3741 + $0x30] sm:$0xff]
    %v3749 = vld [vmem:[%s3741 + $0x38] sm:$0xff]
    %v3750 = vld [vmem:[%s3741 + $0x40] sm:$0xff]
    %v3751 = vld [vmem:[%s3741 + $0x48] sm:$0xff]
    %v3752 = vld [vmem:[%s3741 + $0x50] sm:$0xff]
    %v3753 = vld [vmem:[%s3741 + $0x58] sm:$0xff]
    %v3754 = vld [vmem:[%s3741 + $0x60] sm:$0xff]
    %v3755 = vld [vmem:[%s3741 + $0x68] sm:$0xff]
    %v3756 = vld [vmem:[%s3741 + $0x70] sm:$0xff]
    %v3757 = vld [vmem:[%s3741 + $0x78] sm:$0xff]
    %v3758 = vld [vmem:[%s3741 + $0x80] sm:$0xff]
    %v3759 = vld [vmem:[%s3741 + $0x88] sm:$0xff]
    %v3760 = vld [vmem:[%s3741 + $0x90] sm:$0xff]
    %v3761 = vld [vmem:[%s3741 + $0x98] sm:$0xff]
    %v3762 = vld [vmem:[%s3741 + $0xa0] sm:$0xff]
    %v3763 = vld [vmem:[%s3741 + $0xa8] sm:$0xff]
    %v3764 = vld [vmem:[%s3741 + $0xb0] sm:$0xff]
    %v3765 = vld [vmem:[%s3741 + $0xb8] sm:$0xff]
    %v3766 = vld [vmem:[%s3741 + $0xc0] sm:$0xff]
    %v3767 = vld [vmem:[%s3741 + $0xc8] sm:$0xff]
    %v3768 = vld [vmem:[%s3741 + $0xd0] sm:$0xff]
    %v3769 = vld [vmem:[%s3741 + $0xd8] sm:$0xff]
    %v3770 = vld [vmem:[%s3741 + $0xe0] sm:$0xff]
    %v3771 = vld [vmem:[%s3741 + $0xe8] sm:$0xff]
    %v3772 = vld [vmem:[%s3741 + $0xf0] sm:$0xff]
    %v3773 = vld [vmem:[%s3741 + $0xf8] sm:$0xff]
    %v3774 = vld [vmem:[%s3741 + $0x100] sm:$0xff]
    %v3775 = vld [vmem:[%s3741 + $0x108] sm:$0xff]
    %v3776 = vld [vmem:[%s3741 + $0x110] sm:$0xff]
    %v3777 = vld [vmem:[%s3741 + $0x118] sm:$0xff]
    %v3778 = vld [vmem:[%s3741 + $0x120] sm:$0xff]
    %v3779 = vld [vmem:[%s3741 + $0x128] sm:$0xff]
    %v3780 = vld [vmem:[%s3741 + $0x130] sm:$0xff]
    %v3781 = vld [vmem:[%s3741 + $0x138] sm:$0xff]
    %v3782 = vld [vmem:[%s3741 + $0x140] sm:$0xff]
    %v3783 = vld [vmem:[%s3741 + $0x148] sm:$0xff]
    %v3784 = vld [vmem:[%s3741 + $0x150] sm:$0xff]
    %v3785 = vld [vmem:[%s3741 + $0x158] sm:$0xff]
    %v3786 = vld [vmem:[%s3741 + $0x160] sm:$0xff]
    %v3787 = vld [vmem:[%s3741 + $0x168] sm:$0xff]
    %v3788 = vld [vmem:[%s3741 + $0x170] sm:$0xff]
    %v3789 = vld [vmem:[%s3741 + $0x178] sm:$0xff]
    %v3790 = vld [vmem:[%s3741 + $0x180] sm:$0xff]
    %v3791 = vld [vmem:[%s3741 + $0x188] sm:$0xff]
    %v3792 = vld [vmem:[%s3741 + $0x190] sm:$0xff]
    %v3793 = vld [vmem:[%s3741 + $0x198] sm:$0xff]
    %v3794 = vld [vmem:[%s3741 + $0x1a0] sm:$0xff]
    %v3795 = vld [vmem:[%s3741 + $0x1a8] sm:$0xff]
    %v3796 = vld [vmem:[%s3741 + $0x1b0] sm:$0xff]
    %v3797 = vld [vmem:[%s3741 + $0x1b8] sm:$0xff]
    %v3798 = vld [vmem:[%s3741 + $0x1c0] sm:$0xff]
    %v3799 = vld [vmem:[%s3741 + $0x1c8] sm:$0xff]
    %v3800 = vld [vmem:[%s3741 + $0x1d0] sm:$0xff]
    %v3801 = vld [vmem:[%s3741 + $0x1d8] sm:$0xff]
    %v3802 = vld [vmem:[%s3741 + $0x1e0] sm:$0xff]
    %v3803 = vld [vmem:[%s3741 + $0x1e8] sm:$0xff]
    %v3804 = vld [vmem:[%s3741 + $0x1f0] sm:$0xff]
    %v3805 = vld [vmem:[%s3741 + $0x1f8] sm:$0xff]
    %3806 = vmatprep.subr.mxu0 %v3743
    %3807 = vmatpush1.msra.mxu0 %v3742
    %3808 = vmatprep.subr.mxu0 %v3745
    %3809 = vmatpush1.msra.mxu0 %v3744
    %3810 = vmatprep.subr.mxu0 %v3747
    %3811 = vmatpush1.msra.mxu0 %v3746
    %3812 = vmatprep.subr.mxu0 %v3749
    %3813 = vmatpush1.msra.mxu0 %v3748
    %3814 = vmatprep.subr.mxu0 %v3751
    %3815 = vmatpush1.msra.mxu0 %v3750
    %3816 = vmatprep.subr.mxu0 %v3753
    %3817 = vmatpush1.msra.mxu0 %v3752
    %3818 = vmatprep.subr.mxu0 %v3755
    %3819 = vmatpush1.msra.mxu0 %v3754
    %3820 = vmatprep.subr.mxu0 %v3757
    %3821 = vmatpush1.msra.mxu0 %v3756
    %3822 = vmatprep.subr.mxu0 %v3759
    %3823 = vmatpush1.msra.mxu0 %v3758
    %3824 = vmatprep.subr.mxu0 %v3761
    %3825 = vmatpush1.msra.mxu0 %v3760
    %3826 = vmatprep.subr.mxu0 %v3763
    %3827 = vmatpush1.msra.mxu0 %v3762
    %3828 = vmatprep.subr.mxu0 %v3765
    %3829 = vmatpush1.msra.mxu0 %v3764
    %3830 = vmatprep.subr.mxu0 %v3767
    %3831 = vmatpush1.msra.mxu0 %v3766
    %3832 = vmatprep.subr.mxu0 %v3769
    %3833 = vmatpush1.msra.mxu0 %v3768
    %3834 = vmatprep.subr.mxu0 %v3771
    %3835 = vmatpush1.msra.mxu0 %v3770
    %3836 = vmatprep.subr.mxu0 %v3773
    %3837 = vmatpush1.msra.mxu0 %v3772
    %3838 = vmatprep.subr.mxu0 %v3775
    %3839 = vmatpush1.msra.mxu0 %v3774
    %3840 = vmatprep.subr.mxu0 %v3777
    %3841 = vmatpush1.msra.mxu0 %v3776
    %3842 = vmatprep.subr.mxu0 %v3779
    %3843 = vmatpush1.msra.mxu0 %v3778
    %3844 = vmatprep.subr.mxu0 %v3781
    %3845 = vmatpush1.msra.mxu0 %v3780
    %3846 = vmatprep.subr.mxu0 %v3783
    %3847 = vmatpush1.msra.mxu0 %v3782
    %3848 = vmatprep.subr.mxu0 %v3785
    %3849 = vmatpush1.msra.mxu0 %v3784
    %3850 = vmatprep.subr.mxu0 %v3787
    %3851 = vmatpush1.msra.mxu0 %v3786
    %3852 = vmatprep.subr.mxu0 %v3789
    %3853 = vmatpush1.msra.mxu0 %v3788
    %3854 = vmatprep.subr.mxu0 %v3791
    %3855 = vmatpush1.msra.mxu0 %v3790
    %3856 = vmatprep.subr.mxu0 %v3793
    %3857 = vmatpush1.msra.mxu0 %v3792
    %3858 = vmatprep.subr.mxu0 %v3795
    %3859 = vmatpush1.msra.mxu0 %v3794
    %3860 = vmatprep.subr.mxu0 %v3797
    %3861 = vmatpush1.msra.mxu0 %v3796
    %3862 = vmatprep.subr.mxu0 %v3799
    %3863 = vmatpush1.msra.mxu0 %v3798
    %3864 = vmatprep.subr.mxu0 %v3801
    %3865 = vmatpush1.msra.mxu0 %v3800
    %3866 = vmatprep.subr.mxu0 %v3803
    %3867 = vmatpush1.msra.mxu0 %v3802
    %3868 = vmatprep.subr.mxu0 %v3805
    %3869 = vmatpush1.msra.mxu0 %v3804
    %3870 = vmatprep.mubr.f32.mxu0 %v3740
    %3871 = vmatmul.mubr.f32.gmra.mrb[0].mxu0 %v3739
    %v3872 = vpop.f32.mrb[0].mxu0
    %v3873 = vadd.f32 0.0, %v3872
    %v3874 = vpop.f32.mrb[0].mxu0
    %v3875 = vadd.f32 0.0, %v3874
    %3876 = vdwg.mxu0
    %3878 = vrot.lane.b32.xlu0 %v3873, 96
    %v3879 = vpop.permute.xlu0 %3878
    %3881 = vrot.lane.b32.xlu0 %v3873, 64
    %v3882 = vpop.permute.xlu0 %3881
    %3884 = vrot.lane.b32.xlu0 %v3873, 32
    %v3885 = vpop.permute.xlu0 %3884
    %3888 = vrot.lane.b32.xlu0 %v3875, 96
    %v3889 = vpop.permute.xlu0 %3888
    %3891 = vrot.lane.b32.xlu0 %v3875, 64
    %v3892 = vpop.permute.xlu0 %3891
    %3894 = vrot.lane.b32.xlu0 %v3875, 32
    %v3895 = vpop.permute.xlu0 %3894
    %v3897 = vcombine.low %v3873, %v3882
    %v3898 = vcombine.high %v3873, %v3882
    %v3900 = vunpack.c.l.s4 1983009808
    %v3901 = vunpack.c.0.s8 %v3900
    %v3902 = vlaneseq
    %v3903 = vshrl.u32 %v3902, 7
    %v3904 = vsub.s32 %v3901, %v3903
    %v3905 = vrot.slane %v3897, %v3904
    %v3907 = vunpack.c.l.s4 1983009808
    %v3908 = vunpack.c.0.s8 %v3907
    %v3909 = vlaneseq
    %v3910 = vshrl.u32 %v3909, 7
    %v3911 = vsub.s32 %v3908, %v3910
    %v3912 = vrot.slane %v3898, %v3911
    %v3913 = vcombine.low %v3879, %v3885
    %v3914 = vcombine.high %v3879, %v3885
    %v3916 = vunpack.c.l.s4 1983009808
    %v3917 = vunpack.c.0.s8 %v3916
    %v3918 = vlaneseq
    %v3919 = vshrl.u32 %v3918, 7
    %v3920 = vsub.s32 %v3917, %v3919
    %v3921 = vrot.slane %v3913, %v3920
    %v3923 = vunpack.c.l.s4 1983009808
    %v3924 = vunpack.c.0.s8 %v3923
    %v3925 = vlaneseq
    %v3926 = vshrl.u32 %v3925, 7
    %v3927 = vsub.s32 %v3924, %v3926
    %v3928 = vrot.slane %v3914, %v3927
    %v3929 = vcombine.low %v3875, %v3892
    %v3930 = vcombine.high %v3875, %v3892
    %v3932 = vunpack.c.l.s4 1983009808
    %v3933 = vunpack.c.0.s8 %v3932
    %v3934 = vlaneseq
    %v3935 = vshrl.u32 %v3934, 7
    %v3936 = vsub.s32 %v3933, %v3935
    %v3937 = vrot.slane %v3929, %v3936
    %v3939 = vunpack.c.l.s4 1983009808
    %v3940 = vunpack.c.0.s8 %v3939
    %v3941 = vlaneseq
    %v3942 = vshrl.u32 %v3941, 7
    %v3943 = vsub.s32 %v3940, %v3942
    %v3944 = vrot.slane %v3930, %v3943
    %v3945 = vcombine.low %v3889, %v3895
    %v3946 = vcombine.high %v3889, %v3895
    %v3948 = vunpack.c.l.s4 1983009808
    %v3949 = vunpack.c.0.s8 %v3948
    %v3950 = vlaneseq
    %v3951 = vshrl.u32 %v3950, 7
    %v3952 = vsub.s32 %v3949, %v3951
    %v3953 = vrot.slane %v3945, %v3952
    %v3955 = vunpack.c.l.s4 1983009808
    %v3956 = vunpack.c.0.s8 %v3955
    %v3957 = vlaneseq
    %v3958 = vshrl.u32 %v3957, 7
    %v3959 = vsub.s32 %v3956, %v3958
    %v3960 = vrot.slane %v3946, %v3959
    %v3961 = vcombine.low %v3905, %v3921
    %v3962 = vcombine.high %v3905, %v3921
    %v3964 = vunpack.c.l.s4 1934713408
    %v3965 = vunpack.c.0.s8 %v3964
    %v3966 = vlaneseq
    %v3967 = vshrl.u32 %v3966, 7
    %v3968 = vsub.s32 %v3965, %v3967
    %v3969 = vrot.slane %v3961, %v3968
    %v3971 = vunpack.c.l.s4 1934713408
    %v3972 = vunpack.c.0.s8 %v3971
    %v3973 = vlaneseq
    %v3974 = vshrl.u32 %v3973, 7
    %v3975 = vsub.s32 %v3972, %v3974
    %v3976 = vrot.slane %v3962, %v3975
    %v3977 = vcombine.low %v3912, %v3928
    %v3978 = vcombine.high %v3912, %v3928
    %v3980 = vunpack.c.l.s4 1934713408
    %v3981 = vunpack.c.0.s8 %v3980
    %v3982 = vlaneseq
    %v3983 = vshrl.u32 %v3982, 7
    %v3984 = vsub.s32 %v3981, %v3983
    %v3985 = vrot.slane %v3977, %v3984
    %v3987 = vunpack.c.l.s4 1934713408
    %v3988 = vunpack.c.0.s8 %v3987
    %v3989 = vlaneseq
    %v3990 = vshrl.u32 %v3989, 7
    %v3991 = vsub.s32 %v3988, %v3990
    %v3992 = vrot.slane %v3978, %v3991
    %v3993 = vcombine.low %v3937, %v3953
    %v3994 = vcombine.high %v3937, %v3953
    %v3996 = vunpack.c.l.s4 1934713408
    %v3997 = vunpack.c.0.s8 %v3996
    %v3998 = vlaneseq
    %v3999 = vshrl.u32 %v3998, 7
    %v4000 = vsub.s32 %v3997, %v3999
    %v4001 = vrot.slane %v3993, %v4000
    %v4003 = vunpack.c.l.s4 1934713408
    %v4004 = vunpack.c.0.s8 %v4003
    %v4005 = vlaneseq
    %v4006 = vshrl.u32 %v4005, 7
    %v4007 = vsub.s32 %v4004, %v4006
    %v4008 = vrot.slane %v3994, %v4007
    %v4009 = vcombine.low %v3944, %v3960
    %v4010 = vcombine.high %v3944, %v3960
    %v4012 = vunpack.c.l.s4 1934713408
    %v4013 = vunpack.c.0.s8 %v4012
    %v4014 = vlaneseq
    %v4015 = vshrl.u32 %v4014, 7
    %v4016 = vsub.s32 %v4013, %v4015
    %v4017 = vrot.slane %v4009, %v4016
    %v4019 = vunpack.c.l.s4 1934713408
    %v4020 = vunpack.c.0.s8 %v4019
    %v4021 = vlaneseq
    %v4022 = vshrl.u32 %v4021, 7
    %v4023 = vsub.s32 %v4020, %v4022
    %v4024 = vrot.slane %v4010, %v4023
    %v4025 = vcombine.low %v3969, %v4001
    %v4026 = vcombine.high %v3969, %v4001
    %v4027 = vcombine.low %v3976, %v4008
    %v4028 = vcombine.high %v3976, %v4008
    %v4029 = vcombine.low %v3985, %v4017
    %v4030 = vcombine.high %v3985, %v4017
    %v4031 = vcombine.low %v3992, %v4024
    %v4032 = vcombine.high %v3992, %v4024
    %v4033 = vlaneseq
    %v4034 = vshrl.u32 %v4033, 7
    %v4035 = vsub.s32 0, %v4034
    %v4036 = vrot.slane %v4025, %v4035
    %v4037 = vlaneseq
    %v4038 = vshrl.u32 %v4037, 7
    %v4039 = vsub.s32 0, %v4038
    %v4040 = vrot.slane %v4026, %v4039
    %v4041 = vlaneseq
    %v4042 = vshrl.u32 %v4041, 7
    %v4043 = vsub.s32 0, %v4042
    %v4044 = vrot.slane %v4027, %v4043
    %v4045 = vlaneseq
    %v4046 = vshrl.u32 %v4045, 7
    %v4047 = vsub.s32 0, %v4046
    %v4048 = vrot.slane %v4028, %v4047
    %v4049 = vlaneseq
    %v4050 = vshrl.u32 %v4049, 7
    %v4051 = vsub.s32 0, %v4050
    %v4052 = vrot.slane %v4029, %v4051
    %v4053 = vlaneseq
    %v4054 = vshrl.u32 %v4053, 7
    %v4055 = vsub.s32 0, %v4054
    %v4056 = vrot.slane %v4030, %v4055
    %v4057 = vlaneseq
    %v4058 = vshrl.u32 %v4057, 7
    %v4059 = vsub.s32 0, %v4058
    %v4060 = vrot.slane %v4031, %v4059
    %v4061 = vlaneseq
    %v4062 = vshrl.u32 %v4061, 7
    %v4063 = vsub.s32 0, %v4062
    %v4064 = vrot.slane %v4032, %v4063
    %v4065 = vmul.f32 %v803, %v4036
    %v4066 = vmul.f32 %v808, %v4040
    %v4067 = vmul.f32 %v813, %v4044
    %v4068 = vmul.f32 %v818, %v4048
    %v4069 = vmul.f32 %v823, %v4052
    %v4070 = vmul.f32 %v828, %v4056
    %v4071 = vmul.f32 %v833, %v4060
    %v4072 = vmul.f32 %v838, %v4064
    %v4073 = vlaneseq
    %v4074 = vshrl.u32 %v4073, 7
    %v4075 = vsub.s32 1, %v4074
    %v4076 = vrot.slane %v4025, %v4075
    %v4077 = vlaneseq
    %v4078 = vshrl.u32 %v4077, 7
    %v4079 = vsub.s32 1, %v4078
    %v4080 = vrot.slane %v4026, %v4079
    %v4081 = vlaneseq
    %v4082 = vshrl.u32 %v4081, 7
    %v4083 = vsub.s32 1, %v4082
    %v4084 = vrot.slane %v4027, %v4083
    %v4085 = vlaneseq
    %v4086 = vshrl.u32 %v4085, 7
    %v4087 = vsub.s32 1, %v4086
    %v4088 = vrot.slane %v4028, %v4087
    %v4089 = vlaneseq
    %v4090 = vshrl.u32 %v4089, 7
    %v4091 = vsub.s32 1, %v4090
    %v4092 = vrot.slane %v4029, %v4091
    %v4093 = vlaneseq
    %v4094 = vshrl.u32 %v4093, 7
    %v4095 = vsub.s32 1, %v4094
    %v4096 = vrot.slane %v4030, %v4095
    %v4097 = vlaneseq
    %v4098 = vshrl.u32 %v4097, 7
    %v4099 = vsub.s32 1, %v4098
    %v4100 = vrot.slane %v4031, %v4099
    %v4101 = vlaneseq
    %v4102 = vshrl.u32 %v4101, 7
    %v4103 = vsub.s32 1, %v4102
    %v4104 = vrot.slane %v4032, %v4103
    %v4105 = vmul.f32 %v882, %v4076
    %v4106 = vmul.f32 %v886, %v4080
    %v4107 = vmul.f32 %v890, %v4084
    %v4108 = vmul.f32 %v894, %v4088
    %v4109 = vmul.f32 %v898, %v4092
    %v4110 = vmul.f32 %v902, %v4096
    %v4111 = vmul.f32 %v906, %v4100
    %v4112 = vmul.f32 %v910, %v4104
    %v4113 = vadd.f32 %v4065, %v4105
    %v4114 = vadd.f32 %v4066, %v4106
    %v4115 = vadd.f32 %v4067, %v4107
    %v4116 = vadd.f32 %v4068, %v4108
    %v4117 = vadd.f32 %v4069, %v4109
    %v4118 = vadd.f32 %v4070, %v4110
    %v4119 = vadd.f32 %v4071, %v4111
    %v4120 = vadd.f32 %v4072, %v4112
    %v4121 = vlaneseq
    %v4122 = vshrl.u32 %v4121, 7
    %v4123 = vsub.s32 2, %v4122
    %v4124 = vrot.slane %v4025, %v4123
    %v4125 = vlaneseq
    %v4126 = vshrl.u32 %v4125, 7
    %v4127 = vsub.s32 2, %v4126
    %v4128 = vrot.slane %v4026, %v4127
    %v4129 = vlaneseq
    %v4130 = vshrl.u32 %v4129, 7
    %v4131 = vsub.s32 2, %v4130
    %v4132 = vrot.slane %v4027, %v4131
    %v4133 = vlaneseq
    %v4134 = vshrl.u32 %v4133, 7
    %v4135 = vsub.s32 2, %v4134
    %v4136 = vrot.slane %v4028, %v4135
    %v4137 = vlaneseq
    %v4138 = vshrl.u32 %v4137, 7
    %v4139 = vsub.s32 2, %v4138
    %v4140 = vrot.slane %v4029, %v4139
    %v4141 = vlaneseq
    %v4142 = vshrl.u32 %v4141, 7
    %v4143 = vsub.s32 2, %v4142
    %v4144 = vrot.slane %v4030, %v4143
    %v4145 = vlaneseq
    %v4146 = vshrl.u32 %v4145, 7
    %v4147 = vsub.s32 2, %v4146
    %v4148 = vrot.slane %v4031, %v4147
    %v4149 = vlaneseq
    %v4150 = vshrl.u32 %v4149, 7
    %v4151 = vsub.s32 2, %v4150
    %v4152 = vrot.slane %v4032, %v4151
    %v4153 = vmul.f32 %v962, %v4124
    %v4154 = vmul.f32 %v966, %v4128
    %v4155 = vmul.f32 %v970, %v4132
    %v4156 = vmul.f32 %v974, %v4136
    %v4157 = vmul.f32 %v978, %v4140
    %v4158 = vmul.f32 %v982, %v4144
    %v4159 = vmul.f32 %v986, %v4148
    %v4160 = vmul.f32 %v990, %v4152
    %v4161 = vadd.f32 %v4113, %v4153
    %v4162 = vadd.f32 %v4114, %v4154
    %v4163 = vadd.f32 %v4115, %v4155
    %v4164 = vadd.f32 %v4116, %v4156
    %v4165 = vadd.f32 %v4117, %v4157
    %v4166 = vadd.f32 %v4118, %v4158
    %v4167 = vadd.f32 %v4119, %v4159
    %v4168 = vadd.f32 %v4120, %v4160
    %v4169 = vlaneseq
    %v4170 = vshrl.u32 %v4169, 7
    %v4171 = vsub.s32 3, %v4170
    %v4172 = vrot.slane %v4025, %v4171
    %v4173 = vlaneseq
    %v4174 = vshrl.u32 %v4173, 7
    %v4175 = vsub.s32 3, %v4174
    %v4176 = vrot.slane %v4026, %v4175
    %v4177 = vlaneseq
    %v4178 = vshrl.u32 %v4177, 7
    %v4179 = vsub.s32 3, %v4178
    %v4180 = vrot.slane %v4027, %v4179
    %v4181 = vlaneseq
    %v4182 = vshrl.u32 %v4181, 7
    %v4183 = vsub.s32 3, %v4182
    %v4184 = vrot.slane %v4028, %v4183
    %v4185 = vlaneseq
    %v4186 = vshrl.u32 %v4185, 7
    %v4187 = vsub.s32 3, %v4186
    %v4188 = vrot.slane %v4029, %v4187
    %v4189 = vlaneseq
    %v4190 = vshrl.u32 %v4189, 7
    %v4191 = vsub.s32 3, %v4190
    %v4192 = vrot.slane %v4030, %v4191
    %v4193 = vlaneseq
    %v4194 = vshrl.u32 %v4193, 7
    %v4195 = vsub.s32 3, %v4194
    %v4196 = vrot.slane %v4031, %v4195
    %v4197 = vlaneseq
    %v4198 = vshrl.u32 %v4197, 7
    %v4199 = vsub.s32 3, %v4198
    %v4200 = vrot.slane %v4032, %v4199
    %v4201 = vmul.f32 %v1042, %v4172
    %v4202 = vmul.f32 %v1046, %v4176
    %v4203 = vmul.f32 %v1050, %v4180
    %v4204 = vmul.f32 %v1054, %v4184
    %v4205 = vmul.f32 %v1058, %v4188
    %v4206 = vmul.f32 %v1062, %v4192
    %v4207 = vmul.f32 %v1066, %v4196
    %v4208 = vmul.f32 %v1070, %v4200
    %v4209 = vadd.f32 %v4161, %v4201
    %v4210 = vadd.f32 %v4162, %v4202
    %v4211 = vadd.f32 %v4163, %v4203
    %v4212 = vadd.f32 %v4164, %v4204
    %v4213 = vadd.f32 %v4165, %v4205
    %v4214 = vadd.f32 %v4166, %v4206
    %v4215 = vadd.f32 %v4167, %v4207
    %v4216 = vadd.f32 %v4168, %v4208
    %v4217 = vlaneseq
    %v4218 = vshrl.u32 %v4217, 7
    %v4219 = vsub.s32 4, %v4218
    %v4220 = vrot.slane %v4025, %v4219
    %v4221 = vlaneseq
    %v4222 = vshrl.u32 %v4221, 7
    %v4223 = vsub.s32 4, %v4222
    %v4224 = vrot.slane %v4026, %v4223
    %v4225 = vlaneseq
    %v4226 = vshrl.u32 %v4225, 7
    %v4227 = vsub.s32 4, %v4226
    %v4228 = vrot.slane %v4027, %v4227
    %v4229 = vlaneseq
    %v4230 = vshrl.u32 %v4229, 7
    %v4231 = vsub.s32 4, %v4230
    %v4232 = vrot.slane %v4028, %v4231
    %v4233 = vlaneseq
    %v4234 = vshrl.u32 %v4233, 7
    %v4235 = vsub.s32 4, %v4234
    %v4236 = vrot.slane %v4029, %v4235
    %v4237 = vlaneseq
    %v4238 = vshrl.u32 %v4237, 7
    %v4239 = vsub.s32 4, %v4238
    %v4240 = vrot.slane %v4030, %v4239
    %v4241 = vlaneseq
    %v4242 = vshrl.u32 %v4241, 7
    %v4243 = vsub.s32 4, %v4242
    %v4244 = vrot.slane %v4031, %v4243
    %v4245 = vlaneseq
    %v4246 = vshrl.u32 %v4245, 7
    %v4247 = vsub.s32 4, %v4246
    %v4248 = vrot.slane %v4032, %v4247
    %v4249 = vmul.f32 %v1122, %v4220
    %v4250 = vmul.f32 %v1126, %v4224
    %v4251 = vmul.f32 %v1130, %v4228
    %v4252 = vmul.f32 %v1134, %v4232
    %v4253 = vmul.f32 %v1138, %v4236
    %v4254 = vmul.f32 %v1142, %v4240
    %v4255 = vmul.f32 %v1146, %v4244
    %v4256 = vmul.f32 %v1150, %v4248
    %v4257 = vadd.f32 %v4209, %v4249
    %v4258 = vadd.f32 %v4210, %v4250
    %v4259 = vadd.f32 %v4211, %v4251
    %v4260 = vadd.f32 %v4212, %v4252
    %v4261 = vadd.f32 %v4213, %v4253
    %v4262 = vadd.f32 %v4214, %v4254
    %v4263 = vadd.f32 %v4215, %v4255
    %v4264 = vadd.f32 %v4216, %v4256
    %v4265 = vlaneseq
    %v4266 = vshrl.u32 %v4265, 7
    %v4267 = vsub.s32 5, %v4266
    %v4268 = vrot.slane %v4025, %v4267
    %v4269 = vlaneseq
    %v4270 = vshrl.u32 %v4269, 7
    %v4271 = vsub.s32 5, %v4270
    %v4272 = vrot.slane %v4026, %v4271
    %v4273 = vlaneseq
    %v4274 = vshrl.u32 %v4273, 7
    %v4275 = vsub.s32 5, %v4274
    %v4276 = vrot.slane %v4027, %v4275
    %v4277 = vlaneseq
    %v4278 = vshrl.u32 %v4277, 7
    %v4279 = vsub.s32 5, %v4278
    %v4280 = vrot.slane %v4028, %v4279
    %v4281 = vlaneseq
    %v4282 = vshrl.u32 %v4281, 7
    %v4283 = vsub.s32 5, %v4282
    %v4284 = vrot.slane %v4029, %v4283
    %v4285 = vlaneseq
    %v4286 = vshrl.u32 %v4285, 7
    %v4287 = vsub.s32 5, %v4286
    %v4288 = vrot.slane %v4030, %v4287
    %v4289 = vlaneseq
    %v4290 = vshrl.u32 %v4289, 7
    %v4291 = vsub.s32 5, %v4290
    %v4292 = vrot.slane %v4031, %v4291
    %v4293 = vlaneseq
    %v4294 = vshrl.u32 %v4293, 7
    %v4295 = vsub.s32 5, %v4294
    %v4296 = vrot.slane %v4032, %v4295
    %v4297 = vmul.f32 %v1202, %v4268
    %v4298 = vmul.f32 %v1206, %v4272
    %v4299 = vmul.f32 %v1210, %v4276
    %v4300 = vmul.f32 %v1214, %v4280
    %v4301 = vmul.f32 %v1218, %v4284
    %v4302 = vmul.f32 %v1222, %v4288
    %v4303 = vmul.f32 %v1226, %v4292
    %v4304 = vmul.f32 %v1230, %v4296
    %v4305 = vadd.f32 %v4257, %v4297
    %v4306 = vadd.f32 %v4258, %v4298
    %v4307 = vadd.f32 %v4259, %v4299
    %v4308 = vadd.f32 %v4260, %v4300
    %v4309 = vadd.f32 %v4261, %v4301
    %v4310 = vadd.f32 %v4262, %v4302
    %v4311 = vadd.f32 %v4263, %v4303
    %v4312 = vadd.f32 %v4264, %v4304
    %v4313 = vlaneseq
    %v4314 = vshrl.u32 %v4313, 7
    %v4315 = vsub.s32 6, %v4314
    %v4316 = vrot.slane %v4025, %v4315
    %v4317 = vlaneseq
    %v4318 = vshrl.u32 %v4317, 7
    %v4319 = vsub.s32 6, %v4318
    %v4320 = vrot.slane %v4026, %v4319
    %v4321 = vlaneseq
    %v4322 = vshrl.u32 %v4321, 7
    %v4323 = vsub.s32 6, %v4322
    %v4324 = vrot.slane %v4027, %v4323
    %v4325 = vlaneseq
    %v4326 = vshrl.u32 %v4325, 7
    %v4327 = vsub.s32 6, %v4326
    %v4328 = vrot.slane %v4028, %v4327
    %v4329 = vlaneseq
    %v4330 = vshrl.u32 %v4329, 7
    %v4331 = vsub.s32 6, %v4330
    %v4332 = vrot.slane %v4029, %v4331
    %v4333 = vlaneseq
    %v4334 = vshrl.u32 %v4333, 7
    %v4335 = vsub.s32 6, %v4334
    %v4336 = vrot.slane %v4030, %v4335
    %v4337 = vlaneseq
    %v4338 = vshrl.u32 %v4337, 7
    %v4339 = vsub.s32 6, %v4338
    %v4340 = vrot.slane %v4031, %v4339
    %v4341 = vlaneseq
    %v4342 = vshrl.u32 %v4341, 7
    %v4343 = vsub.s32 6, %v4342
    %v4344 = vrot.slane %v4032, %v4343
    %v4345 = vmul.f32 %v1282, %v4316
    %v4346 = vmul.f32 %v1286, %v4320
    %v4347 = vmul.f32 %v1290, %v4324
    %v4348 = vmul.f32 %v1294, %v4328
    %v4349 = vmul.f32 %v1298, %v4332
    %v4350 = vmul.f32 %v1302, %v4336
    %v4351 = vmul.f32 %v1306, %v4340
    %v4352 = vmul.f32 %v1310, %v4344
    %v4353 = vadd.f32 %v4305, %v4345
    %v4354 = vadd.f32 %v4306, %v4346
    %v4355 = vadd.f32 %v4307, %v4347
    %v4356 = vadd.f32 %v4308, %v4348
    %v4357 = vadd.f32 %v4309, %v4349
    %v4358 = vadd.f32 %v4310, %v4350
    %v4359 = vadd.f32 %v4311, %v4351
    %v4360 = vadd.f32 %v4312, %v4352
    %v4361 = vlaneseq
    %v4362 = vshrl.u32 %v4361, 7
    %v4363 = vsub.s32 7, %v4362
    %v4364 = vrot.slane %v4025, %v4363
    %v4365 = vlaneseq
    %v4366 = vshrl.u32 %v4365, 7
    %v4367 = vsub.s32 7, %v4366
    %v4368 = vrot.slane %v4026, %v4367
    %v4369 = vlaneseq
    %v4370 = vshrl.u32 %v4369, 7
    %v4371 = vsub.s32 7, %v4370
    %v4372 = vrot.slane %v4027, %v4371
    %v4373 = vlaneseq
    %v4374 = vshrl.u32 %v4373, 7
    %v4375 = vsub.s32 7, %v4374
    %v4376 = vrot.slane %v4028, %v4375
    %v4377 = vlaneseq
    %v4378 = vshrl.u32 %v4377, 7
    %v4379 = vsub.s32 7, %v4378
    %v4380 = vrot.slane %v4029, %v4379
    %v4381 = vlaneseq
    %v4382 = vshrl.u32 %v4381, 7
    %v4383 = vsub.s32 7, %v4382
    %v4384 = vrot.slane %v4030, %v4383
    %v4385 = vlaneseq
    %v4386 = vshrl.u32 %v4385, 7
    %v4387 = vsub.s32 7, %v4386
    %v4388 = vrot.slane %v4031, %v4387
    %v4389 = vlaneseq
    %v4390 = vshrl.u32 %v4389, 7
    %v4391 = vsub.s32 7, %v4390
    %v4392 = vrot.slane %v4032, %v4391
    %v4393 = vmul.f32 %v1362, %v4364
    %v4394 = vmul.f32 %v1366, %v4368
    %v4395 = vmul.f32 %v1370, %v4372
    %v4396 = vmul.f32 %v1374, %v4376
    %v4397 = vmul.f32 %v1378, %v4380
    %v4398 = vmul.f32 %v1382, %v4384
    %v4399 = vmul.f32 %v1386, %v4388
    %v4400 = vmul.f32 %v1390, %v4392
    %v4401 = vadd.f32 %v4353, %v4393
    %v4402 = vadd.f32 %v4354, %v4394
    %v4403 = vadd.f32 %v4355, %v4395
    %v4404 = vadd.f32 %v4356, %v4396
    %v4405 = vadd.f32 %v4357, %v4397
    %v4406 = vadd.f32 %v4358, %v4398
    %v4407 = vadd.f32 %v4359, %v4399
    %v4408 = vadd.f32 %v4360, %v4400
    %v4409 = vcombine.low %v4401, %v4403
    %v4410 = vcombine.high %v4401, %v4403
    %v4412 = vunpack.c.l.s4 1983009808
    %v4413 = vunpack.c.0.s8 %v4412
    %v4414 = vlaneseq
    %v4415 = vshrl.u32 %v4414, 7
    %v4416 = vsub.s32 %v4413, %v4415
    %v4417 = vrot.slane %v4409, %v4416
    %v4419 = vunpack.c.l.s4 1983009808
    %v4420 = vunpack.c.0.s8 %v4419
    %v4421 = vlaneseq
    %v4422 = vshrl.u32 %v4421, 7
    %v4423 = vsub.s32 %v4420, %v4422
    %v4424 = vrot.slane %v4410, %v4423
    %v4425 = vcombine.low %v4402, %v4404
    %v4426 = vcombine.high %v4402, %v4404
    %v4428 = vunpack.c.l.s4 1983009808
    %v4429 = vunpack.c.0.s8 %v4428
    %v4430 = vlaneseq
    %v4431 = vshrl.u32 %v4430, 7
    %v4432 = vsub.s32 %v4429, %v4431
    %v4433 = vrot.slane %v4425, %v4432
    %v4435 = vunpack.c.l.s4 1983009808
    %v4436 = vunpack.c.0.s8 %v4435
    %v4437 = vlaneseq
    %v4438 = vshrl.u32 %v4437, 7
    %v4439 = vsub.s32 %v4436, %v4438
    %v4440 = vrot.slane %v4426, %v4439
    %v4441 = vcombine.low %v4405, %v4407
    %v4442 = vcombine.high %v4405, %v4407
    %v4444 = vunpack.c.l.s4 1983009808
    %v4445 = vunpack.c.0.s8 %v4444
    %v4446 = vlaneseq
    %v4447 = vshrl.u32 %v4446, 7
    %v4448 = vsub.s32 %v4445, %v4447
    %v4449 = vrot.slane %v4441, %v4448
    %v4451 = vunpack.c.l.s4 1983009808
    %v4452 = vunpack.c.0.s8 %v4451
    %v4453 = vlaneseq
    %v4454 = vshrl.u32 %v4453, 7
    %v4455 = vsub.s32 %v4452, %v4454
    %v4456 = vrot.slane %v4442, %v4455
    %v4457 = vcombine.low %v4406, %v4408
    %v4458 = vcombine.high %v4406, %v4408
    %v4460 = vunpack.c.l.s4 1983009808
    %v4461 = vunpack.c.0.s8 %v4460
    %v4462 = vlaneseq
    %v4463 = vshrl.u32 %v4462, 7
    %v4464 = vsub.s32 %v4461, %v4463
    %v4465 = vrot.slane %v4457, %v4464
    %v4467 = vunpack.c.l.s4 1983009808
    %v4468 = vunpack.c.0.s8 %v4467
    %v4469 = vlaneseq
    %v4470 = vshrl.u32 %v4469, 7
    %v4471 = vsub.s32 %v4468, %v4470
    %v4472 = vrot.slane %v4458, %v4471
    %v4473 = vcombine.low %v4417, %v4433
    %v4474 = vcombine.high %v4417, %v4433
    %v4476 = vunpack.c.l.s4 1934713408
    %v4477 = vunpack.c.0.s8 %v4476
    %v4478 = vlaneseq
    %v4479 = vshrl.u32 %v4478, 7
    %v4480 = vsub.s32 %v4477, %v4479
    %v4481 = vrot.slane %v4473, %v4480
    %v4483 = vunpack.c.l.s4 1934713408
    %v4484 = vunpack.c.0.s8 %v4483
    %v4485 = vlaneseq
    %v4486 = vshrl.u32 %v4485, 7
    %v4487 = vsub.s32 %v4484, %v4486
    %v4488 = vrot.slane %v4474, %v4487
    %v4489 = vcombine.low %v4424, %v4440
    %v4490 = vcombine.high %v4424, %v4440
    %v4492 = vunpack.c.l.s4 1934713408
    %v4493 = vunpack.c.0.s8 %v4492
    %v4494 = vlaneseq
    %v4495 = vshrl.u32 %v4494, 7
    %v4496 = vsub.s32 %v4493, %v4495
    %v4497 = vrot.slane %v4489, %v4496
    %v4499 = vunpack.c.l.s4 1934713408
    %v4500 = vunpack.c.0.s8 %v4499
    %v4501 = vlaneseq
    %v4502 = vshrl.u32 %v4501, 7
    %v4503 = vsub.s32 %v4500, %v4502
    %v4504 = vrot.slane %v4490, %v4503
    %v4505 = vcombine.low %v4449, %v4465
    %v4506 = vcombine.high %v4449, %v4465
    %v4508 = vunpack.c.l.s4 1934713408
    %v4509 = vunpack.c.0.s8 %v4508
    %v4510 = vlaneseq
    %v4511 = vshrl.u32 %v4510, 7
    %v4512 = vsub.s32 %v4509, %v4511
    %v4513 = vrot.slane %v4505, %v4512
    %v4515 = vunpack.c.l.s4 1934713408
    %v4516 = vunpack.c.0.s8 %v4515
    %v4517 = vlaneseq
    %v4518 = vshrl.u32 %v4517, 7
    %v4519 = vsub.s32 %v4516, %v4518
    %v4520 = vrot.slane %v4506, %v4519
    %v4521 = vcombine.low %v4456, %v4472
    %v4522 = vcombine.high %v4456, %v4472
    %v4524 = vunpack.c.l.s4 1934713408
    %v4525 = vunpack.c.0.s8 %v4524
    %v4526 = vlaneseq
    %v4527 = vshrl.u32 %v4526, 7
    %v4528 = vsub.s32 %v4525, %v4527
    %v4529 = vrot.slane %v4521, %v4528
    %v4531 = vunpack.c.l.s4 1934713408
    %v4532 = vunpack.c.0.s8 %v4531
    %v4533 = vlaneseq
    %v4534 = vshrl.u32 %v4533, 7
    %v4535 = vsub.s32 %v4532, %v4534
    %v4536 = vrot.slane %v4522, %v4535
    %v4537 = vcombine.low %v4481, %v4513
    %v4538 = vcombine.high %v4481, %v4513
    %v4539 = vcombine.low %v4488, %v4520
    %v4540 = vcombine.high %v4488, %v4520
    %v4541 = vcombine.low %v4497, %v4529
    %v4542 = vcombine.high %v4497, %v4529
    %v4543 = vcombine.low %v4504, %v4536
    %v4544 = vcombine.high %v4504, %v4536
    %4546 = vrot.lane.b32.xlu0 %v4538, 32
    %v4547 = vpop.permute.xlu0 %4546
    %4550 = vrot.lane.b32.xlu0 %v4539, 64
    %v4551 = vpop.permute.xlu0 %4550
    %4554 = vrot.lane.b32.xlu0 %v4540, 96
    %v4555 = vpop.permute.xlu0 %4554
    %4558 = vrot.lane.b32.xlu0 %v4542, 32
    %v4559 = vpop.permute.xlu0 %4558
    %4562 = vrot.lane.b32.xlu0 %v4543, 64
    %v4563 = vpop.permute.xlu0 %4562
    %4566 = vrot.lane.b32.xlu0 %v4544, 96
    %v4567 = vpop.permute.xlu0 %4566
    %v4569 = vsel %vm1600, %v4537, %v4547
    %v4570 = vsel %vm1602, %v4569, %v4551
    %v4571 = vsel %vm1604, %v4570, %v4555
    %v4572 = vsel %vm1600, %v4541, %v4559
    %v4573 = vsel %vm1602, %v4572, %v4563
    %v4574 = vsel %vm1604, %v4573, %v4567
    %s4575 = scalar_lea.vmem [#allocation8], 1024
    %v4576 = vld [vmem:[%s4575] sm:$0xff]
    %v4577 = vld [vmem:[%s4575 + $0x8] sm:$0xff]
    %v4578 = vld [vmem:[%s4575 + $0x10] sm:$0xff]
    %v4579 = vld [vmem:[%s4575 + $0x18] sm:$0xff]
    %v4580 = vld [vmem:[%s4575 + $0x20] sm:$0xff]
    %v4581 = vld [vmem:[%s4575 + $0x28] sm:$0xff]
    %v4582 = vld [vmem:[%s4575 + $0x30] sm:$0xff]
    %v4583 = vld [vmem:[%s4575 + $0x38] sm:$0xff]
    %v4584 = vld [vmem:[%s4575 + $0x40] sm:$0xff]
    %v4585 = vld [vmem:[%s4575 + $0x48] sm:$0xff]
    %v4586 = vld [vmem:[%s4575 + $0x50] sm:$0xff]
    %v4587 = vld [vmem:[%s4575 + $0x58] sm:$0xff]
    %v4588 = vld [vmem:[%s4575 + $0x60] sm:$0xff]
    %v4589 = vld [vmem:[%s4575 + $0x68] sm:$0xff]
    %v4590 = vld [vmem:[%s4575 + $0x70] sm:$0xff]
    %v4591 = vld [vmem:[%s4575 + $0x78] sm:$0xff]
    %v4592 = vld [vmem:[%s4575 + $0x80] sm:$0xff]
    %v4593 = vld [vmem:[%s4575 + $0x88] sm:$0xff]
    %v4594 = vld [vmem:[%s4575 + $0x90] sm:$0xff]
    %v4595 = vld [vmem:[%s4575 + $0x98] sm:$0xff]
    %v4596 = vld [vmem:[%s4575 + $0xa0] sm:$0xff]
    %v4597 = vld [vmem:[%s4575 + $0xa8] sm:$0xff]
    %v4598 = vld [vmem:[%s4575 + $0xb0] sm:$0xff]
    %v4599 = vld [vmem:[%s4575 + $0xb8] sm:$0xff]
    %v4600 = vld [vmem:[%s4575 + $0xc0] sm:$0xff]
    %v4601 = vld [vmem:[%s4575 + $0xc8] sm:$0xff]
    %v4602 = vld [vmem:[%s4575 + $0xd0] sm:$0xff]
    %v4603 = vld [vmem:[%s4575 + $0xd8] sm:$0xff]
    %v4604 = vld [vmem:[%s4575 + $0xe0] sm:$0xff]
    %v4605 = vld [vmem:[%s4575 + $0xe8] sm:$0xff]
    %v4606 = vld [vmem:[%s4575 + $0xf0] sm:$0xff]
    %v4607 = vld [vmem:[%s4575 + $0xf8] sm:$0xff]
    %v4608 = vld [vmem:[%s4575 + $0x100] sm:$0xff]
    %v4609 = vld [vmem:[%s4575 + $0x108] sm:$0xff]
    %v4610 = vld [vmem:[%s4575 + $0x110] sm:$0xff]
    %v4611 = vld [vmem:[%s4575 + $0x118] sm:$0xff]
    %v4612 = vld [vmem:[%s4575 + $0x120] sm:$0xff]
    %v4613 = vld [vmem:[%s4575 + $0x128] sm:$0xff]
    %v4614 = vld [vmem:[%s4575 + $0x130] sm:$0xff]
    %v4615 = vld [vmem:[%s4575 + $0x138] sm:$0xff]
    %v4616 = vld [vmem:[%s4575 + $0x140] sm:$0xff]
    %v4617 = vld [vmem:[%s4575 + $0x148] sm:$0xff]
    %v4618 = vld [vmem:[%s4575 + $0x150] sm:$0xff]
    %v4619 = vld [vmem:[%s4575 + $0x158] sm:$0xff]
    %v4620 = vld [vmem:[%s4575 + $0x160] sm:$0xff]
    %v4621 = vld [vmem:[%s4575 + $0x168] sm:$0xff]
    %v4622 = vld [vmem:[%s4575 + $0x170] sm:$0xff]
    %v4623 = vld [vmem:[%s4575 + $0x178] sm:$0xff]
    %v4624 = vld [vmem:[%s4575 + $0x180] sm:$0xff]
    %v4625 = vld [vmem:[%s4575 + $0x188] sm:$0xff]
    %v4626 = vld [vmem:[%s4575 + $0x190] sm:$0xff]
    %v4627 = vld [vmem:[%s4575 + $0x198] sm:$0xff]
    %v4628 = vld [vmem:[%s4575 + $0x1a0] sm:$0xff]
    %v4629 = vld [vmem:[%s4575 + $0x1a8] sm:$0xff]
    %v4630 = vld [vmem:[%s4575 + $0x1b0] sm:$0xff]
    %v4631 = vld [vmem:[%s4575 + $0x1b8] sm:$0xff]
    %v4632 = vld [vmem:[%s4575 + $0x1c0] sm:$0xff]
    %v4633 = vld [vmem:[%s4575 + $0x1c8] sm:$0xff]
    %v4634 = vld [vmem:[%s4575 + $0x1d0] sm:$0xff]
    %v4635 = vld [vmem:[%s4575 + $0x1d8] sm:$0xff]
    %v4636 = vld [vmem:[%s4575 + $0x1e0] sm:$0xff]
    %v4637 = vld [vmem:[%s4575 + $0x1e8] sm:$0xff]
    %v4638 = vld [vmem:[%s4575 + $0x1f0] sm:$0xff]
    %v4639 = vld [vmem:[%s4575 + $0x1f8] sm:$0xff]
    %s4640 = scalar_lea.vmem %s4, 4
    %v4641 = vld [vmem:[%s4640] sm:$0x3]
    %v4643 = vlaneseq
    %v4644 = vshrl.u32 %v4643, 7
    %v4645 = vsub.s32 0, %v4644
    %v4646 = vrot.slane %v4641, %v4645
    %v4647 = vlaneseq
    %v4648 = vshrl.u32 %v4647, 7
    %v4649 = vsub.s32 1, %v4648
    %v4650 = vrot.slane %v4641, %v4649
    %4653 = vmatprep.subr.mxu0 %v4577
    %4654 = vmatpush1.msra.mxu0 %v4576
    %4655 = vmatprep.subr.mxu0 %v4579
    %4656 = vmatpush1.msra.mxu0 %v4578
    %4657 = vmatprep.subr.mxu0 %v4581
    %4658 = vmatpush1.msra.mxu0 %v4580
    %4659 = vmatprep.subr.mxu0 %v4583
    %4660 = vmatpush1.msra.mxu0 %v4582
    %4661 = vmatprep.subr.mxu0 %v4585
    %4662 = vmatpush1.msra.mxu0 %v4584
    %4663 = vmatprep.subr.mxu0 %v4587
    %4664 = vmatpush1.msra.mxu0 %v4586
    %4665 = vmatprep.subr.mxu0 %v4589
    %4666 = vmatpush1.msra.mxu0 %v4588
    %4667 = vmatprep.subr.mxu0 %v4591
    %4668 = vmatpush1.msra.mxu0 %v4590
    %4669 = vmatprep.subr.mxu0 %v4593
    %4670 = vmatpush1.msra.mxu0 %v4592
    %4671 = vmatprep.subr.mxu0 %v4595
    %4672 = vmatpush1.msra.mxu0 %v4594
    %4673 = vmatprep.subr.mxu0 %v4597
    %4674 = vmatpush1.msra.mxu0 %v4596
    %4675 = vmatprep.subr.mxu0 %v4599
    %4676 = vmatpush1.msra.mxu0 %v4598
    %4677 = vmatprep.subr.mxu0 %v4601
    %4678 = vmatpush1.msra.mxu0 %v4600
    %4679 = vmatprep.subr.mxu0 %v4603
    %4680 = vmatpush1.msra.mxu0 %v4602
    %4681 = vmatprep.subr.mxu0 %v4605
    %4682 = vmatpush1.msra.mxu0 %v4604
    %4683 = vmatprep.subr.mxu0 %v4607
    %4684 = vmatpush1.msra.mxu0 %v4606
    %4685 = vmatprep.subr.mxu0 %v4609
    %4686 = vmatpush1.msra.mxu0 %v4608
    %4687 = vmatprep.subr.mxu0 %v4611
    %4688 = vmatpush1.msra.mxu0 %v4610
    %4689 = vmatprep.subr.mxu0 %v4613
    %4690 = vmatpush1.msra.mxu0 %v4612
    %4691 = vmatprep.subr.mxu0 %v4615
    %4692 = vmatpush1.msra.mxu0 %v4614
    %4693 = vmatprep.subr.mxu0 %v4617
    %4694 = vmatpush1.msra.mxu0 %v4616
    %4695 = vmatprep.subr.mxu0 %v4619
    %4696 = vmatpush1.msra.mxu0 %v4618
    %4697 = vmatprep.subr.mxu0 %v4621
    %4698 = vmatpush1.msra.mxu0 %v4620
    %4699 = vmatprep.subr.mxu0 %v4623
    %4700 = vmatpush1.msra.mxu0 %v4622
    %4701 = vmatprep.subr.mxu0 %v4625
    %4702 = vmatpush1.msra.mxu0 %v4624
    %4703 = vmatprep.subr.mxu0 %v4627
    %4704 = vmatpush1.msra.mxu0 %v4626
    %4705 = vmatprep.subr.mxu0 %v4629
    %4706 = vmatpush1.msra.mxu0 %v4628
    %4707 = vmatprep.subr.mxu0 %v4631
    %4708 = vmatpush1.msra.mxu0 %v4630
    %4709 = vmatprep.subr.mxu0 %v4633
    %4710 = vmatpush1.msra.mxu0 %v4632
    %4711 = vmatprep.subr.mxu0 %v4635
    %4712 = vmatpush1.msra.mxu0 %v4634
    %4713 = vmatprep.subr.mxu0 %v4637
    %4714 = vmatpush1.msra.mxu0 %v4636
    %4715 = vmatprep.subr.mxu0 %v4639
    %4716 = vmatpush1.msra.mxu0 %v4638
    %4717 = vmatprep.mubr.f32.mxu0 %v4574
    %4718 = vmatmul.mubr.f32.gmra.mrb[0].mxu0 %v4571
    %v4719 = vpop.f32.mrb[0].mxu0
    %v4720 = vadd.f32 %v4646, %v4719
    %v4721 = vpop.f32.mrb[0].mxu0
    %v4722 = vadd.f32 %v4650, %v4721
    %4723 = vdwg.mxu0
    %4724 = vmatprep.subr.mxu0 %v124
    %4725 = vmatpush1.msra.mxu0 %v123
    %4726 = vmatprep.subr.mxu0 %v130
    %4727 = vmatpush1.msra.mxu0 %v129
    %4728 = vmatprep.subr.mxu0 %v136
    %4729 = vmatpush1.msra.mxu0 %v135
    %4730 = vmatprep.subr.mxu0 %v142
    %4731 = vmatpush1.msra.mxu0 %v141
    %4732 = vmatprep.subr.mxu0 %v148
    %4733 = vmatpush1.msra.mxu0 %v147
    %4734 = vmatprep.subr.mxu0 %v154
    %4735 = vmatpush1.msra.mxu0 %v153
    %4736 = vmatprep.subr.mxu0 %v160
    %4737 = vmatpush1.msra.mxu0 %v159
    %4738 = vmatprep.subr.mxu0 %v166
    %4739 = vmatpush1.msra.mxu0 %v165
    %4740 = vmatprep.subr.mxu0 %v172
    %4741 = vmatpush1.msra.mxu0 %v171
    %4742 = vmatprep.subr.mxu0 %v178
    %4743 = vmatpush1.msra.mxu0 %v177
    %4744 = vmatprep.subr.mxu0 %v184
    %4745 = vmatpush1.msra.mxu0 %v183
    %4746 = vmatprep.subr.mxu0 %v190
    %4747 = vmatpush1.msra.mxu0 %v189
    %4748 = vmatprep.subr.mxu0 %v196
    %4749 = vmatpush1.msra.mxu0 %v195
    %4750 = vmatprep.subr.mxu0 %v202
    %4751 = vmatpush1.msra.mxu0 %v201
    %4752 = vmatprep.subr.mxu0 %v208
    %4753 = vmatpush1.msra.mxu0 %v207
    %4754 = vmatprep.subr.mxu0 %v214
    %4755 = vmatpush1.msra.mxu0 %v213
    %4756 = vmatprep.subr.mxu0 %v220
    %4757 = vmatpush1.msra.mxu0 %v219
    %4758 = vmatprep.subr.mxu0 %v226
    %4759 = vmatpush1.msra.mxu0 %v225
    %4760 = vmatprep.subr.mxu0 %v232
    %4761 = vmatpush1.msra.mxu0 %v231
    %4762 = vmatprep.subr.mxu0 %v238
    %4763 = vmatpush1.msra.mxu0 %v237
    %4764 = vmatprep.subr.mxu0 %v244
    %4765 = vmatpush1.msra.mxu0 %v243
    %4766 = vmatprep.subr.mxu0 %v250
    %4767 = vmatpush1.msra.mxu0 %v249
    %4768 = vmatprep.subr.mxu0 %v256
    %4769 = vmatpush1.msra.mxu0 %v255
    %4770 = vmatprep.subr.mxu0 %v262
    %4771 = vmatpush1.msra.mxu0 %v261
    %4772 = vmatprep.subr.mxu0 %v268
    %4773 = vmatpush1.msra.mxu0 %v267
    %4774 = vmatprep.subr.mxu0 %v274
    %4775 = vmatpush1.msra.mxu0 %v273
    %4776 = vmatprep.subr.mxu0 %v280
    %4777 = vmatpush1.msra.mxu0 %v279
    %4778 = vmatprep.subr.mxu0 %v286
    %4779 = vmatpush1.msra.mxu0 %v285
    %4780 = vmatprep.subr.mxu0 %v292
    %4781 = vmatpush1.msra.mxu0 %v291
    %4782 = vmatprep.subr.mxu0 %v298
    %4783 = vmatpush1.msra.mxu0 %v297
    %4784 = vmatprep.subr.mxu0 %v304
    %4785 = vmatpush1.msra.mxu0 %v303
    %4786 = vmatprep.subr.mxu0 %v310
    %4787 = vmatpush1.msra.mxu0 %v309
    %4788 = vmatprep.mubr.f32.mxu0 %v4722
    %4789 = vmatmul.mubr.f32.gmra.mrb[0].mxu0 %v4720
    %v4790 = vpop.f32.mrb[0].mxu0
    %v4791 = vadd.f32 %v1760, %v4790
    %v4792 = vpop.f32.mrb[0].mxu0
    %v4793 = vadd.f32 %v1764, %v4792
    %4794 = vdwg.mxu0
    %4795 = vmatprep.subr.mxu0 %v126
    %4796 = vmatpush1.msra.mxu0 %v125
    %4797 = vmatprep.subr.mxu0 %v132
    %4798 = vmatpush1.msra.mxu0 %v131
    %4799 = vmatprep.subr.mxu0 %v138
    %4800 = vmatpush1.msra.mxu0 %v137
    %4801 = vmatprep.subr.mxu0 %v144
    %4802 = vmatpush1.msra.mxu0 %v143
    %4803 = vmatprep.subr.mxu0 %v150
    %4804 = vmatpush1.msra.mxu0 %v149
    %4805 = vmatprep.subr.mxu0 %v156
    %4806 = vmatpush1.msra.mxu0 %v155
    %4807 = vmatprep.subr.mxu0 %v162
    %4808 = vmatpush1.msra.mxu0 %v161
    %4809 = vmatprep.subr.mxu0 %v168
    %4810 = vmatpush1.msra.mxu0 %v167
    %4811 = vmatprep.subr.mxu0 %v174
    %4812 = vmatpush1.msra.mxu0 %v173
    %4813 = vmatprep.subr.mxu0 %v180
    %4814 = vmatpush1.msra.mxu0 %v179
    %4815 = vmatprep.subr.mxu0 %v186
    %4816 = vmatpush1.msra.mxu0 %v185
    %4817 = vmatprep.subr.mxu0 %v192
    %4818 = vmatpush1.msra.mxu0 %v191
    %4819 = vmatprep.subr.mxu0 %v198
    %4820 = vmatpush1.msra.mxu0 %v197
    %4821 = vmatprep.subr.mxu0 %v204
    %4822 = vmatpush1.msra.mxu0 %v203
    %4823 = vmatprep.subr.mxu0 %v210
    %4824 = vmatpush1.msra.mxu0 %v209
    %4825 = vmatprep.subr.mxu0 %v216
    %4826 = vmatpush1.msra.mxu0 %v215
    %4827 = vmatprep.subr.mxu0 %v222
    %4828 = vmatpush1.msra.mxu0 %v221
    %4829 = vmatprep.subr.mxu0 %v228
    %4830 = vmatpush1.msra.mxu0 %v227
    %4831 = vmatprep.subr.mxu0 %v234
    %4832 = vmatpush1.msra.mxu0 %v233
    %4833 = vmatprep.subr.mxu0 %v240
    %4834 = vmatpush1.msra.mxu0 %v239
    %4835 = vmatprep.subr.mxu0 %v246
    %4836 = vmatpush1.msra.mxu0 %v245
    %4837 = vmatprep.subr.mxu0 %v252
    %4838 = vmatpush1.msra.mxu0 %v251
    %4839 = vmatprep.subr.mxu0 %v258
    %4840 = vmatpush1.msra.mxu0 %v257
    %4841 = vmatprep.subr.mxu0 %v264
    %4842 = vmatpush1.msra.mxu0 %v263
    %4843 = vmatprep.subr.mxu0 %v270
    %4844 = vmatpush1.msra.mxu0 %v269
    %4845 = vmatprep.subr.mxu0 %v276
    %4846 = vmatpush1.msra.mxu0 %v275
    %4847 = vmatprep.subr.mxu0 %v282
    %4848 = vmatpush1.msra.mxu0 %v281
    %4849 = vmatprep.subr.mxu0 %v288
    %4850 = vmatpush1.msra.mxu0 %v287
    %4851 = vmatprep.subr.mxu0 %v294
    %4852 = vmatpush1.msra.mxu0 %v293
    %4853 = vmatprep.subr.mxu0 %v300
    %4854 = vmatpush1.msra.mxu0 %v299
    %4855 = vmatprep.subr.mxu0 %v306
    %4856 = vmatpush1.msra.mxu0 %v305
    %4857 = vmatprep.subr.mxu0 %v312
    %4858 = vmatpush1.msra.mxu0 %v311
    %4859 = vmatprep.mubr.f32.mxu0 %v4722
    %4860 = vmatmul.mubr.f32.gmra.mrb[0].mxu0 %v4720
    %v4861 = vpop.f32.mrb[0].mxu0
    %v4862 = vadd.f32 %v1768, %v4861
    %v4863 = vpop.f32.mrb[0].mxu0
    %v4864 = vadd.f32 %v1772, %v4863
    %4865 = vdwg.mxu0
    %4866 = vmatprep.subr.mxu0 %v128
    %4867 = vmatpush1.msra.mxu0 %v127
    %4868 = vmatprep.subr.mxu0 %v134
    %4869 = vmatpush1.msra.mxu0 %v133
    %4870 = vmatprep.subr.mxu0 %v140
    %4871 = vmatpush1.msra.mxu0 %v139
    %4872 = vmatprep.subr.mxu0 %v146
    %4873 = vmatpush1.msra.mxu0 %v145
    %4874 = vmatprep.subr.mxu0 %v152
    %4875 = vmatpush1.msra.mxu0 %v151
    %4876 = vmatprep.subr.mxu0 %v158
    %4877 = vmatpush1.msra.mxu0 %v157
    %4878 = vmatprep.subr.mxu0 %v164
    %4879 = vmatpush1.msra.mxu0 %v163
    %4880 = vmatprep.subr.mxu0 %v170
    %4881 = vmatpush1.msra.mxu0 %v169
    %4882 = vmatprep.subr.mxu0 %v176
    %4883 = vmatpush1.msra.mxu0 %v175
    %4884 = vmatprep.subr.mxu0 %v182
    %4885 = vmatpush1.msra.mxu0 %v181
    %4886 = vmatprep.subr.mxu0 %v188
    %4887 = vmatpush1.msra.mxu0 %v187
    %4888 = vmatprep.subr.mxu0 %v194
    %4889 = vmatpush1.msra.mxu0 %v193
    %4890 = vmatprep.subr.mxu0 %v200
    %4891 = vmatpush1.msra.mxu0 %v199
    %4892 = vmatprep.subr.mxu0 %v206
    %4893 = vmatpush1.msra.mxu0 %v205
    %4894 = vmatprep.subr.mxu0 %v212
    %4895 = vmatpush1.msra.mxu0 %v211
    %4896 = vmatprep.subr.mxu0 %v218
    %4897 = vmatpush1.msra.mxu0 %v217
    %4898 = vmatprep.subr.mxu0 %v224
    %4899 = vmatpush1.msra.mxu0 %v223
    %4900 = vmatprep.subr.mxu0 %v230
    %4901 = vmatpush1.msra.mxu0 %v229
    %4902 = vmatprep.subr.mxu0 %v236
    %4903 = vmatpush1.msra.mxu0 %v235
    %4904 = vmatprep.subr.mxu0 %v242
    %4905 = vmatpush1.msra.mxu0 %v241
    %4906 = vmatprep.subr.mxu0 %v248
    %4907 = vmatpush1.msra.mxu0 %v247
    %4908 = vmatprep.subr.mxu0 %v254
    %4909 = vmatpush1.msra.mxu0 %v253
    %4910 = vmatprep.subr.mxu0 %v260
    %4911 = vmatpush1.msra.mxu0 %v259
    %4912 = vmatprep.subr.mxu0 %v266
    %4913 = vmatpush1.msra.mxu0 %v265
    %4914 = vmatprep.subr.mxu0 %v272
    %4915 = vmatpush1.msra.mxu0 %v271
    %4916 = vmatprep.subr.mxu0 %v278
    %4917 = vmatpush1.msra.mxu0 %v277
    %4918 = vmatprep.subr.mxu0 %v284
    %4919 = vmatpush1.msra.mxu0 %v283
    %4920 = vmatprep.subr.mxu0 %v290
    %4921 = vmatpush1.msra.mxu0 %v289
    %4922 = vmatprep.subr.mxu0 %v296
    %4923 = vmatpush1.msra.mxu0 %v295
    %4924 = vmatprep.subr.mxu0 %v302
    %4925 = vmatpush1.msra.mxu0 %v301
    %4926 = vmatprep.subr.mxu0 %v308
    %4927 = vmatpush1.msra.mxu0 %v307
    %4928 = vmatprep.subr.mxu0 %v314
    %4929 = vmatpush1.msra.mxu0 %v313
    %4930 = vmatprep.mubr.f32.mxu0 %v4722
    %4931 = vmatmul.mubr.f32.gmra.mrb[0].mxu0 %v4720
    %v4932 = vpop.f32.mrb[0].mxu0
    %v4933 = vadd.f32 %v1776, %v4932
    %v4934 = vpop.f32.mrb[0].mxu0
    %v4935 = vadd.f32 %v1780, %v4934
    %4936 = vdwg.mxu0
    %4937 = vmatprep.subr.mxu0 %v316
    %4938 = vmatpush1.msra.mxu0 %v315
    %4939 = vmatprep.subr.mxu0 %v322
    %4940 = vmatpush1.msra.mxu0 %v321
    %4941 = vmatprep.subr.mxu0 %v328
    %4942 = vmatpush1.msra.mxu0 %v327
    %4943 = vmatprep.subr.mxu0 %v334
    %4944 = vmatpush1.msra.mxu0 %v333
    %4945 = vmatprep.subr.mxu0 %v340
    %4946 = vmatpush1.msra.mxu0 %v339
    %4947 = vmatprep.subr.mxu0 %v346
    %4948 = vmatpush1.msra.mxu0 %v345
    %4949 = vmatprep.subr.mxu0 %v352
    %4950 = vmatpush1.msra.mxu0 %v351
    %4951 = vmatprep.subr.mxu0 %v358
    %4952 = vmatpush1.msra.mxu0 %v357
    %4953 = vmatprep.subr.mxu0 %v364
    %4954 = vmatpush1.msra.mxu0 %v363
    %4955 = vmatprep.subr.mxu0 %v370
    %4956 = vmatpush1.msra.mxu0 %v369
    %4957 = vmatprep.subr.mxu0 %v376
    %4958 = vmatpush1.msra.mxu0 %v375
    %4959 = vmatprep.subr.mxu0 %v382
    %4960 = vmatpush1.msra.mxu0 %v381
    %4961 = vmatprep.subr.mxu0 %v388
    %4962 = vmatpush1.msra.mxu0 %v387
    %4963 = vmatprep.subr.mxu0 %v394
    %4964 = vmatpush1.msra.mxu0 %v393
    %4965 = vmatprep.subr.mxu0 %v400
    %4966 = vmatpush1.msra.mxu0 %v399
    %4967 = vmatprep.subr.mxu0 %v406
    %4968 = vmatpush1.msra.mxu0 %v405
    %4969 = vmatprep.subr.mxu0 %v412
    %4970 = vmatpush1.msra.mxu0 %v411
    %4971 = vmatprep.subr.mxu0 %v418
    %4972 = vmatpush1.msra.mxu0 %v417
    %4973 = vmatprep.subr.mxu0 %v424
    %4974 = vmatpush1.msra.mxu0 %v423
    %4975 = vmatprep.subr.mxu0 %v430
    %4976 = vmatpush1.msra.mxu0 %v429
    %4977 = vmatprep.subr.mxu0 %v436
    %4978 = vmatpush1.msra.mxu0 %v435
    %4979 = vmatprep.subr.mxu0 %v442
    %4980 = vmatpush1.msra.mxu0 %v441
    %4981 = vmatprep.subr.mxu0 %v448
    %4982 = vmatpush1.msra.mxu0 %v447
    %4983 = vmatprep.subr.mxu0 %v454
    %4984 = vmatpush1.msra.mxu0 %v453
    %4985 = vmatprep.subr.mxu0 %v460
    %4986 = vmatpush1.msra.mxu0 %v459
    %4987 = vmatprep.subr.mxu0 %v466
    %4988 = vmatpush1.msra.mxu0 %v465
    %4989 = vmatprep.subr.mxu0 %v472
    %4990 = vmatpush1.msra.mxu0 %v471
    %4991 = vmatprep.subr.mxu0 %v478
    %4992 = vmatpush1.msra.mxu0 %v477
    %4993 = vmatprep.subr.mxu0 %v484
    %4994 = vmatpush1.msra.mxu0 %v483
    %4995 = vmatprep.subr.mxu0 %v490
    %4996 = vmatpush1.msra.mxu0 %v489
    %4997 = vmatprep.subr.mxu0 %v496
    %4998 = vmatpush1.msra.mxu0 %v495
    %4999 = vmatprep.subr.mxu0 %v502
    %5000 = vmatpush1.msra.mxu0 %v501
    %5001 = vmatprep.mubr.f32.mxu0 %v3740
    %5002 = vmatmul.mubr.f32.gmra.mrb[0].mxu0 %v3739
    %v5003 = vpop.f32.mrb[0].mxu0
    %v5004 = vadd.f32 %v2004, %v5003
    %v5005 = vpop.f32.mrb[0].mxu0
    %v5006 = vadd.f32 %v2008, %v5005
    %5007 = vdwg.mxu0
    %5008 = vmatprep.subr.mxu0 %v318
    %5009 = vmatpush1.msra.mxu0 %v317
    %5010 = vmatprep.subr.mxu0 %v324
    %5011 = vmatpush1.msra.mxu0 %v323
    %5012 = vmatprep.subr.mxu0 %v330
    %5013 = vmatpush1.msra.mxu0 %v329
    %5014 = vmatprep.subr.mxu0 %v336
    %5015 = vmatpush1.msra.mxu0 %v335
    %5016 = vmatprep.subr.mxu0 %v342
    %5017 = vmatpush1.msra.mxu0 %v341
    %5018 = vmatprep.subr.mxu0 %v348
    %5019 = vmatpush1.msra.mxu0 %v347
    %5020 = vmatprep.subr.mxu0 %v354
    %5021 = vmatpush1.msra.mxu0 %v353
    %5022 = vmatprep.subr.mxu0 %v360
    %5023 = vmatpush1.msra.mxu0 %v359
    %5024 = vmatprep.subr.mxu0 %v366
    %5025 = vmatpush1.msra.mxu0 %v365
    %5026 = vmatprep.subr.mxu0 %v372
    %5027 = vmatpush1.msra.mxu0 %v371
    %5028 = vmatprep.subr.mxu0 %v378
    %5029 = vmatpush1.msra.mxu0 %v377
    %5030 = vmatprep.subr.mxu0 %v384
    %5031 = vmatpush1.msra.mxu0 %v383
    %5032 = vmatprep.subr.mxu0 %v390
    %5033 = vmatpush1.msra.mxu0 %v389
    %5034 = vmatprep.subr.mxu0 %v396
    %5035 = vmatpush1.msra.mxu0 %v395
    %5036 = vmatprep.subr.mxu0 %v402
    %5037 = vmatpush1.msra.mxu0 %v401
    %5038 = vmatprep.subr.mxu0 %v408
    %5039 = vmatpush1.msra.mxu0 %v407
    %5040 = vmatprep.subr.mxu0 %v414
    %5041 = vmatpush1.msra.mxu0 %v413
    %5042 = vmatprep.subr.mxu0 %v420
    %5043 = vmatpush1.msra.mxu0 %v419
    %5044 = vmatprep.subr.mxu0 %v426
    %5045 = vmatpush1.msra.mxu0 %v425
    %5046 = vmatprep.subr.mxu0 %v432
    %5047 = vmatpush1.msra.mxu0 %v431
    %5048 = vmatprep.subr.mxu0 %v438
    %5049 = vmatpush1.msra.mxu0 %v437
    %5050 = vmatprep.subr.mxu0 %v444
    %5051 = vmatpush1.msra.mxu0 %v443
    %5052 = vmatprep.subr.mxu0 %v450
    %5053 = vmatpush1.msra.mxu0 %v449
    %5054 = vmatprep.subr.mxu0 %v456
    %5055 = vmatpush1.msra.mxu0 %v455
    %5056 = vmatprep.subr.mxu0 %v462
    %5057 = vmatpush1.msra.mxu0 %v461
    %5058 = vmatprep.subr.mxu0 %v468
    %5059 = vmatpush1.msra.mxu0 %v467
    %5060 = vmatprep.subr.mxu0 %v474
    %5061 = vmatpush1.msra.mxu0 %v473
    %5062 = vmatprep.subr.mxu0 %v480
    %5063 = vmatpush1.msra.mxu0 %v479
    %5064 = vmatprep.subr.mxu0 %v486
    %5065 = vmatpush1.msra.mxu0 %v485
    %5066 = vmatprep.subr.mxu0 %v492
    %5067 = vmatpush1.msra.mxu0 %v491
    %5068 = vmatprep.subr.mxu0 %v498
    %5069 = vmatpush1.msra.mxu0 %v497
    %5070 = vmatprep.subr.mxu0 %v504
    %5071 = vmatpush1.msra.mxu0 %v503
    %5072 = vmatprep.mubr.f32.mxu0 %v3740
    %5073 = vmatmul.mubr.f32.gmra.mrb[0].mxu0 %v3739
    %v5074 = vpop.f32.mrb[0].mxu0
    %v5075 = vadd.f32 %v2012, %v5074
    %v5076 = vpop.f32.mrb[0].mxu0
    %v5077 = vadd.f32 %v2016, %v5076
    %5078 = vdwg.mxu0
    %5079 = vmatprep.subr.mxu0 %v320
    %5080 = vmatpush1.msra.mxu0 %v319
    %5081 = vmatprep.subr.mxu0 %v326
    %5082 = vmatpush1.msra.mxu0 %v325
    %5083 = vmatprep.subr.mxu0 %v332
    %5084 = vmatpush1.msra.mxu0 %v331
    %5085 = vmatprep.subr.mxu0 %v338
    %5086 = vmatpush1.msra.mxu0 %v337
    %5087 = vmatprep.subr.mxu0 %v344
    %5088 = vmatpush1.msra.mxu0 %v343
    %5089 = vmatprep.subr.mxu0 %v350
    %5090 = vmatpush1.msra.mxu0 %v349
    %5091 = vmatprep.subr.mxu0 %v356
    %5092 = vmatpush1.msra.mxu0 %v355
    %5093 = vmatprep.subr.mxu0 %v362
    %5094 = vmatpush1.msra.mxu0 %v361
    %5095 = vmatprep.subr.mxu0 %v368
    %5096 = vmatpush1.msra.mxu0 %v367
    %5097 = vmatprep.subr.mxu0 %v374
    %5098 = vmatpush1.msra.mxu0 %v373
    %5099 = vmatprep.subr.mxu0 %v380
    %5100 = vmatpush1.msra.mxu0 %v379
    %5101 = vmatprep.subr.mxu0 %v386
    %5102 = vmatpush1.msra.mxu0 %v385
    %5103 = vmatprep.subr.mxu0 %v392
    %5104 = vmatpush1.msra.mxu0 %v391
    %5105 = vmatprep.subr.mxu0 %v398
    %5106 = vmatpush1.msra.mxu0 %v397
    %5107 = vmatprep.subr.mxu0 %v404
    %5108 = vmatpush1.msra.mxu0 %v403
    %5109 = vmatprep.subr.mxu0 %v410
    %5110 = vmatpush1.msra.mxu0 %v409
    %5111 = vmatprep.subr.mxu0 %v416
    %5112 = vmatpush1.msra.mxu0 %v415
    %5113 = vmatprep.subr.mxu0 %v422
    %5114 = vmatpush1.msra.mxu0 %v421
    %5115 = vmatprep.subr.mxu0 %v428
    %5116 = vmatpush1.msra.mxu0 %v427
    %5117 = vmatprep.subr.mxu0 %v434
    %5118 = vmatpush1.msra.mxu0 %v433
    %5119 = vmatprep.subr.mxu0 %v440
    %5120 = vmatpush1.msra.mxu0 %v439
    %5121 = vmatprep.subr.mxu0 %v446
    %5122 = vmatpush1.msra.mxu0 %v445
    %5123 = vmatprep.subr.mxu0 %v452
    %5124 = vmatpush1.msra.mxu0 %v451
    %5125 = vmatprep.subr.mxu0 %v458
    %5126 = vmatpush1.msra.mxu0 %v457
    %5127 = vmatprep.subr.mxu0 %v464
    %5128 = vmatpush1.msra.mxu0 %v463
    %5129 = vmatprep.subr.mxu0 %v470
    %5130 = vmatpush1.msra.mxu0 %v469
    %5131 = vmatprep.subr.mxu0 %v476
    %5132 = vmatpush1.msra.mxu0 %v475
    %5133 = vmatprep.subr.mxu0 %v482
    %5134 = vmatpush1.msra.mxu0 %v481
    %5135 = vmatprep.subr.mxu0 %v488
    %5136 = vmatpush1.msra.mxu0 %v487
    %5137 = vmatprep.subr.mxu0 %v494
    %5138 = vmatpush1.msra.mxu0 %v493
    %5139 = vmatprep.subr.mxu0 %v500
    %5140 = vmatpush1.msra.mxu0 %v499
    %5141 = vmatprep.subr.mxu0 %v506
    %5142 = vmatpush1.msra.mxu0 %v505
    %5143 = vmatprep.mubr.f32.mxu0 %v3740
    %5144 = vmatmul.mubr.f32.gmra.mrb[0].mxu0 %v3739
    %v5145 = vpop.f32.mrb[0].mxu0
    %v5146 = vadd.f32 %v2020, %v5145
    %v5147 = vpop.f32.mrb[0].mxu0
    %v5148 = vadd.f32 %v2024, %v5147
    %5149 = vdwg.mxu0
    %v5150 = vadd.f32 %v4791, %v5004
    %v5151 = vadd.f32 %v4793, %v5006
    %v5152 = vxor.u32 %v5150, 2147483648
    %v5153 = vxor.u32 %v5151, 2147483648
    %v5154 = vmul.f32 %v5152, 1.442695
    %v5155 = vpow.pop %v5154
    %v5156 = vmul.f32 %v5153, 1.442695
    %v5157 = vpow.pop %v5156
    %v5158 = vadd.f32 %v5155, 1.0
    %v5159 = vadd.f32 %v5157, 1.0
    %v5160 = vrcp.pop %v5158
    %v5161 = vmul.f32 1.0, %v5160
    %v5162 = vrcp.pop %v5159
    %v5163 = vmul.f32 1.0, %v5162
    %v5164 = vadd.f32 %v4862, %v5075
    %v5165 = vadd.f32 %v4864, %v5077
    %v5166 = vxor.u32 %v5164, 2147483648
    %v5167 = vxor.u32 %v5165, 2147483648
    %v5168 = vmul.f32 %v5166, 1.442695
    %v5169 = vpow.pop %v5168
    %v5170 = vmul.f32 %v5167, 1.442695
    %v5171 = vpow.pop %v5170
    %v5172 = vadd.f32 %v5169, 1.0
    %v5173 = vadd.f32 %v5171, 1.0
    %v5174 = vrcp.pop %v5172
    %v5175 = vmul.f32 1.0, %v5174
    %v5176 = vrcp.pop %v5173
    %v5177 = vmul.f32 1.0, %v5176
    %v5178 = vmul.f32 %v5161, %v5146
    %v5179 = vmul.f32 %v5163, %v5148
    %v5180 = vadd.f32 %v4933, %v5178
    %v5181 = vadd.f32 %v4935, %v5179
    %v5182 = vtanh.pop %v5180
    %v5183 = vtanh.pop %v5181
    %v5184 = vsub.f32 1.0, %v5175
    %v5185 = vsub.f32 1.0, %v5177
    %v5186 = vmul.f32 %v5184, %v5182
    %v5187 = vmul.f32 %v5185, %v5183
    %v5188 = vmul.f32 %v5175, %v3739
    %v5189 = vmul.f32 %v5177, %v3740
    %v5190 = vadd.f32 %v5186, %v5188
    %v5191 = vadd.f32 %v5187, %v5189
    %v5192 = vadd.f32 %v5190, %v121
    %v5193 = vadd.f32 %v5191, %v122
    %5194 = vst [vmem:[#allocation13] sm:$0xff] %v5192
    %5195 = vst [vmem:[#allocation13 + $0x8] sm:$0xff] %v5193
    // Predicated region
    $region62: #{tpu_custom_call.1} parent=1 // pred_check
      _
    $region63: #{tpu_custom_call.1} parent=1 // pred_check_branch
      %5197 = sbr.rel (0) target = $region65
    $region64: #{tpu_custom_call.1} parent=1 // pred_region
      %s5199 = ssub.s32 256, 256
      %5200 = vsyncadd [#allocation4], %s5199
      %s5202 = sshll.u32 [#allocation13], 4
      %s5203 = int_to_ptr.vmem [resolvable:$true] %s5202
      %5205 = dma.vmem_to_hbm [thread:$0]  %s5203, 256, %s9, [#allocation4]
    $region65: #{tpu_custom_call.1} parent=1 // pred_fallthru
      _
    // Predicated region
    $region66: #{tpu_custom_call.1} parent=1 // pred_check
      _
    $region67: #{tpu_custom_call.1} parent=1 // pred_check_branch
      %5207 = sbr.rel (0) target = $region69
    $region68: #{tpu_custom_call.1} parent=1 // pred_region
      %5208 = dma.done [#allocation4], 256
    $region69: #{tpu_custom_call.1} parent=1 // pred_fallthru
      _
    %5209 = vsyncpa [#allocation3], 1
    %5210 = vsyncpa [#allocation6], 1
    %5211 = vsyncpa [#allocation9], 1
    %5212 = vsyncpa [#allocation12], 1
    %5213 = vsyncpa [#allocation4], 1

</llo_original>
